<compile_context>
chip_gen: v5e
topology: v5e:2x2
jax: 0.10.0
libtpu: 0.0.40
codegen_flags: <defaults>
</compile_context>

<pallas_src>
import functools

import jax
import jax.numpy as jnp
import numpy as np
from jax import lax
from jax.experimental import pallas as pl
from jax.experimental.pallas import tpu as pltpu


# ---------------------------------------------------------------------------
# Pallas kernels
# ---------------------------------------------------------------------------
def _conv_relu_pool_kernel(x_ref, te_ref, to_ref, b_ref, o_ref, *, kh, ho, hp, nb):
    """Fused valid conv (stride 1) + bias + ReLU + 2x2/stride-2 max-pool.

    Processes `nb` images per grid step.
      x_ref : (nb, H, W*Cin)        image rows, NHWC flattened over (W, Cin)
      te_ref: (kh, W*Cin, Wp*Cout)  Toeplitz weights -> even conv columns
      to_ref: (kh, W*Cin, Wp*Cout)  Toeplitz weights -> odd  conv columns
      b_ref : (1, Wp*Cout)          bias tiled over Wp
      o_ref : (nb, Hp, Wp*Cout)     pooled NHWC output, flattened over (Wp, Cout)
    """
    # Row-selection matrices for the stride-2 pool over H (pick conv rows 2*hp
    # and 2*hp+1).  Selecting rows with a tiny matmul avoids any strided
    # slicing inside the kernel.
    hp_idx = lax.broadcasted_iota(jnp.int32, (hp, ho), 0)
    ho_idx = lax.broadcasted_iota(jnp.int32, (hp, ho), 1)
    sel_e = jnp.where(ho_idx == 2 * hp_idx, 1.0, 0.0).astype(jnp.float32)
    sel_o = jnp.where(ho_idx == 2 * hp_idx + 1, 1.0, 0.0).astype(jnp.float32)
    bias = b_ref[...]

    for n in range(nb):  # static unroll over the images in this block
        x0 = x_ref[n, 0:ho, :]
        acc_e = jnp.dot(x0, te_ref[0], preferred_element_type=jnp.float32)
        acc_o = jnp.dot(x0, to_ref[0], preferred_element_type=jnp.float32)
        for i in range(1, kh):
            xi = x_ref[n, i:i + ho, :]
            acc_e += jnp.dot(xi, te_ref[i], preferred_element_type=jnp.float32)
            acc_o += jnp.dot(xi, to_ref[i], preferred_element_type=jnp.float32)
        m = jnp.maximum(acc_e, acc_o)                                    # pool over W
        pe = jnp.dot(sel_e, m, preferred_element_type=jnp.float32)       # conv rows 2hp
        po = jnp.dot(sel_o, m, preferred_element_type=jnp.float32)       # conv rows 2hp+1
        y = jnp.maximum(pe, po) + bias                                   # pool over H, + bias
        o_ref[n] = jnp.maximum(y, 0.0).astype(o_ref.dtype)               # ReLU


def _fc_relu_fc_relu_kernel(x_ref, w1_ref, b1_ref, w2_ref, b2_ref, o_ref):
    """relu(relu(x @ w1 + b1) @ w2 + b2); hidden stays in VMEM/registers."""
    h = jnp.dot(x_ref[...], w1_ref[...], preferred_element_type=jnp.float32)
    h = jnp.maximum(h + b1_ref[...], 0.0)
    o = jnp.dot(h.astype(w2_ref.dtype), w2_ref[...],
                preferred_element_type=jnp.float32)
    o_ref[...] = jnp.maximum(o + b2_ref[...], 0.0).astype(o_ref.dtype)


# ---------------------------------------------------------------------------
# pallas_call wrappers
# ---------------------------------------------------------------------------
def conv_relu_pool(x, t_even, t_odd, bias_row):
    """x: (N, H, W*Cin) -> (N, Hp, Wp*Cout), fused conv+bias+ReLU+2x2 maxpool."""
    n, h, wc = x.shape
    kh, _, wpc = t_even.shape
    ho = h - kh + 1
    hp = ho // 2
    nb = next(d for d in (16, 8, 4, 2, 1) if n % d == 0)   # images per grid step
    kernel = functools.partial(_conv_relu_pool_kernel, kh=kh, ho=ho, hp=hp, nb=nb)
    return pl.pallas_call(
        kernel,
        out_shape=jax.ShapeDtypeStruct((n, hp, wpc), x.dtype),
        grid=(n // nb,),
        in_specs=[
            pl.BlockSpec((nb, h, wc), lambda i: (i, 0, 0)),
            pl.BlockSpec((kh, wc, wpc), lambda i: (0, 0, 0)),
            pl.BlockSpec((kh, wc, wpc), lambda i: (0, 0, 0)),
            pl.BlockSpec((1, wpc), lambda i: (0, 0)),
        ],
        out_specs=pl.BlockSpec((nb, hp, wpc), lambda i: (i, 0, 0)),
        compiler_params=pltpu.CompilerParams(
            dimension_semantics=("parallel",)),
    )(x, t_even, t_odd, bias_row)


def fc_fused(x, w1, b1, w2, b2):
    """Fused fc1+ReLU+fc2+ReLU, tiled over the batch rows."""
    n, k = x.shape
    h1 = w1.shape[1]
    h2 = w2.shape[1]
    bm = n if n <= 512 else 512   # 512 is a multiple of 8; full block when small
    return pl.pallas_call(
        _fc_relu_fc_relu_kernel,
        out_shape=jax.ShapeDtypeStruct((n, h2), jnp.float32),
        grid=(pl.cdiv(n, bm),),
        in_specs=[
            pl.BlockSpec((bm, k), lambda i: (i, 0)),
            pl.BlockSpec((k, h1), lambda i: (0, 0)),
            pl.BlockSpec((1, h1), lambda i: (0, 0)),
            pl.BlockSpec((h1, h2), lambda i: (0, 0)),
            pl.BlockSpec((1, h2), lambda i: (0, 0)),
        ],
        out_specs=pl.BlockSpec((bm, h2), lambda i: (i, 0)),
        compiler_params=pltpu.CompilerParams(
            dimension_semantics=("parallel",)),
    )(x, w1, b1, w2, b2)


# ---------------------------------------------------------------------------
# One-time parameter repack (weights only; no per-forward activation work)
# ---------------------------------------------------------------------------
def _toeplitz_pooled_weights(w_oihw, w_in, dtype):
    """Expand (Cout,Cin,KH,KW) conv weights into per-row-offset Toeplitz
    matrices that map one image row (W_in*Cin) to one conv-output row,
    split into even / odd output columns (the in-kernel W-direction pool).

    Returns (t_even, t_odd), each of shape (KH, W_in*Cin, (Wo//2)*Cout).
    """
    cout, cin, kh, kw = w_oihw.shape
    wo = w_in - kw + 1
    wp = wo // 2
    # sel[j, v, o] = 1  iff  input column v == output column o + kernel tap j
    j = np.arange(kw)[:, None, None]
    v = np.arange(w_in)[None, :, None]
    o = np.arange(wo)[None, None, :]
    sel = jnp.asarray((v == o + j).astype(np.float32))              # (KW, W_in, Wo)
    w_t = jnp.transpose(w_oihw, (2, 3, 1, 0)).astype(jnp.float32)   # (KH, KW, Cin, Cout)
    t = jnp.einsum("jvw,ijco->ivcwo", sel, w_t)                     # (KH, W_in, Cin, Wo, Cout)
    t = t.reshape(kh, w_in * cin, wo, cout)
    t_even = t[:, :, 0::2, :].reshape(kh, w_in * cin, wp * cout).astype(dtype)
    t_odd = t[:, :, 1::2, :].reshape(kh, w_in * cin, wp * cout).astype(dtype)
    return t_even, t_odd


def prepare_params(params, compute_dtype=jnp.float32, image_hw=(28, 28)):
    """Repack torch-layout weights for the Pallas kernels (done once)."""
    h, w = image_hw
    c1w, c1b = params["conv1_w"], params["conv1_b"]
    c2w, c2b = params["conv2_w"], params["conv2_b"]
    cout1, cout2 = c1w.shape[0], c2w.shape[0]
    w1p = (w - c1w.shape[3] + 1) // 2        # 12
    w2p = (w1p - c2w.shape[3] + 1) // 2      # 4
    h2p = ((h - c1w.shape[2] + 1) // 2 - c2w.shape[2] + 1) // 2      # 4

    t1e, t1o = _toeplitz_pooled_weights(c1w, w, compute_dtype)
    t2e, t2o = _toeplitz_pooled_weights(c2w, w1p, compute_dtype)
    b1 = jnp.tile(c1b.astype(jnp.float32), w1p).reshape(1, w1p * cout1)
    b2 = jnp.tile(c2b.astype(jnp.float32), w2p).reshape(1, w2p * cout2)

    # fc1: permute input features once so the NHWC-flat pooled activation
    # (index h*W2p*C2 + w*C2 + c) matches torch's NCHW flatten (c*H*W + h*W + w).
    fc1_w = params["fc1_w"]                                          # (50, 320)
    nhid = fc1_w.shape[0]
    w_fc1 = (fc1_w.reshape(nhid, cout2, h2p, w2p)
             .transpose(2, 3, 1, 0)
             .reshape(h2p * w2p * cout2, nhid)).astype(compute_dtype)
    w_fc2 = params["fc2_w"].T.astype(compute_dtype)                  # (50, 10)
    b_fc1 = params["fc1_b"].astype(jnp.float32).reshape(1, -1)
    b_fc2 = params["fc2_b"].astype(jnp.float32).reshape(1, -1)
    return {"t1e": t1e, "t1o": t1o, "b1": b1,
            "t2e": t2e, "t2o": t2o, "b2": b2,
            "w_fc1": w_fc1, "b_fc1": b_fc1, "w_fc2": w_fc2, "b_fc2": b_fc2}


# ---------------------------------------------------------------------------
# Forward pass (matches MNISTConvNet.forward, including ReLU on fc2)
# ---------------------------------------------------------------------------
def mnist_convnet_forward(x_nchw, prep):
    n, cin, h, w = x_nchw.shape
    # NHWC, flattened per image row to (H, W*Cin); for Cin == 1 this is just a
    # channel squeeze.  This is the only layout op in the whole forward.
    x = jnp.transpose(x_nchw, (0, 2, 3, 1)).reshape(n, h, w * cin)
    x = x.astype(prep["t1e"].dtype)
    x = conv_relu_pool(x, prep["t1e"], prep["t1o"], prep["b1"])      # (N, 12, 120)
    x = conv_relu_pool(x, prep["t2e"], prep["t2o"], prep["b2"])      # (N,  4,  80)
    x = x.reshape(n, -1)                                             # (N, 320)
    return fc_fused(x, prep["w_fc1"], prep["b_fc1"],
                    prep["w_fc2"], prep["b_fc2"])                    # (N, 10)


# ---------------------------------------------------------------------------
# Parameters, pure-JAX reference, and self-test
# ---------------------------------------------------------------------------
def init_params(key):
    ks = jax.random.split(key, 8)
    s = 0.05
    return {
        "conv1_w": s * jax.random.normal(ks[0], (10, 1, 5, 5), jnp.float32),
        "conv1_b": s * jax.random.normal(ks[1], (10,), jnp.float32),
        "conv2_w": s * jax.random.normal(ks[2], (20, 10, 5, 5), jnp.float32),
        "conv2_b": s * jax.random.normal(ks[3], (20,), jnp.float32),
        "fc1_w":   s * jax.random.normal(ks[4], (50, 320), jnp.float32),
        "fc1_b":   s * jax.random.normal(ks[5], (50,), jnp.float32),
        "fc2_w":   s * jax.random.normal(ks[6], (10, 50), jnp.float32),
        "fc2_b":   s * jax.random.normal(ks[7], (10,), jnp.float32),
    }


def reference_forward(x_nchw, params):
    """Pure-JAX (XLA) reference mirroring the PyTorch module."""
    dn = ("NCHW", "OIHW", "NCHW")
    x = lax.conv_general_dilated(x_nchw, params["conv1_w"], (1, 1), "VALID",
                                 dimension_numbers=dn)
    x = jax.nn.relu(x + params["conv1_b"][None, :, None, None])
    x = lax.reduce_window(x, -jnp.inf, lax.max, (1, 1, 2, 2), (1, 1, 2, 2), "VALID")
    x = lax.conv_general_dilated(x, params["conv2_w"], (1, 1), "VALID",
                                 dimension_numbers=dn)
    x = jax.nn.relu(x + params["conv2_b"][None, :, None, None])
    x = lax.reduce_window(x, -jnp.inf, lax.max, (1, 1, 2, 2), (1, 1, 2, 2), "VALID")
    x = x.reshape(x.shape[0], -1)
    x = jax.nn.relu(x @ params["fc1_w"].T + params["fc1_b"])
    x = jax.nn.relu(x @ params["fc2_w"].T + params["fc2_b"])
    return x


if __name__ == "__main__":
    key = jax.random.PRNGKey(0)
    pkey, xkey = jax.random.split(key)
    params = init_params(pkey)
    prep = prepare_params(params)                 # one-time weight repack (f32)
    fwd = jax.jit(mnist_convnet_forward)

    ok = True
    # batch=2 is the small canonical case; batch=32 exercises the multi-step
    # parallel grid (nb=16 images per conv step -> grid=(2,)).
    for batch in (2, 32):
        x = jax.random.normal(jax.random.fold_in(xkey, batch),
                              (batch, 1, 28, 28), jnp.float32)
        out = jax.block_until_ready(fwd(x, prep))
        assert out.shape == (batch, 10) and out.dtype == jnp.float32
        ref = reference_forward(x, params)
        ok = ok and bool(jnp.allclose(out, ref, atol=2e-2, rtol=2e-2))

    if ok:
        print("KERNEL_OK")
    else:
        print("KERNEL_MISMATCH")
</pallas_src>

<mosaic_0001>
module attributes {stable_mosaic.version = 11 : i64} {
  func.func @_conv_relu_pool_kernel(%arg0: i32, %arg1: memref<2x28x28xf32, #tpu.memory_space<vmem>>, %arg2: memref<5x28x120xf32, #tpu.memory_space<vmem>>, %arg3: memref<5x28x120xf32, #tpu.memory_space<vmem>>, %arg4: memref<1x120xf32, #tpu.memory_space<vmem>>, %arg5: memref<2x12x120xf32, #tpu.memory_space<vmem>>) attributes {dimension_semantics = [#tpu.dimension_semantics<parallel>], iteration_bounds = array<i64: 1>, scalar_prefetch = 0 : i64, scratch_operands = 0 : i64, tpu.core_type = #tpu.core_type<tc>, window_params = [{transform_indices = @transform_0, window_bounds = array<i64: 2, 28, 28>}, {pipeline_mode = #tpu.pipeline_mode<synchronous>, transform_indices = @transform_1, window_bounds = array<i64: 5, 28, 120>}, {pipeline_mode = #tpu.pipeline_mode<synchronous>, transform_indices = @transform_2, window_bounds = array<i64: 5, 28, 120>}, {pipeline_mode = #tpu.pipeline_mode<synchronous>, transform_indices = @transform_3, window_bounds = array<i64: 1, 120>}, {transform_indices = @transform_4, window_bounds = array<i64: 2, 12, 120>}]} {
    %0 = tpu.iota {dimensions = array<i32: 0>} : vector<12x24xi32>
    %1 = tpu.iota {dimensions = array<i32: 1>} : vector<12x24xi32>
    %c2_i32 = arith.constant 2 : i32
    %2 = vector.broadcast %c2_i32 : i32 to vector<12x24xi32>
    %3 = arith.muli %2, %0 : vector<12x24xi32>
    %4 = arith.cmpi eq, %1, %3 : vector<12x24xi32>
    %cst = arith.constant 1.000000e+00 : f32
    %cst_0 = arith.constant 0.000000e+00 : f32
    %5 = vector.broadcast %cst : f32 to vector<12x24xf32>
    %6 = vector.broadcast %cst_0 : f32 to vector<12x24xf32>
    %7 = arith.select %4, %5, %6 : vector<12x24xi1>, vector<12x24xf32>
    %c2_i32_1 = arith.constant 2 : i32
    %8 = vector.broadcast %c2_i32_1 : i32 to vector<12x24xi32>
    %9 = arith.muli %8, %0 : vector<12x24xi32>
    %c1_i32 = arith.constant 1 : i32
    %10 = vector.broadcast %c1_i32 : i32 to vector<12x24xi32>
    %11 = arith.addi %9, %10 : vector<12x24xi32>
    %12 = arith.cmpi eq, %1, %11 : vector<12x24xi32>
    %cst_2 = arith.constant 1.000000e+00 : f32
    %cst_3 = arith.constant 0.000000e+00 : f32
    %13 = vector.broadcast %cst_2 : f32 to vector<12x24xf32>
    %14 = vector.broadcast %cst_3 : f32 to vector<12x24xf32>
    %15 = arith.select %12, %13, %14 : vector<12x24xi1>, vector<12x24xf32>
    %c0 = arith.constant 0 : index
    %c0_4 = arith.constant 0 : index
    %16 = vector.load %arg4[%c0, %c0_4] : memref<1x120xf32, #tpu.memory_space<vmem>>, vector<1x120xf32>
    %c0_5 = arith.constant 0 : index
    %c0_6 = arith.constant 0 : index
    %c0_7 = arith.constant 0 : index
    %17 = vector.load %arg1[%c0_5, %c0_6, %c0_7] : memref<2x28x28xf32, #tpu.memory_space<vmem>>, vector<1x24x28xf32>
    %18 = vector.shape_cast %17 : vector<1x24x28xf32> to vector<24x28xf32>
    %c0_8 = arith.constant 0 : index
    %c0_9 = arith.constant 0 : index
    %c0_10 = arith.constant 0 : index
    %19 = vector.load %arg2[%c0_8, %c0_9, %c0_10] : memref<5x28x120xf32, #tpu.memory_space<vmem>>, vector<1x28x120xf32>
    %20 = vector.shape_cast %19 : vector<1x28x120xf32> to vector<28x120xf32>
    %cst_11 = arith.constant dense<0.000000e+00> : vector<24x120xf32>
    %21 = tpu.matmul %18, %20, %cst_11 {dimension_numbers = #tpu.dot_dimension_numbers<[1], [0], [0], [1], [0, 0, 1, 1], [], []>} : vector<24x28xf32>, vector<28x120xf32>, vector<24x120xf32> -> vector<24x120xf32>
    %c0_12 = arith.constant 0 : index
    %c0_13 = arith.constant 0 : index
    %c0_14 = arith.constant 0 : index
    %22 = vector.load %arg3[%c0_12, %c0_13, %c0_14] : memref<5x28x120xf32, #tpu.memory_space<vmem>>, vector<1x28x120xf32>
    %23 = vector.shape_cast %22 : vector<1x28x120xf32> to vector<28x120xf32>
    %cst_15 = arith.constant dense<0.000000e+00> : vector<24x120xf32>
    %24 = tpu.matmul %18, %23, %cst_15 {dimension_numbers = #tpu.dot_dimension_numbers<[1], [0], [0], [1], [0, 0, 1, 1], [], []>} : vector<24x28xf32>, vector<28x120xf32>, vector<24x120xf32> -> vector<24x120xf32>
    %c0_16 = arith.constant 0 : index
    %c1 = arith.constant 1 : index
    %c0_17 = arith.constant 0 : index
    %25 = vector.load %arg1[%c0_16, %c1, %c0_17] : memref<2x28x28xf32, #tpu.memory_space<vmem>>, vector<1x24x28xf32>
    %26 = vector.shape_cast %25 : vector<1x24x28xf32> to vector<24x28xf32>
    %c1_18 = arith.constant 1 : index
    %c0_19 = arith.constant 0 : index
    %c0_20 = arith.constant 0 : index
    %27 = vector.load %arg2[%c1_18, %c0_19, %c0_20] : memref<5x28x120xf32, #tpu.memory_space<vmem>>, vector<1x28x120xf32>
    %28 = vector.shape_cast %27 : vector<1x28x120xf32> to vector<28x120xf32>
    %cst_21 = arith.constant dense<0.000000e+00> : vector<24x120xf32>
    %29 = tpu.matmul %26, %28, %cst_21 {dimension_numbers = #tpu.dot_dimension_numbers<[1], [0], [0], [1], [0, 0, 1, 1], [], []>} : vector<24x28xf32>, vector<28x120xf32>, vector<24x120xf32> -> vector<24x120xf32>
    %30 = arith.addf %21, %29 : vector<24x120xf32>
    %c1_22 = arith.constant 1 : index
    %c0_23 = arith.constant 0 : index
    %c0_24 = arith.constant 0 : index
    %31 = vector.load %arg3[%c1_22, %c0_23, %c0_24] : memref<5x28x120xf32, #tpu.memory_space<vmem>>, vector<1x28x120xf32>
    %32 = vector.shape_cast %31 : vector<1x28x120xf32> to vector<28x120xf32>
    %cst_25 = arith.constant dense<0.000000e+00> : vector<24x120xf32>
    %33 = tpu.matmul %26, %32, %cst_25 {dimension_numbers = #tpu.dot_dimension_numbers<[1], [0], [0], [1], [0, 0, 1, 1], [], []>} : vector<24x28xf32>, vector<28x120xf32>, vector<24x120xf32> -> vector<24x120xf32>
    %34 = arith.addf %24, %33 : vector<24x120xf32>
    %c0_26 = arith.constant 0 : index
    %c2 = arith.constant 2 : index
    %c0_27 = arith.constant 0 : index
    %35 = vector.load %arg1[%c0_26, %c2, %c0_27] : memref<2x28x28xf32, #tpu.memory_space<vmem>>, vector<1x24x28xf32>
    %36 = vector.shape_cast %35 : vector<1x24x28xf32> to vector<24x28xf32>
    %c2_28 = arith.constant 2 : index
    %c0_29 = arith.constant 0 : index
    %c0_30 = arith.constant 0 : index
    %37 = vector.load %arg2[%c2_28, %c0_29, %c0_30] : memref<5x28x120xf32, #tpu.memory_space<vmem>>, vector<1x28x120xf32>
    %38 = vector.shape_cast %37 : vector<1x28x120xf32> to vector<28x120xf32>
    %cst_31 = arith.constant dense<0.000000e+00> : vector<24x120xf32>
    %39 = tpu.matmul %36, %38, %cst_31 {dimension_numbers = #tpu.dot_dimension_numbers<[1], [0], [0], [1], [0, 0, 1, 1], [], []>} : vector<24x28xf32>, vector<28x120xf32>, vector<24x120xf32> -> vector<24x120xf32>
    %40 = arith.addf %30, %39 : vector<24x120xf32>
    %c2_32 = arith.constant 2 : index
    %c0_33 = arith.constant 0 : index
    %c0_34 = arith.constant 0 : index
    %41 = vector.load %arg3[%c2_32, %c0_33, %c0_34] : memref<5x28x120xf32, #tpu.memory_space<vmem>>, vector<1x28x120xf32>
    %42 = vector.shape_cast %41 : vector<1x28x120xf32> to vector<28x120xf32>
    %cst_35 = arith.constant dense<0.000000e+00> : vector<24x120xf32>
    %43 = tpu.matmul %36, %42, %cst_35 {dimension_numbers = #tpu.dot_dimension_numbers<[1], [0], [0], [1], [0, 0, 1, 1], [], []>} : vector<24x28xf32>, vector<28x120xf32>, vector<24x120xf32> -> vector<24x120xf32>
    %44 = arith.addf %34, %43 : vector<24x120xf32>
    %c0_36 = arith.constant 0 : index
    %c3 = arith.constant 3 : index
    %c0_37 = arith.constant 0 : index
    %45 = vector.load %arg1[%c0_36, %c3, %c0_37] : memref<2x28x28xf32, #tpu.memory_space<vmem>>, vector<1x24x28xf32>
    %46 = vector.shape_cast %45 : vector<1x24x28xf32> to vector<24x28xf32>
    %c3_38 = arith.constant 3 : index
    %c0_39 = arith.constant 0 : index
    %c0_40 = arith.constant 0 : index
    %47 = vector.load %arg2[%c3_38, %c0_39, %c0_40] : memref<5x28x120xf32, #tpu.memory_space<vmem>>, vector<1x28x120xf32>
    %48 = vector.shape_cast %47 : vector<1x28x120xf32> to vector<28x120xf32>
    %cst_41 = arith.constant dense<0.000000e+00> : vector<24x120xf32>
    %49 = tpu.matmul %46, %48, %cst_41 {dimension_numbers = #tpu.dot_dimension_numbers<[1], [0], [0], [1], [0, 0, 1, 1], [], []>} : vector<24x28xf32>, vector<28x120xf32>, vector<24x120xf32> -> vector<24x120xf32>
    %50 = arith.addf %40, %49 : vector<24x120xf32>
    %c3_42 = arith.constant 3 : index
    %c0_43 = arith.constant 0 : index
    %c0_44 = arith.constant 0 : index
    %51 = vector.load %arg3[%c3_42, %c0_43, %c0_44] : memref<5x28x120xf32, #tpu.memory_space<vmem>>, vector<1x28x120xf32>
    %52 = vector.shape_cast %51 : vector<1x28x120xf32> to vector<28x120xf32>
    %cst_45 = arith.constant dense<0.000000e+00> : vector<24x120xf32>
    %53 = tpu.matmul %46, %52, %cst_45 {dimension_numbers = #tpu.dot_dimension_numbers<[1], [0], [0], [1], [0, 0, 1, 1], [], []>} : vector<24x28xf32>, vector<28x120xf32>, vector<24x120xf32> -> vector<24x120xf32>
    %54 = arith.addf %44, %53 : vector<24x120xf32>
    %c0_46 = arith.constant 0 : index
    %c4 = arith.constant 4 : index
    %c0_47 = arith.constant 0 : index
    %55 = vector.load %arg1[%c0_46, %c4, %c0_47] : memref<2x28x28xf32, #tpu.memory_space<vmem>>, vector<1x24x28xf32>
    %56 = vector.shape_cast %55 : vector<1x24x28xf32> to vector<24x28xf32>
    %c4_48 = arith.constant 4 : index
    %c0_49 = arith.constant 0 : index
    %c0_50 = arith.constant 0 : index
    %57 = vector.load %arg2[%c4_48, %c0_49, %c0_50] : memref<5x28x120xf32, #tpu.memory_space<vmem>>, vector<1x28x120xf32>
    %58 = vector.shape_cast %57 : vector<1x28x120xf32> to vector<28x120xf32>
    %cst_51 = arith.constant dense<0.000000e+00> : vector<24x120xf32>
    %59 = tpu.matmul %56, %58, %cst_51 {dimension_numbers = #tpu.dot_dimension_numbers<[1], [0], [0], [1], [0, 0, 1, 1], [], []>} : vector<24x28xf32>, vector<28x120xf32>, vector<24x120xf32> -> vector<24x120xf32>
    %60 = arith.addf %50, %59 : vector<24x120xf32>
    %c4_52 = arith.constant 4 : index
    %c0_53 = arith.constant 0 : index
    %c0_54 = arith.constant 0 : index
    %61 = vector.load %arg3[%c4_52, %c0_53, %c0_54] : memref<5x28x120xf32, #tpu.memory_space<vmem>>, vector<1x28x120xf32>
    %62 = vector.shape_cast %61 : vector<1x28x120xf32> to vector<28x120xf32>
    %cst_55 = arith.constant dense<0.000000e+00> : vector<24x120xf32>
    %63 = tpu.matmul %56, %62, %cst_55 {dimension_numbers = #tpu.dot_dimension_numbers<[1], [0], [0], [1], [0, 0, 1, 1], [], []>} : vector<24x28xf32>, vector<28x120xf32>, vector<24x120xf32> -> vector<24x120xf32>
    %64 = arith.addf %54, %63 : vector<24x120xf32>
    %65 = arith.maximumf %60, %64 : vector<24x120xf32>
    %cst_56 = arith.constant dense<0.000000e+00> : vector<12x120xf32>
    %66 = tpu.matmul %7, %65, %cst_56 {dimension_numbers = #tpu.dot_dimension_numbers<[1], [0], [0], [1], [0, 0, 1, 1], [], []>} : vector<12x24xf32>, vector<24x120xf32>, vector<12x120xf32> -> vector<12x120xf32>
    %cst_57 = arith.constant dense<0.000000e+00> : vector<12x120xf32>
    %67 = tpu.matmul %15, %65, %cst_57 {dimension_numbers = #tpu.dot_dimension_numbers<[1], [0], [0], [1], [0, 0, 1, 1], [], []>} : vector<12x24xf32>, vector<24x120xf32>, vector<12x120xf32> -> vector<12x120xf32>
    %68 = arith.maximumf %66, %67 : vector<12x120xf32>
    %69 = vector.broadcast %16 : vector<1x120xf32> to vector<12x120xf32>
    %70 = arith.addf %68, %69 : vector<12x120xf32>
    %cst_58 = arith.constant 0.000000e+00 : f32
    %71 = vector.broadcast %cst_58 : f32 to vector<12x120xf32>
    %72 = arith.maximumf %70, %71 : vector<12x120xf32>
    %c0_59 = arith.constant 0 : index
    %c0_60 = arith.constant 0 : index
    %c0_61 = arith.constant 0 : index
    %73 = vector.load %arg5[%c0_59, %c0_60, %c0_61] : memref<2x12x120xf32, #tpu.memory_space<vmem>>, vector<1x12x120xf32>
    %74 = vector.shape_cast %73 : vector<1x12x120xf32> to vector<12x120xf32>
    %75 = vector.shape_cast %72 : vector<12x120xf32> to vector<1x12x120xf32>
    tpu.vector_store %arg5[%c0_59, %c0_60, %c0_61], %75 {strides = array<i32>} : memref<2x12x120xf32, #tpu.memory_space<vmem>>, vector<1x12x120xf32>,
    %c1_62 = arith.constant 1 : index
    %c0_63 = arith.constant 0 : index
    %c0_64 = arith.constant 0 : index
    %76 = vector.load %arg1[%c1_62, %c0_63, %c0_64] : memref<2x28x28xf32, #tpu.memory_space<vmem>>, vector<1x24x28xf32>
    %77 = vector.shape_cast %76 : vector<1x24x28xf32> to vector<24x28xf32>
    %c0_65 = arith.constant 0 : index
    %c0_66 = arith.constant 0 : index
    %c0_67 = arith.constant 0 : index
    %78 = vector.load %arg2[%c0_65, %c0_66, %c0_67] : memref<5x28x120xf32, #tpu.memory_space<vmem>>, vector<1x28x120xf32>
    %79 = vector.shape_cast %78 : vector<1x28x120xf32> to vector<28x120xf32>
    %cst_68 = arith.constant dense<0.000000e+00> : vector<24x120xf32>
    %80 = tpu.matmul %77, %79, %cst_68 {dimension_numbers = #tpu.dot_dimension_numbers<[1], [0], [0], [1], [0, 0, 1, 1], [], []>} : vector<24x28xf32>, vector<28x120xf32>, vector<24x120xf32> -> vector<24x120xf32>
    %c0_69 = arith.constant 0 : index
    %c0_70 = arith.constant 0 : index
    %c0_71 = arith.constant 0 : index
    %81 = vector.load %arg3[%c0_69, %c0_70, %c0_71] : memref<5x28x120xf32, #tpu.memory_space<vmem>>, vector<1x28x120xf32>
    %82 = vector.shape_cast %81 : vector<1x28x120xf32> to vector<28x120xf32>
    %cst_72 = arith.constant dense<0.000000e+00> : vector<24x120xf32>
    %83 = tpu.matmul %77, %82, %cst_72 {dimension_numbers = #tpu.dot_dimension_numbers<[1], [0], [0], [1], [0, 0, 1, 1], [], []>} : vector<24x28xf32>, vector<28x120xf32>, vector<24x120xf32> -> vector<24x120xf32>
    %c1_73 = arith.constant 1 : index
    %c1_74 = arith.constant 1 : index
    %c0_75 = arith.constant 0 : index
    %84 = vector.load %arg1[%c1_73, %c1_74, %c0_75] : memref<2x28x28xf32, #tpu.memory_space<vmem>>, vector<1x24x28xf32>
    %85 = vector.shape_cast %84 : vector<1x24x28xf32> to vector<24x28xf32>
    %c1_76 = arith.constant 1 : index
    %c0_77 = arith.constant 0 : index
    %c0_78 = arith.constant 0 : index
    %86 = vector.load %arg2[%c1_76, %c0_77, %c0_78] : memref<5x28x120xf32, #tpu.memory_space<vmem>>, vector<1x28x120xf32>
    %87 = vector.shape_cast %86 : vector<1x28x120xf32> to vector<28x120xf32>
    %cst_79 = arith.constant dense<0.000000e+00> : vector<24x120xf32>
    %88 = tpu.matmul %85, %87, %cst_79 {dimension_numbers = #tpu.dot_dimension_numbers<[1], [0], [0], [1], [0, 0, 1, 1], [], []>} : vector<24x28xf32>, vector<28x120xf32>, vector<24x120xf32> -> vector<24x120xf32>
    %89 = arith.addf %80, %88 : vector<24x120xf32>
    %c1_80 = arith.constant 1 : index
    %c0_81 = arith.constant 0 : index
    %c0_82 = arith.constant 0 : index
    %90 = vector.load %arg3[%c1_80, %c0_81, %c0_82] : memref<5x28x120xf32, #tpu.memory_space<vmem>>, vector<1x28x120xf32>
    %91 = vector.shape_cast %90 : vector<1x28x120xf32> to vector<28x120xf32>
    %cst_83 = arith.constant dense<0.000000e+00> : vector<24x120xf32>
    %92 = tpu.matmul %85, %91, %cst_83 {dimension_numbers = #tpu.dot_dimension_numbers<[1], [0], [0], [1], [0, 0, 1, 1], [], []>} : vector<24x28xf32>, vector<28x120xf32>, vector<24x120xf32> -> vector<24x120xf32>
    %93 = arith.addf %83, %92 : vector<24x120xf32>
    %c1_84 = arith.constant 1 : index
    %c2_85 = arith.constant 2 : index
    %c0_86 = arith.constant 0 : index
    %94 = vector.load %arg1[%c1_84, %c2_85, %c0_86] : memref<2x28x28xf32, #tpu.memory_space<vmem>>, vector<1x24x28xf32>
    %95 = vector.shape_cast %94 : vector<1x24x28xf32> to vector<24x28xf32>
    %c2_87 = arith.constant 2 : index
    %c0_88 = arith.constant 0 : index
    %c0_89 = arith.constant 0 : index
    %96 = vector.load %arg2[%c2_87, %c0_88, %c0_89] : memref<5x28x120xf32, #tpu.memory_space<vmem>>, vector<1x28x120xf32>
    %97 = vector.shape_cast %96 : vector<1x28x120xf32> to vector<28x120xf32>
    %cst_90 = arith.constant dense<0.000000e+00> : vector<24x120xf32>
    %98 = tpu.matmul %95, %97, %cst_90 {dimension_numbers = #tpu.dot_dimension_numbers<[1], [0], [0], [1], [0, 0, 1, 1], [], []>} : vector<24x28xf32>, vector<28x120xf32>, vector<24x120xf32> -> vector<24x120xf32>
    %99 = arith.addf %89, %98 : vector<24x120xf32>
    %c2_91 = arith.constant 2 : index
    %c0_92 = arith.constant 0 : index
    %c0_93 = arith.constant 0 : index
    %100 = vector.load %arg3[%c2_91, %c0_92, %c0_93] : memref<5x28x120xf32, #tpu.memory_space<vmem>>, vector<1x28x120xf32>
    %101 = vector.shape_cast %100 : vector<1x28x120xf32> to vector<28x120xf32>
    %cst_94 = arith.constant dense<0.000000e+00> : vector<24x120xf32>
    %102 = tpu.matmul %95, %101, %cst_94 {dimension_numbers = #tpu.dot_dimension_numbers<[1], [0], [0], [1], [0, 0, 1, 1], [], []>} : vector<24x28xf32>, vector<28x120xf32>, vector<24x120xf32> -> vector<24x120xf32>
    %103 = arith.addf %93, %102 : vector<24x120xf32>
    %c1_95 = arith.constant 1 : index
    %c3_96 = arith.constant 3 : index
    %c0_97 = arith.constant 0 : index
    %104 = vector.load %arg1[%c1_95, %c3_96, %c0_97] : memref<2x28x28xf32, #tpu.memory_space<vmem>>, vector<1x24x28xf32>
    %105 = vector.shape_cast %104 : vector<1x24x28xf32> to vector<24x28xf32>
    %c3_98 = arith.constant 3 : index
    %c0_99 = arith.constant 0 : index
    %c0_100 = arith.constant 0 : index
    %106 = vector.load %arg2[%c3_98, %c0_99, %c0_100] : memref<5x28x120xf32, #tpu.memory_space<vmem>>, vector<1x28x120xf32>
    %107 = vector.shape_cast %106 : vector<1x28x120xf32> to vector<28x120xf32>
    %cst_101 = arith.constant dense<0.000000e+00> : vector<24x120xf32>
    %108 = tpu.matmul %105, %107, %cst_101 {dimension_numbers = #tpu.dot_dimension_numbers<[1], [0], [0], [1], [0, 0, 1, 1], [], []>} : vector<24x28xf32>, vector<28x120xf32>, vector<24x120xf32> -> vector<24x120xf32>
    %109 = arith.addf %99, %108 : vector<24x120xf32>
    %c3_102 = arith.constant 3 : index
    %c0_103 = arith.constant 0 : index
    %c0_104 = arith.constant 0 : index
    %110 = vector.load %arg3[%c3_102, %c0_103, %c0_104] : memref<5x28x120xf32, #tpu.memory_space<vmem>>, vector<1x28x120xf32>
    %111 = vector.shape_cast %110 : vector<1x28x120xf32> to vector<28x120xf32>
    %cst_105 = arith.constant dense<0.000000e+00> : vector<24x120xf32>
    %112 = tpu.matmul %105, %111, %cst_105 {dimension_numbers = #tpu.dot_dimension_numbers<[1], [0], [0], [1], [0, 0, 1, 1], [], []>} : vector<24x28xf32>, vector<28x120xf32>, vector<24x120xf32> -> vector<24x120xf32>
    %113 = arith.addf %103, %112 : vector<24x120xf32>
    %c1_106 = arith.constant 1 : index
    %c4_107 = arith.constant 4 : index
    %c0_108 = arith.constant 0 : index
    %114 = vector.load %arg1[%c1_106, %c4_107, %c0_108] : memref<2x28x28xf32, #tpu.memory_space<vmem>>, vector<1x24x28xf32>
    %115 = vector.shape_cast %114 : vector<1x24x28xf32> to vector<24x28xf32>
    %c4_109 = arith.constant 4 : index
    %c0_110 = arith.constant 0 : index
    %c0_111 = arith.constant 0 : index
    %116 = vector.load %arg2[%c4_109, %c0_110, %c0_111] : memref<5x28x120xf32, #tpu.memory_space<vmem>>, vector<1x28x120xf32>
    %117 = vector.shape_cast %116 : vector<1x28x120xf32> to vector<28x120xf32>
    %cst_112 = arith.constant dense<0.000000e+00> : vector<24x120xf32>
    %118 = tpu.matmul %115, %117, %cst_112 {dimension_numbers = #tpu.dot_dimension_numbers<[1], [0], [0], [1], [0, 0, 1, 1], [], []>} : vector<24x28xf32>, vector<28x120xf32>, vector<24x120xf32> -> vector<24x120xf32>
    %119 = arith.addf %109, %118 : vector<24x120xf32>
    %c4_113 = arith.constant 4 : index
    %c0_114 = arith.constant 0 : index
    %c0_115 = arith.constant 0 : index
    %120 = vector.load %arg3[%c4_113, %c0_114, %c0_115] : memref<5x28x120xf32, #tpu.memory_space<vmem>>, vector<1x28x120xf32>
    %121 = vector.shape_cast %120 : vector<1x28x120xf32> to vector<28x120xf32>
    %cst_116 = arith.constant dense<0.000000e+00> : vector<24x120xf32>
    %122 = tpu.matmul %115, %121, %cst_116 {dimension_numbers = #tpu.dot_dimension_numbers<[1], [0], [0], [1], [0, 0, 1, 1], [], []>} : vector<24x28xf32>, vector<28x120xf32>, vector<24x120xf32> -> vector<24x120xf32>
    %123 = arith.addf %113, %122 : vector<24x120xf32>
    %124 = arith.maximumf %119, %123 : vector<24x120xf32>
    %cst_117 = arith.constant dense<0.000000e+00> : vector<12x120xf32>
    %125 = tpu.matmul %7, %124, %cst_117 {dimension_numbers = #tpu.dot_dimension_numbers<[1], [0], [0], [1], [0, 0, 1, 1], [], []>} : vector<12x24xf32>, vector<24x120xf32>, vector<12x120xf32> -> vector<12x120xf32>
    %cst_118 = arith.constant dense<0.000000e+00> : vector<12x120xf32>
    %126 = tpu.matmul %15, %124, %cst_118 {dimension_numbers = #tpu.dot_dimension_numbers<[1], [0], [0], [1], [0, 0, 1, 1], [], []>} : vector<12x24xf32>, vector<24x120xf32>, vector<12x120xf32> -> vector<12x120xf32>
    %127 = arith.maximumf %125, %126 : vector<12x120xf32>
    %128 = vector.broadcast %16 : vector<1x120xf32> to vector<12x120xf32>
    %129 = arith.addf %127, %128 : vector<12x120xf32>
    %cst_119 = arith.constant 0.000000e+00 : f32
    %130 = vector.broadcast %cst_119 : f32 to vector<12x120xf32>
    %131 = arith.maximumf %129, %130 : vector<12x120xf32>
    %c1_120 = arith.constant 1 : index
    %c0_121 = arith.constant 0 : index
    %c0_122 = arith.constant 0 : index
    %132 = vector.load %arg5[%c1_120, %c0_121, %c0_122] : memref<2x12x120xf32, #tpu.memory_space<vmem>>, vector<1x12x120xf32>
    %133 = vector.shape_cast %132 : vector<1x12x120xf32> to vector<12x120xf32>
    %134 = vector.shape_cast %131 : vector<12x120xf32> to vector<1x12x120xf32>
    tpu.vector_store %arg5[%c1_120, %c0_121, %c0_122], %134 {strides = array<i32>} : memref<2x12x120xf32, #tpu.memory_space<vmem>>, vector<1x12x120xf32>,
    return
  }
  func.func @transform_0(%arg0: i32) -> (i32, i32, i32) {
    %c0_i32 = arith.constant 0 : i32
    %c0_i32_0 = arith.constant 0 : i32
    %c0_i32_1 = arith.constant 0 : i32
    return %arg0, %c0_i32, %c0_i32_0 : i32, i32, i32
  }
  func.func @transform_1(%arg0: i32) -> (i32, i32, i32) {
    %c0_i32 = arith.constant 0 : i32
    %c0_i32_0 = arith.constant 0 : i32
    %c0_i32_1 = arith.constant 0 : i32
    %c0_i32_2 = arith.constant 0 : i32
    return %c0_i32, %c0_i32_0, %c0_i32_1 : i32, i32, i32
  }
  func.func @transform_2(%arg0: i32) -> (i32, i32, i32) {
    %c0_i32 = arith.constant 0 : i32
    %c0_i32_0 = arith.constant 0 : i32
    %c0_i32_1 = arith.constant 0 : i32
    %c0_i32_2 = arith.constant 0 : i32
    return %c0_i32, %c0_i32_0, %c0_i32_1 : i32, i32, i32
  }
  func.func @transform_3(%arg0: i32) -> (i32, i32) {
    %c0_i32 = arith.constant 0 : i32
    %c0_i32_0 = arith.constant 0 : i32
    %c0_i32_1 = arith.constant 0 : i32
    return %c0_i32, %c0_i32_0 : i32, i32
  }
  func.func @transform_4(%arg0: i32) -> (i32, i32, i32) {
    %c0_i32 = arith.constant 0 : i32
    %c0_i32_0 = arith.constant 0 : i32
    %c0_i32_1 = arith.constant 0 : i32
    return %arg0, %c0_i32, %c0_i32_0 : i32, i32, i32
  }
}

module attributes {stable_mosaic.version = 11 : i64} {
  func.func @_conv_relu_pool_kernel(%arg0: i32, %arg1: memref<2x12x120xf32, #tpu.memory_space<vmem>>, %arg2: memref<5x120x80xf32, #tpu.memory_space<vmem>>, %arg3: memref<5x120x80xf32, #tpu.memory_space<vmem>>, %arg4: memref<1x80xf32, #tpu.memory_space<vmem>>, %arg5: memref<2x4x80xf32, #tpu.memory_space<vmem>>) attributes {dimension_semantics = [#tpu.dimension_semantics<parallel>], iteration_bounds = array<i64: 1>, scalar_prefetch = 0 : i64, scratch_operands = 0 : i64, tpu.core_type = #tpu.core_type<tc>, window_params = [{transform_indices = @transform_0, window_bounds = array<i64: 2, 12, 120>}, {pipeline_mode = #tpu.pipeline_mode<synchronous>, transform_indices = @transform_1, window_bounds = array<i64: 5, 120, 80>}, {pipeline_mode = #tpu.pipeline_mode<synchronous>, transform_indices = @transform_2, window_bounds = array<i64: 5, 120, 80>}, {pipeline_mode = #tpu.pipeline_mode<synchronous>, transform_indices = @transform_3, window_bounds = array<i64: 1, 80>}, {transform_indices = @transform_4, window_bounds = array<i64: 2, 4, 80>}]} {
    %0 = tpu.iota {dimensions = array<i32: 0>} : vector<4x8xi32>
    %1 = tpu.iota {dimensions = array<i32: 1>} : vector<4x8xi32>
    %c2_i32 = arith.constant 2 : i32
    %2 = vector.broadcast %c2_i32 : i32 to vector<4x8xi32>
    %3 = arith.muli %2, %0 : vector<4x8xi32>
    %4 = arith.cmpi eq, %1, %3 : vector<4x8xi32>
    %cst = arith.constant 1.000000e+00 : f32
    %cst_0 = arith.constant 0.000000e+00 : f32
    %5 = vector.broadcast %cst : f32 to vector<4x8xf32>
    %6 = vector.broadcast %cst_0 : f32 to vector<4x8xf32>
    %7 = arith.select %4, %5, %6 : vector<4x8xi1>, vector<4x8xf32>
    %c2_i32_1 = arith.constant 2 : i32
    %8 = vector.broadcast %c2_i32_1 : i32 to vector<4x8xi32>
    %9 = arith.muli %8, %0 : vector<4x8xi32>
    %c1_i32 = arith.constant 1 : i32
    %10 = vector.broadcast %c1_i32 : i32 to vector<4x8xi32>
    %11 = arith.addi %9, %10 : vector<4x8xi32>
    %12 = arith.cmpi eq, %1, %11 : vector<4x8xi32>
    %cst_2 = arith.constant 1.000000e+00 : f32
    %cst_3 = arith.constant 0.000000e+00 : f32
    %13 = vector.broadcast %cst_2 : f32 to vector<4x8xf32>
    %14 = vector.broadcast %cst_3 : f32 to vector<4x8xf32>
    %15 = arith.select %12, %13, %14 : vector<4x8xi1>, vector<4x8xf32>
    %c0 = arith.constant 0 : index
    %c0_4 = arith.constant 0 : index
    %16 = vector.load %arg4[%c0, %c0_4] : memref<1x80xf32, #tpu.memory_space<vmem>>, vector<1x80xf32>
    %c0_5 = arith.constant 0 : index
    %c0_6 = arith.constant 0 : index
    %c0_7 = arith.constant 0 : index
    %17 = vector.load %arg1[%c0_5, %c0_6, %c0_7] : memref<2x12x120xf32, #tpu.memory_space<vmem>>, vector<1x8x120xf32>
    %18 = vector.shape_cast %17 : vector<1x8x120xf32> to vector<8x120xf32>
    %c0_8 = arith.constant 0 : index
    %c0_9 = arith.constant 0 : index
    %c0_10 = arith.constant 0 : index
    %19 = vector.load %arg2[%c0_8, %c0_9, %c0_10] : memref<5x120x80xf32, #tpu.memory_space<vmem>>, vector<1x120x80xf32>
    %20 = vector.shape_cast %19 : vector<1x120x80xf32> to vector<120x80xf32>
    %cst_11 = arith.constant dense<0.000000e+00> : vector<8x80xf32>
    %21 = tpu.matmul %18, %20, %cst_11 {dimension_numbers = #tpu.dot_dimension_numbers<[1], [0], [0], [1], [0, 0, 1, 1], [], []>} : vector<8x120xf32>, vector<120x80xf32>, vector<8x80xf32> -> vector<8x80xf32>
    %c0_12 = arith.constant 0 : index
    %c0_13 = arith.constant 0 : index
    %c0_14 = arith.constant 0 : index
    %22 = vector.load %arg3[%c0_12, %c0_13, %c0_14] : memref<5x120x80xf32, #tpu.memory_space<vmem>>, vector<1x120x80xf32>
    %23 = vector.shape_cast %22 : vector<1x120x80xf32> to vector<120x80xf32>
    %cst_15 = arith.constant dense<0.000000e+00> : vector<8x80xf32>
    %24 = tpu.matmul %18, %23, %cst_15 {dimension_numbers = #tpu.dot_dimension_numbers<[1], [0], [0], [1], [0, 0, 1, 1], [], []>} : vector<8x120xf32>, vector<120x80xf32>, vector<8x80xf32> -> vector<8x80xf32>
    %c0_16 = arith.constant 0 : index
    %c1 = arith.constant 1 : index
    %c0_17 = arith.constant 0 : index
    %25 = vector.load %arg1[%c0_16, %c1, %c0_17] : memref<2x12x120xf32, #tpu.memory_space<vmem>>, vector<1x8x120xf32>
    %26 = vector.shape_cast %25 : vector<1x8x120xf32> to vector<8x120xf32>
    %c1_18 = arith.constant 1 : index
    %c0_19 = arith.constant 0 : index
    %c0_20 = arith.constant 0 : index
    %27 = vector.load %arg2[%c1_18, %c0_19, %c0_20] : memref<5x120x80xf32, #tpu.memory_space<vmem>>, vector<1x120x80xf32>
    %28 = vector.shape_cast %27 : vector<1x120x80xf32> to vector<120x80xf32>
    %cst_21 = arith.constant dense<0.000000e+00> : vector<8x80xf32>
    %29 = tpu.matmul %26, %28, %cst_21 {dimension_numbers = #tpu.dot_dimension_numbers<[1], [0], [0], [1], [0, 0, 1, 1], [], []>} : vector<8x120xf32>, vector<120x80xf32>, vector<8x80xf32> -> vector<8x80xf32>
    %30 = arith.addf %21, %29 : vector<8x80xf32>
    %c1_22 = arith.constant 1 : index
    %c0_23 = arith.constant 0 : index
    %c0_24 = arith.constant 0 : index
    %31 = vector.load %arg3[%c1_22, %c0_23, %c0_24] : memref<5x120x80xf32, #tpu.memory_space<vmem>>, vector<1x120x80xf32>
    %32 = vector.shape_cast %31 : vector<1x120x80xf32> to vector<120x80xf32>
    %cst_25 = arith.constant dense<0.000000e+00> : vector<8x80xf32>
    %33 = tpu.matmul %26, %32, %cst_25 {dimension_numbers = #tpu.dot_dimension_numbers<[1], [0], [0], [1], [0, 0, 1, 1], [], []>} : vector<8x120xf32>, vector<120x80xf32>, vector<8x80xf32> -> vector<8x80xf32>
    %34 = arith.addf %24, %33 : vector<8x80xf32>
    %c0_26 = arith.constant 0 : index
    %c2 = arith.constant 2 : index
    %c0_27 = arith.constant 0 : index
    %35 = vector.load %arg1[%c0_26, %c2, %c0_27] : memref<2x12x120xf32, #tpu.memory_space<vmem>>, vector<1x8x120xf32>
    %36 = vector.shape_cast %35 : vector<1x8x120xf32> to vector<8x120xf32>
    %c2_28 = arith.constant 2 : index
    %c0_29 = arith.constant 0 : index
    %c0_30 = arith.constant 0 : index
    %37 = vector.load %arg2[%c2_28, %c0_29, %c0_30] : memref<5x120x80xf32, #tpu.memory_space<vmem>>, vector<1x120x80xf32>
    %38 = vector.shape_cast %37 : vector<1x120x80xf32> to vector<120x80xf32>
    %cst_31 = arith.constant dense<0.000000e+00> : vector<8x80xf32>
    %39 = tpu.matmul %36, %38, %cst_31 {dimension_numbers = #tpu.dot_dimension_numbers<[1], [0], [0], [1], [0, 0, 1, 1], [], []>} : vector<8x120xf32>, vector<120x80xf32>, vector<8x80xf32> -> vector<8x80xf32>
    %40 = arith.addf %30, %39 : vector<8x80xf32>
    %c2_32 = arith.constant 2 : index
    %c0_33 = arith.constant 0 : index
    %c0_34 = arith.constant 0 : index
    %41 = vector.load %arg3[%c2_32, %c0_33, %c0_34] : memref<5x120x80xf32, #tpu.memory_space<vmem>>, vector<1x120x80xf32>
    %42 = vector.shape_cast %41 : vector<1x120x80xf32> to vector<120x80xf32>
    %cst_35 = arith.constant dense<0.000000e+00> : vector<8x80xf32>
    %43 = tpu.matmul %36, %42, %cst_35 {dimension_numbers = #tpu.dot_dimension_numbers<[1], [0], [0], [1], [0, 0, 1, 1], [], []>} : vector<8x120xf32>, vector<120x80xf32>, vector<8x80xf32> -> vector<8x80xf32>
    %44 = arith.addf %34, %43 : vector<8x80xf32>
    %c0_36 = arith.constant 0 : index
    %c3 = arith.constant 3 : index
    %c0_37 = arith.constant 0 : index
    %45 = vector.load %arg1[%c0_36, %c3, %c0_37] : memref<2x12x120xf32, #tpu.memory_space<vmem>>, vector<1x8x120xf32>
    %46 = vector.shape_cast %45 : vector<1x8x120xf32> to vector<8x120xf32>
    %c3_38 = arith.constant 3 : index
    %c0_39 = arith.constant 0 : index
    %c0_40 = arith.constant 0 : index
    %47 = vector.load %arg2[%c3_38, %c0_39, %c0_40] : memref<5x120x80xf32, #tpu.memory_space<vmem>>, vector<1x120x80xf32>
    %48 = vector.shape_cast %47 : vector<1x120x80xf32> to vector<120x80xf32>
    %cst_41 = arith.constant dense<0.000000e+00> : vector<8x80xf32>
    %49 = tpu.matmul %46, %48, %cst_41 {dimension_numbers = #tpu.dot_dimension_numbers<[1], [0], [0], [1], [0, 0, 1, 1], [], []>} : vector<8x120xf32>, vector<120x80xf32>, vector<8x80xf32> -> vector<8x80xf32>
    %50 = arith.addf %40, %49 : vector<8x80xf32>
    %c3_42 = arith.constant 3 : index
    %c0_43 = arith.constant 0 : index
    %c0_44 = arith.constant 0 : index
    %51 = vector.load %arg3[%c3_42, %c0_43, %c0_44] : memref<5x120x80xf32, #tpu.memory_space<vmem>>, vector<1x120x80xf32>
    %52 = vector.shape_cast %51 : vector<1x120x80xf32> to vector<120x80xf32>
    %cst_45 = arith.constant dense<0.000000e+00> : vector<8x80xf32>
    %53 = tpu.matmul %46, %52, %cst_45 {dimension_numbers = #tpu.dot_dimension_numbers<[1], [0], [0], [1], [0, 0, 1, 1], [], []>} : vector<8x120xf32>, vector<120x80xf32>, vector<8x80xf32> -> vector<8x80xf32>
    %54 = arith.addf %44, %53 : vector<8x80xf32>
    %c0_46 = arith.constant 0 : index
    %c4 = arith.constant 4 : index
    %c0_47 = arith.constant 0 : index
    %55 = vector.load %arg1[%c0_46, %c4, %c0_47] : memref<2x12x120xf32, #tpu.memory_space<vmem>>, vector<1x8x120xf32>
    %56 = vector.shape_cast %55 : vector<1x8x120xf32> to vector<8x120xf32>
    %c4_48 = arith.constant 4 : index
    %c0_49 = arith.constant 0 : index
    %c0_50 = arith.constant 0 : index
    %57 = vector.load %arg2[%c4_48, %c0_49, %c0_50] : memref<5x120x80xf32, #tpu.memory_space<vmem>>, vector<1x120x80xf32>
    %58 = vector.shape_cast %57 : vector<1x120x80xf32> to vector<120x80xf32>
    %cst_51 = arith.constant dense<0.000000e+00> : vector<8x80xf32>
    %59 = tpu.matmul %56, %58, %cst_51 {dimension_numbers = #tpu.dot_dimension_numbers<[1], [0], [0], [1], [0, 0, 1, 1], [], []>} : vector<8x120xf32>, vector<120x80xf32>, vector<8x80xf32> -> vector<8x80xf32>
    %60 = arith.addf %50, %59 : vector<8x80xf32>
    %c4_52 = arith.constant 4 : index
    %c0_53 = arith.constant 0 : index
    %c0_54 = arith.constant 0 : index
    %61 = vector.load %arg3[%c4_52, %c0_53, %c0_54] : memref<5x120x80xf32, #tpu.memory_space<vmem>>, vector<1x120x80xf32>
    %62 = vector.shape_cast %61 : vector<1x120x80xf32> to vector<120x80xf32>
    %cst_55 = arith.constant dense<0.000000e+00> : vector<8x80xf32>
    %63 = tpu.matmul %56, %62, %cst_55 {dimension_numbers = #tpu.dot_dimension_numbers<[1], [0], [0], [1], [0, 0, 1, 1], [], []>} : vector<8x120xf32>, vector<120x80xf32>, vector<8x80xf32> -> vector<8x80xf32>
    %64 = arith.addf %54, %63 : vector<8x80xf32>
    %65 = arith.maximumf %60, %64 : vector<8x80xf32>
    %cst_56 = arith.constant dense<0.000000e+00> : vector<4x80xf32>
    %66 = tpu.matmul %7, %65, %cst_56 {dimension_numbers = #tpu.dot_dimension_numbers<[1], [0], [0], [1], [0, 0, 1, 1], [], []>} : vector<4x8xf32>, vector<8x80xf32>, vector<4x80xf32> -> vector<4x80xf32>
    %cst_57 = arith.constant dense<0.000000e+00> : vector<4x80xf32>
    %67 = tpu.matmul %15, %65, %cst_57 {dimension_numbers = #tpu.dot_dimension_numbers<[1], [0], [0], [1], [0, 0, 1, 1], [], []>} : vector<4x8xf32>, vector<8x80xf32>, vector<4x80xf32> -> vector<4x80xf32>
    %68 = arith.maximumf %66, %67 : vector<4x80xf32>
    %69 = vector.broadcast %16 : vector<1x80xf32> to vector<4x80xf32>
    %70 = arith.addf %68, %69 : vector<4x80xf32>
    %cst_58 = arith.constant 0.000000e+00 : f32
    %71 = vector.broadcast %cst_58 : f32 to vector<4x80xf32>
    %72 = arith.maximumf %70, %71 : vector<4x80xf32>
    %c0_59 = arith.constant 0 : index
    %c0_60 = arith.constant 0 : index
    %c0_61 = arith.constant 0 : index
    %73 = vector.load %arg5[%c0_59, %c0_60, %c0_61] : memref<2x4x80xf32, #tpu.memory_space<vmem>>, vector<1x4x80xf32>
    %74 = vector.shape_cast %73 : vector<1x4x80xf32> to vector<4x80xf32>
    %75 = vector.shape_cast %72 : vector<4x80xf32> to vector<1x4x80xf32>
    tpu.vector_store %arg5[%c0_59, %c0_60, %c0_61], %75 {strides = array<i32>} : memref<2x4x80xf32, #tpu.memory_space<vmem>>, vector<1x4x80xf32>,
    %c1_62 = arith.constant 1 : index
    %c0_63 = arith.constant 0 : index
    %c0_64 = arith.constant 0 : index
    %76 = vector.load %arg1[%c1_62, %c0_63, %c0_64] : memref<2x12x120xf32, #tpu.memory_space<vmem>>, vector<1x8x120xf32>
    %77 = vector.shape_cast %76 : vector<1x8x120xf32> to vector<8x120xf32>
    %c0_65 = arith.constant 0 : index
    %c0_66 = arith.constant 0 : index
    %c0_67 = arith.constant 0 : index
    %78 = vector.load %arg2[%c0_65, %c0_66, %c0_67] : memref<5x120x80xf32, #tpu.memory_space<vmem>>, vector<1x120x80xf32>
    %79 = vector.shape_cast %78 : vector<1x120x80xf32> to vector<120x80xf32>
    %cst_68 = arith.constant dense<0.000000e+00> : vector<8x80xf32>
    %80 = tpu.matmul %77, %79, %cst_68 {dimension_numbers = #tpu.dot_dimension_numbers<[1], [0], [0], [1], [0, 0, 1, 1], [], []>} : vector<8x120xf32>, vector<120x80xf32>, vector<8x80xf32> -> vector<8x80xf32>
    %c0_69 = arith.constant 0 : index
    %c0_70 = arith.constant 0 : index
    %c0_71 = arith.constant 0 : index
    %81 = vector.load %arg3[%c0_69, %c0_70, %c0_71] : memref<5x120x80xf32, #tpu.memory_space<vmem>>, vector<1x120x80xf32>
    %82 = vector.shape_cast %81 : vector<1x120x80xf32> to vector<120x80xf32>
    %cst_72 = arith.constant dense<0.000000e+00> : vector<8x80xf32>
    %83 = tpu.matmul %77, %82, %cst_72 {dimension_numbers = #tpu.dot_dimension_numbers<[1], [0], [0], [1], [0, 0, 1, 1], [], []>} : vector<8x120xf32>, vector<120x80xf32>, vector<8x80xf32> -> vector<8x80xf32>
    %c1_73 = arith.constant 1 : index
    %c1_74 = arith.constant 1 : index
    %c0_75 = arith.constant 0 : index
    %84 = vector.load %arg1[%c1_73, %c1_74, %c0_75] : memref<2x12x120xf32, #tpu.memory_space<vmem>>, vector<1x8x120xf32>
    %85 = vector.shape_cast %84 : vector<1x8x120xf32> to vector<8x120xf32>
    %c1_76 = arith.constant 1 : index
    %c0_77 = arith.constant 0 : index
    %c0_78 = arith.constant 0 : index
    %86 = vector.load %arg2[%c1_76, %c0_77, %c0_78] : memref<5x120x80xf32, #tpu.memory_space<vmem>>, vector<1x120x80xf32>
    %87 = vector.shape_cast %86 : vector<1x120x80xf32> to vector<120x80xf32>
    %cst_79 = arith.constant dense<0.000000e+00> : vector<8x80xf32>
    %88 = tpu.matmul %85, %87, %cst_79 {dimension_numbers = #tpu.dot_dimension_numbers<[1], [0], [0], [1], [0, 0, 1, 1], [], []>} : vector<8x120xf32>, vector<120x80xf32>, vector<8x80xf32> -> vector<8x80xf32>
    %89 = arith.addf %80, %88 : vector<8x80xf32>
    %c1_80 = arith.constant 1 : index
    %c0_81 = arith.constant 0 : index
    %c0_82 = arith.constant 0 : index
    %90 = vector.load %arg3[%c1_80, %c0_81, %c0_82] : memref<5x120x80xf32, #tpu.memory_space<vmem>>, vector<1x120x80xf32>
    %91 = vector.shape_cast %90 : vector<1x120x80xf32> to vector<120x80xf32>
    %cst_83 = arith.constant dense<0.000000e+00> : vector<8x80xf32>
    %92 = tpu.matmul %85, %91, %cst_83 {dimension_numbers = #tpu.dot_dimension_numbers<[1], [0], [0], [1], [0, 0, 1, 1], [], []>} : vector<8x120xf32>, vector<120x80xf32>, vector<8x80xf32> -> vector<8x80xf32>
    %93 = arith.addf %83, %92 : vector<8x80xf32>
    %c1_84 = arith.constant 1 : index
    %c2_85 = arith.constant 2 : index
    %c0_86 = arith.constant 0 : index
    %94 = vector.load %arg1[%c1_84, %c2_85, %c0_86] : memref<2x12x120xf32, #tpu.memory_space<vmem>>, vector<1x8x120xf32>
    %95 = vector.shape_cast %94 : vector<1x8x120xf32> to vector<8x120xf32>
    %c2_87 = arith.constant 2 : index
    %c0_88 = arith.constant 0 : index
    %c0_89 = arith.constant 0 : index
    %96 = vector.load %arg2[%c2_87, %c0_88, %c0_89] : memref<5x120x80xf32, #tpu.memory_space<vmem>>, vector<1x120x80xf32>
    %97 = vector.shape_cast %96 : vector<1x120x80xf32> to vector<120x80xf32>
    %cst_90 = arith.constant dense<0.000000e+00> : vector<8x80xf32>
    %98 = tpu.matmul %95, %97, %cst_90 {dimension_numbers = #tpu.dot_dimension_numbers<[1], [0], [0], [1], [0, 0, 1, 1], [], []>} : vector<8x120xf32>, vector<120x80xf32>, vector<8x80xf32> -> vector<8x80xf32>
    %99 = arith.addf %89, %98 : vector<8x80xf32>
    %c2_91 = arith.constant 2 : index
    %c0_92 = arith.constant 0 : index
    %c0_93 = arith.constant 0 : index
    %100 = vector.load %arg3[%c2_91, %c0_92, %c0_93] : memref<5x120x80xf32, #tpu.memory_space<vmem>>, vector<1x120x80xf32>
    %101 = vector.shape_cast %100 : vector<1x120x80xf32> to vector<120x80xf32>
    %cst_94 = arith.constant dense<0.000000e+00> : vector<8x80xf32>
    %102 = tpu.matmul %95, %101, %cst_94 {dimension_numbers = #tpu.dot_dimension_numbers<[1], [0], [0], [1], [0, 0, 1, 1], [], []>} : vector<8x120xf32>, vector<120x80xf32>, vector<8x80xf32> -> vector<8x80xf32>
    %103 = arith.addf %93, %102 : vector<8x80xf32>
    %c1_95 = arith.constant 1 : index
    %c3_96 = arith.constant 3 : index
    %c0_97 = arith.constant 0 : index
    %104 = vector.load %arg1[%c1_95, %c3_96, %c0_97] : memref<2x12x120xf32, #tpu.memory_space<vmem>>, vector<1x8x120xf32>
    %105 = vector.shape_cast %104 : vector<1x8x120xf32> to vector<8x120xf32>
    %c3_98 = arith.constant 3 : index
    %c0_99 = arith.constant 0 : index
    %c0_100 = arith.constant 0 : index
    %106 = vector.load %arg2[%c3_98, %c0_99, %c0_100] : memref<5x120x80xf32, #tpu.memory_space<vmem>>, vector<1x120x80xf32>
    %107 = vector.shape_cast %106 : vector<1x120x80xf32> to vector<120x80xf32>
    %cst_101 = arith.constant dense<0.000000e+00> : vector<8x80xf32>
    %108 = tpu.matmul %105, %107, %cst_101 {dimension_numbers = #tpu.dot_dimension_numbers<[1], [0], [0], [1], [0, 0, 1, 1], [], []>} : vector<8x120xf32>, vector<120x80xf32>, vector<8x80xf32> -> vector<8x80xf32>
    %109 = arith.addf %99, %108 : vector<8x80xf32>
    %c3_102 = arith.constant 3 : index
    %c0_103 = arith.constant 0 : index
    %c0_104 = arith.constant 0 : index
    %110 = vector.load %arg3[%c3_102, %c0_103, %c0_104] : memref<5x120x80xf32, #tpu.memory_space<vmem>>, vector<1x120x80xf32>
    %111 = vector.shape_cast %110 : vector<1x120x80xf32> to vector<120x80xf32>
    %cst_105 = arith.constant dense<0.000000e+00> : vector<8x80xf32>
    %112 = tpu.matmul %105, %111, %cst_105 {dimension_numbers = #tpu.dot_dimension_numbers<[1], [0], [0], [1], [0, 0, 1, 1], [], []>} : vector<8x120xf32>, vector<120x80xf32>, vector<8x80xf32> -> vector<8x80xf32>
    %113 = arith.addf %103, %112 : vector<8x80xf32>
    %c1_106 = arith.constant 1 : index
    %c4_107 = arith.constant 4 : index
    %c0_108 = arith.constant 0 : index
    %114 = vector.load %arg1[%c1_106, %c4_107, %c0_108] : memref<2x12x120xf32, #tpu.memory_space<vmem>>, vector<1x8x120xf32>
    %115 = vector.shape_cast %114 : vector<1x8x120xf32> to vector<8x120xf32>
    %c4_109 = arith.constant 4 : index
    %c0_110 = arith.constant 0 : index
    %c0_111 = arith.constant 0 : index
    %116 = vector.load %arg2[%c4_109, %c0_110, %c0_111] : memref<5x120x80xf32, #tpu.memory_space<vmem>>, vector<1x120x80xf32>
    %117 = vector.shape_cast %116 : vector<1x120x80xf32> to vector<120x80xf32>
    %cst_112 = arith.constant dense<0.000000e+00> : vector<8x80xf32>
    %118 = tpu.matmul %115, %117, %cst_112 {dimension_numbers = #tpu.dot_dimension_numbers<[1], [0], [0], [1], [0, 0, 1, 1], [], []>} : vector<8x120xf32>, vector<120x80xf32>, vector<8x80xf32> -> vector<8x80xf32>
    %119 = arith.addf %109, %118 : vector<8x80xf32>
    %c4_113 = arith.constant 4 : index
    %c0_114 = arith.constant 0 : index
    %c0_115 = arith.constant 0 : index
    %120 = vector.load %arg3[%c4_113, %c0_114, %c0_115] : memref<5x120x80xf32, #tpu.memory_space<vmem>>, vector<1x120x80xf32>
    %121 = vector.shape_cast %120 : vector<1x120x80xf32> to vector<120x80xf32>
    %cst_116 = arith.constant dense<0.000000e+00> : vector<8x80xf32>
    %122 = tpu.matmul %115, %121, %cst_116 {dimension_numbers = #tpu.dot_dimension_numbers<[1], [0], [0], [1], [0, 0, 1, 1], [], []>} : vector<8x120xf32>, vector<120x80xf32>, vector<8x80xf32> -> vector<8x80xf32>
    %123 = arith.addf %113, %122 : vector<8x80xf32>
    %124 = arith.maximumf %119, %123 : vector<8x80xf32>
    %cst_117 = arith.constant dense<0.000000e+00> : vector<4x80xf32>
    %125 = tpu.matmul %7, %124, %cst_117 {dimension_numbers = #tpu.dot_dimension_numbers<[1], [0], [0], [1], [0, 0, 1, 1], [], []>} : vector<4x8xf32>, vector<8x80xf32>, vector<4x80xf32> -> vector<4x80xf32>
    %cst_118 = arith.constant dense<0.000000e+00> : vector<4x80xf32>
    %126 = tpu.matmul %15, %124, %cst_118 {dimension_numbers = #tpu.dot_dimension_numbers<[1], [0], [0], [1], [0, 0, 1, 1], [], []>} : vector<4x8xf32>, vector<8x80xf32>, vector<4x80xf32> -> vector<4x80xf32>
    %127 = arith.maximumf %125, %126 : vector<4x80xf32>
    %128 = vector.broadcast %16 : vector<1x80xf32> to vector<4x80xf32>
    %129 = arith.addf %127, %128 : vector<4x80xf32>
    %cst_119 = arith.constant 0.000000e+00 : f32
    %130 = vector.broadcast %cst_119 : f32 to vector<4x80xf32>
    %131 = arith.maximumf %129, %130 : vector<4x80xf32>
    %c1_120 = arith.constant 1 : index
    %c0_121 = arith.constant 0 : index
    %c0_122 = arith.constant 0 : index
    %132 = vector.load %arg5[%c1_120, %c0_121, %c0_122] : memref<2x4x80xf32, #tpu.memory_space<vmem>>, vector<1x4x80xf32>
    %133 = vector.shape_cast %132 : vector<1x4x80xf32> to vector<4x80xf32>
    %134 = vector.shape_cast %131 : vector<4x80xf32> to vector<1x4x80xf32>
    tpu.vector_store %arg5[%c1_120, %c0_121, %c0_122], %134 {strides = array<i32>} : memref<2x4x80xf32, #tpu.memory_space<vmem>>, vector<1x4x80xf32>,
    return
  }
  func.func @transform_0(%arg0: i32) -> (i32, i32, i32) {
    %c0_i32 = arith.constant 0 : i32
    %c0_i32_0 = arith.constant 0 : i32
    %c0_i32_1 = arith.constant 0 : i32
    return %arg0, %c0_i32, %c0_i32_0 : i32, i32, i32
  }
  func.func @transform_1(%arg0: i32) -> (i32, i32, i32) {
    %c0_i32 = arith.constant 0 : i32
    %c0_i32_0 = arith.constant 0 : i32
    %c0_i32_1 = arith.constant 0 : i32
    %c0_i32_2 = arith.constant 0 : i32
    return %c0_i32, %c0_i32_0, %c0_i32_1 : i32, i32, i32
  }
  func.func @transform_2(%arg0: i32) -> (i32, i32, i32) {
    %c0_i32 = arith.constant 0 : i32
    %c0_i32_0 = arith.constant 0 : i32
    %c0_i32_1 = arith.constant 0 : i32
    %c0_i32_2 = arith.constant 0 : i32
    return %c0_i32, %c0_i32_0, %c0_i32_1 : i32, i32, i32
  }
  func.func @transform_3(%arg0: i32) -> (i32, i32) {
    %c0_i32 = arith.constant 0 : i32
    %c0_i32_0 = arith.constant 0 : i32
    %c0_i32_1 = arith.constant 0 : i32
    return %c0_i32, %c0_i32_0 : i32, i32
  }
  func.func @transform_4(%arg0: i32) -> (i32, i32, i32) {
    %c0_i32 = arith.constant 0 : i32
    %c0_i32_0 = arith.constant 0 : i32
    %c0_i32_1 = arith.constant 0 : i32
    return %arg0, %c0_i32, %c0_i32_0 : i32, i32, i32
  }
}

module attributes {stable_mosaic.version = 11 : i64} {
  func.func @_fc_relu_fc_relu_kernel(%arg0: i32, %arg1: memref<2x320xf32, #tpu.memory_space<vmem>>, %arg2: memref<320x50xf32, #tpu.memory_space<vmem>>, %arg3: memref<1x50xf32, #tpu.memory_space<vmem>>, %arg4: memref<50x10xf32, #tpu.memory_space<vmem>>, %arg5: memref<1x10xf32, #tpu.memory_space<vmem>>, %arg6: memref<2x10xf32, #tpu.memory_space<vmem>>) attributes {dimension_semantics = [#tpu.dimension_semantics<parallel>], iteration_bounds = array<i64: 1>, scalar_prefetch = 0 : i64, scratch_operands = 0 : i64, tpu.core_type = #tpu.core_type<tc>, window_params = [{transform_indices = @transform_0, window_bounds = array<i64: 2, 320>}, {pipeline_mode = #tpu.pipeline_mode<synchronous>, transform_indices = @transform_1, window_bounds = array<i64: 320, 50>}, {pipeline_mode = #tpu.pipeline_mode<synchronous>, transform_indices = @transform_2, window_bounds = array<i64: 1, 50>}, {pipeline_mode = #tpu.pipeline_mode<synchronous>, transform_indices = @transform_3, window_bounds = array<i64: 50, 10>}, {pipeline_mode = #tpu.pipeline_mode<synchronous>, transform_indices = @transform_4, window_bounds = array<i64: 1, 10>}, {transform_indices = @transform_5, window_bounds = array<i64: 2, 10>}]} {
    %c0 = arith.constant 0 : index
    %c0_0 = arith.constant 0 : index
    %0 = vector.load %arg1[%c0, %c0_0] : memref<2x320xf32, #tpu.memory_space<vmem>>, vector<2x320xf32>
    %c0_1 = arith.constant 0 : index
    %c0_2 = arith.constant 0 : index
    %1 = vector.load %arg2[%c0_1, %c0_2] : memref<320x50xf32, #tpu.memory_space<vmem>>, vector<320x50xf32>
    %cst = arith.constant dense<0.000000e+00> : vector<2x50xf32>
    %2 = tpu.matmul %0, %1, %cst {dimension_numbers = #tpu.dot_dimension_numbers<[1], [0], [0], [1], [0, 0, 1, 1], [], []>} : vector<2x320xf32>, vector<320x50xf32>, vector<2x50xf32> -> vector<2x50xf32>
    %c0_3 = arith.constant 0 : index
    %c0_4 = arith.constant 0 : index
    %3 = vector.load %arg3[%c0_3, %c0_4] : memref<1x50xf32, #tpu.memory_space<vmem>>, vector<1x50xf32>
    %4 = vector.broadcast %3 : vector<1x50xf32> to vector<2x50xf32>
    %5 = arith.addf %2, %4 : vector<2x50xf32>
    %cst_5 = arith.constant 0.000000e+00 : f32
    %6 = vector.broadcast %cst_5 : f32 to vector<2x50xf32>
    %7 = arith.maximumf %5, %6 : vector<2x50xf32>
    %c0_6 = arith.constant 0 : index
    %c0_7 = arith.constant 0 : index
    %8 = vector.load %arg4[%c0_6, %c0_7] : memref<50x10xf32, #tpu.memory_space<vmem>>, vector<50x10xf32>
    %cst_8 = arith.constant dense<0.000000e+00> : vector<2x10xf32>
    %9 = tpu.matmul %7, %8, %cst_8 {dimension_numbers = #tpu.dot_dimension_numbers<[1], [0], [0], [1], [0, 0, 1, 1], [], []>} : vector<2x50xf32>, vector<50x10xf32>, vector<2x10xf32> -> vector<2x10xf32>
    %c0_9 = arith.constant 0 : index
    %c0_10 = arith.constant 0 : index
    %10 = vector.load %arg5[%c0_9, %c0_10] : memref<1x10xf32, #tpu.memory_space<vmem>>, vector<1x10xf32>
    %11 = vector.broadcast %10 : vector<1x10xf32> to vector<2x10xf32>
    %12 = arith.addf %9, %11 : vector<2x10xf32>
    %cst_11 = arith.constant 0.000000e+00 : f32
    %13 = vector.broadcast %cst_11 : f32 to vector<2x10xf32>
    %14 = arith.maximumf %12, %13 : vector<2x10xf32>
    %c0_12 = arith.constant 0 : index
    %c0_13 = arith.constant 0 : index
    %15 = vector.load %arg6[%c0_12, %c0_13] : memref<2x10xf32, #tpu.memory_space<vmem>>, vector<2x10xf32>
    tpu.vector_store %arg6[%c0_12, %c0_13], %14 {strides = array<i32>} : memref<2x10xf32, #tpu.memory_space<vmem>>, vector<2x10xf32>,
    return
  }
  func.func @transform_0(%arg0: i32) -> (i32, i32) {
    %c0_i32 = arith.constant 0 : i32
    %c0_i32_0 = arith.constant 0 : i32
    return %arg0, %c0_i32 : i32, i32
  }
  func.func @transform_1(%arg0: i32) -> (i32, i32) {
    %c0_i32 = arith.constant 0 : i32
    %c0_i32_0 = arith.constant 0 : i32
    %c0_i32_1 = arith.constant 0 : i32
    return %c0_i32, %c0_i32_0 : i32, i32
  }
  func.func @transform_2(%arg0: i32) -> (i32, i32) {
    %c0_i32 = arith.constant 0 : i32
    %c0_i32_0 = arith.constant 0 : i32
    %c0_i32_1 = arith.constant 0 : i32
    return %c0_i32, %c0_i32_0 : i32, i32
  }
  func.func @transform_3(%arg0: i32) -> (i32, i32) {
    %c0_i32 = arith.constant 0 : i32
    %c0_i32_0 = arith.constant 0 : i32
    %c0_i32_1 = arith.constant 0 : i32
    return %c0_i32, %c0_i32_0 : i32, i32
  }
  func.func @transform_4(%arg0: i32) -> (i32, i32) {
    %c0_i32 = arith.constant 0 : i32
    %c0_i32_0 = arith.constant 0 : i32
    %c0_i32_1 = arith.constant 0 : i32
    return %c0_i32, %c0_i32_0 : i32, i32
  }
  func.func @transform_5(%arg0: i32) -> (i32, i32) {
    %c0_i32 = arith.constant 0 : i32
    %c0_i32_0 = arith.constant 0 : i32
    return %arg0, %c0_i32 : i32, i32
  }
}

</mosaic_0001>

<llo_original>
// kernel: mnist_convnet_forward.5
$region0: #{mnist_convnet_forward.5}
  #allocation0 [shape = 'u32[]', space=smem, size = 0x4, offset = 0x4, fixed_abs, tag = 'smem constant byte address 0x4 - core index']
  #allocation1 [shape = 'u32[72,128]{1,0:T(1,128)}', space=vmem, size = 0x9000, scoped, tag = 'internal scratch']
  %s0 = inlined_call_operand.vmem [shape: f32[2,320], index: 0, kind: input, shape index: {}]
  %s1 = inlined_call_operand.vmem [shape: f32[320,50], index: 1, kind: input, shape index: {}]
  %s2 = inlined_call_operand.vmem [shape: f32[1,50], index: 2, kind: input, shape index: {}]
  %s3 = inlined_call_operand.vmem [shape: f32[50,10], index: 3, kind: input, shape index: {}]
  %s4 = inlined_call_operand.vmem [shape: f32[1,10], index: 4, kind: input, shape index: {}]
  %s5 = inlined_call_operand.hbm [shape: f32[2,10], index: 5, kind: output, shape index: {}]
  %s6 = sld [smem:[#allocation0]]
  $region30: #{mnist_convnet_forward.5} parent=0
    _
  %s8 = ssub.s32 1, %s6
  %s9 = scalar_select 0, %s8, %s6
  $region1: #{mnist_convnet_forward.5} parent=0
    #allocation2 [shape = 'u8[1024]{0}', space=vmem, size = 0x400, scoped, tag = 'output window, operand 0, single buffered']
    #allocation3 [shape = 's32[1]{0}', space=sflag, size = 0x4, scoped, tag = 'scoped memory for mnist_convnet_forward.5']
    %10 = vsyncpa [#allocation3], 0
    // Predicated region
    $region2: #{mnist_convnet_forward.5} parent=1 // pred_check
      _
    $region3: #{mnist_convnet_forward.5} parent=1 // pred_check_branch
      %12 = sbr.rel (0) target = $region5
    $region4: #{mnist_convnet_forward.5} parent=1 // pred_region
      _
    $region5: #{mnist_convnet_forward.5} parent=1 // pred_fallthru
      _
    // Predicated region
    $region6: #{mnist_convnet_forward.5} parent=1 // pred_check
      _
    $region7: #{mnist_convnet_forward.5} parent=1 // pred_check_branch
      %14 = sbr.rel (0) target = $region9
    $region8: #{mnist_convnet_forward.5} parent=1 // pred_region
      _
    $region9: #{mnist_convnet_forward.5} parent=1 // pred_fallthru
      _
    // Predicated region
    $region10: #{mnist_convnet_forward.5} parent=1 // pred_check
      _
    $region11: #{mnist_convnet_forward.5} parent=1 // pred_check_branch
      %16 = sbr.rel (0) target = $region13
    $region12: #{mnist_convnet_forward.5} parent=1 // pred_region
      _
    $region13: #{mnist_convnet_forward.5} parent=1 // pred_fallthru
      _
    // Predicated region
    $region14: #{mnist_convnet_forward.5} parent=1 // pred_check
      _
    $region15: #{mnist_convnet_forward.5} parent=1 // pred_check_branch
      %18 = sbr.rel (0) target = $region17
    $region16: #{mnist_convnet_forward.5} parent=1 // pred_region
      _
    $region17: #{mnist_convnet_forward.5} parent=1 // pred_fallthru
      _
    // Predicated region
    $region18: #{mnist_convnet_forward.5} parent=1 // pred_check
      _
    $region19: #{mnist_convnet_forward.5} parent=1 // pred_check_branch
      %20 = sbr.rel (0) target = $region21
    $region20: #{mnist_convnet_forward.5} parent=1 // pred_region
      _
    $region21: #{mnist_convnet_forward.5} parent=1 // pred_fallthru
      _
    %v21 = vld [vmem:[%s0] sm:$0x3f]
    %v22 = vld [vmem:[%s1] sm:$0xff]
    %v23 = vld [vmem:[%s1 + $0x8] sm:$0xff]
    %v24 = vld [vmem:[%s1 + $0x10] sm:$0xff]
    %v25 = vld [vmem:[%s1 + $0x18] sm:$0xff]
    %v26 = vld [vmem:[%s1 + $0x20] sm:$0xff]
    %v27 = vld [vmem:[%s1 + $0x28] sm:$0xff]
    %v28 = vld [vmem:[%s1 + $0x30] sm:$0xff]
    %v29 = vld [vmem:[%s1 + $0x38] sm:$0xff]
    %v30 = vld [vmem:[%s1 + $0x40] sm:$0xff]
    %v31 = vld [vmem:[%s1 + $0x48] sm:$0xff]
    %v32 = vld [vmem:[%s1 + $0x50] sm:$0xff]
    %v33 = vld [vmem:[%s1 + $0x58] sm:$0xff]
    %v34 = vld [vmem:[%s1 + $0x60] sm:$0xff]
    %v35 = vld [vmem:[%s1 + $0x68] sm:$0xff]
    %v36 = vld [vmem:[%s1 + $0x70] sm:$0xff]
    %v37 = vld [vmem:[%s1 + $0x78] sm:$0xff]
    %v38 = vld [vmem:[%s1 + $0x80] sm:$0xff]
    %v39 = vld [vmem:[%s1 + $0x88] sm:$0xff]
    %v40 = vld [vmem:[%s1 + $0x90] sm:$0xff]
    %v41 = vld [vmem:[%s1 + $0x98] sm:$0xff]
    %v42 = vld [vmem:[%s1 + $0xa0] sm:$0xff]
    %v43 = vld [vmem:[%s1 + $0xa8] sm:$0xff]
    %v44 = vld [vmem:[%s1 + $0xb0] sm:$0xff]
    %v45 = vld [vmem:[%s1 + $0xb8] sm:$0xff]
    %v46 = vld [vmem:[%s1 + $0xc0] sm:$0xff]
    %v47 = vld [vmem:[%s1 + $0xc8] sm:$0xff]
    %v48 = vld [vmem:[%s1 + $0xd0] sm:$0xff]
    %v49 = vld [vmem:[%s1 + $0xd8] sm:$0xff]
    %v50 = vld [vmem:[%s1 + $0xe0] sm:$0xff]
    %v51 = vld [vmem:[%s1 + $0xe8] sm:$0xff]
    %v52 = vld [vmem:[%s1 + $0xf0] sm:$0xff]
    %v53 = vld [vmem:[%s1 + $0xf8] sm:$0xff]
    %v54 = vld [vmem:[%s1 + $0x100] sm:$0xff]
    %v55 = vld [vmem:[%s1 + $0x108] sm:$0xff]
    %v56 = vld [vmem:[%s1 + $0x110] sm:$0xff]
    %v57 = vld [vmem:[%s1 + $0x118] sm:$0xff]
    %v58 = vld [vmem:[%s1 + $0x120] sm:$0xff]
    %v59 = vld [vmem:[%s1 + $0x128] sm:$0xff]
    %v60 = vld [vmem:[%s1 + $0x130] sm:$0xff]
    %v61 = vld [vmem:[%s1 + $0x138] sm:$0xff]
    %v62 = vld [vmem:[%s2] sm:$0x1]
    %v64 = vperm.slane %v62, 0
    %67 = vst [vmem:[#allocation1] ss:$4 sm:$0xff] %v21
    %v68 = vld.sshfl [vmem:[#allocation1] sm:$0xff pattern:$0x73625140]
    %v69 = vld.sshfl [vmem:[#allocation1 + $0x8] sm:$0xff pattern:$0x73625140]
    %v70 = vld.sshfl [vmem:[#allocation1 + $0x10] sm:$0xff pattern:$0x73625140]
    %vm73 = vcmask 523264
    %v74 = vsel %vm73, %v70, 0
    %76 = vmatpush.msra.mxu0 %v37
    %77 = vmatpush.msra.mxu0 %v36
    %78 = vmatpush.msra.mxu0 %v35
    %79 = vmatpush.msra.mxu0 %v34
    %80 = vmatpush.msra.mxu0 %v33
    %81 = vmatpush.msra.mxu0 %v32
    %82 = vmatpush.msra.mxu0 %v31
    %83 = vmatpush.msra.mxu0 %v30
    %84 = vmatpush.msra.mxu0 %v29
    %85 = vmatpush.msra.mxu0 %v28
    %86 = vmatpush.msra.mxu0 %v27
    %87 = vmatpush.msra.mxu0 %v26
    %88 = vmatpush.msra.mxu0 %v25
    %89 = vmatpush.msra.mxu0 %v24
    %90 = vmatpush.msra.mxu0 %v23
    %91 = vmatpush.msra.mxu0 %v22
    %92 = vmatmul.f32.gmra.mxu0 %v68
    %v93 = vpop.f32.mrf.mxu0
    %v94 = vadd.f32 %v64, %v93
    %95 = vdwg.mxu0
    %96 = vmatpush.msra.mxu0 %v53
    %97 = vmatpush.msra.mxu0 %v52
    %98 = vmatpush.msra.mxu0 %v51
    %99 = vmatpush.msra.mxu0 %v50
    %100 = vmatpush.msra.mxu0 %v49
    %101 = vmatpush.msra.mxu0 %v48
    %102 = vmatpush.msra.mxu0 %v47
    %103 = vmatpush.msra.mxu0 %v46
    %104 = vmatpush.msra.mxu0 %v45
    %105 = vmatpush.msra.mxu0 %v44
    %106 = vmatpush.msra.mxu0 %v43
    %107 = vmatpush.msra.mxu0 %v42
    %108 = vmatpush.msra.mxu0 %v41
    %109 = vmatpush.msra.mxu0 %v40
    %110 = vmatpush.msra.mxu0 %v39
    %111 = vmatpush.msra.mxu0 %v38
    %112 = vmatmul.f32.gmra.mxu0 %v69
    %v113 = vpop.f32.mrf.mxu0
    %v114 = vadd.f32 %v94, %v113
    %115 = vdwg.mxu0
    %116 = vmatpush.msra.mxu0 0.0
    %117 = vmatpush.msra.mxu0 0.0
    %118 = vmatpush.msra.mxu0 0.0
    %119 = vmatpush.msra.mxu0 0.0
    %120 = vmatpush.msra.mxu0 0.0
    %121 = vmatpush.msra.mxu0 0.0
    %122 = vmatpush.msra.mxu0 0.0
    %123 = vmatpush.msra.mxu0 0.0
    %124 = vmatpush.msra.mxu0 %v61
    %125 = vmatpush.msra.mxu0 %v60
    %126 = vmatpush.msra.mxu0 %v59
    %127 = vmatpush.msra.mxu0 %v58
    %128 = vmatpush.msra.mxu0 %v57
    %129 = vmatpush.msra.mxu0 %v56
    %130 = vmatpush.msra.mxu0 %v55
    %131 = vmatpush.msra.mxu0 %v54
    %132 = vmatmul.f32.gmra.mxu0 %v74
    %v133 = vpop.f32.mrf.mxu0
    %v134 = vadd.f32 %v114, %v133
    %135 = vdwg.mxu0
    %v136 = vmax.f32 %v134, 0.0
    %v137 = vld [vmem:[%s3] sm:$0xff]
    %v138 = vld [vmem:[%s3 + $0x8] sm:$0xff]
    %v139 = vld [vmem:[%s3 + $0x10] sm:$0xff]
    %v140 = vld [vmem:[%s3 + $0x18] sm:$0xff]
    %v141 = vld [vmem:[%s3 + $0x20] sm:$0xff]
    %v142 = vld [vmem:[%s3 + $0x28] sm:$0xff]
    %v143 = vld [vmem:[%s3 + $0x30] sm:$0x3]
    %v144 = vld [vmem:[%s4] sm:$0x1]
    %v146 = vperm.slane %v144, 0
    %vm148 = vcmask 408576
    %v150 = vsel %vm148, %v136, 0
    %vm152 = vcmask 1041408
    %v154 = vsel %vm152, %v143, 0
    %156 = vmatpush.msra.mxu0 0.0
    %157 = vmatpush.msra.mxu0 0.0
    %158 = vmatpush.msra.mxu0 0.0
    %159 = vmatpush.msra.mxu0 0.0
    %160 = vmatpush.msra.mxu0 0.0
    %161 = vmatpush.msra.mxu0 0.0
    %162 = vmatpush.msra.mxu0 0.0
    %163 = vmatpush.msra.mxu0 0.0
    %164 = vmatpush.msra.mxu0 0.0
    %165 = vmatpush.msra.mxu0 %v154
    %166 = vmatpush.msra.mxu0 %v142
    %167 = vmatpush.msra.mxu0 %v141
    %168 = vmatpush.msra.mxu0 %v140
    %169 = vmatpush.msra.mxu0 %v139
    %170 = vmatpush.msra.mxu0 %v138
    %171 = vmatpush.msra.mxu0 %v137
    %172 = vmatmul.f32.gmra.mxu0 %v150
    %v173 = vpop.f32.mrf.mxu0
    %v174 = vadd.f32 %v146, %v173
    %175 = vdwg.mxu0
    %v176 = vmax.f32 %v174, 0.0
    %vm177 = vcmask 74752
    %178 = vst.msk [vmem:[#allocation2] sm:$0x3] %vm177, %v176
    // Predicated region
    $region22: #{mnist_convnet_forward.5} parent=1 // pred_check
      _
    $region23: #{mnist_convnet_forward.5} parent=1 // pred_check_branch
      %180 = sbr.rel (0) target = $region25
    $region24: #{mnist_convnet_forward.5} parent=1 // pred_region
      %182 = vsyncadd [#allocation3], 0
      %s184 = sshll.u32 [#allocation2], 4
      %s185 = int_to_ptr.vmem [resolvable:$true] %s184
      %s186 = sshll.u32 %s5, 4
      %s187 = int_to_ptr.hbm [resolvable:$true] %s186
      %189 = dma.vmem_to_hbm [thread:$0]  %s185, 32, %s187, [#allocation3]
    $region25: #{mnist_convnet_forward.5} parent=1 // pred_fallthru
      _
    // Predicated region
    $region26: #{mnist_convnet_forward.5} parent=1 // pred_check
      _
    $region27: #{mnist_convnet_forward.5} parent=1 // pred_check_branch
      %191 = sbr.rel (0) target = $region29
    $region28: #{mnist_convnet_forward.5} parent=1 // pred_region
      %193 = dma.done [#allocation3], 32
    $region29: #{mnist_convnet_forward.5} parent=1 // pred_fallthru
      _
    %194 = vsyncpa [#allocation3], 1

// kernel: mnist_convnet_forward.3
$region0: #{mnist_convnet_forward.3}
  #allocation0 [shape = 'u32[]', space=smem, size = 0x4, offset = 0x4, fixed_abs, tag = 'smem constant byte address 0x4 - core index']
  #allocation1 [shape = 'u32[72,128]{1,0:T(1,128)}', space=vmem, size = 0x9000, scoped, tag = 'internal scratch']
  %s0 = inlined_call_operand.vmem [shape: f32[2,28,28], index: 0, kind: input, shape index: {}]
  %s1 = inlined_call_operand.vmem [shape: f32[5,28,120], index: 1, kind: input, shape index: {}]
  %s2 = inlined_call_operand.hbm [shape: f32[5,28,120], index: 2, kind: input, shape index: {}]
  %s3 = inlined_call_operand.vmem [shape: f32[1,120], index: 3, kind: input, shape index: {}]
  %s4 = inlined_call_operand.vmem [shape: f32[2,12,120], index: 4, kind: output, shape index: {}]
  %s5 = sld [smem:[#allocation0]]
  $region30: #{mnist_convnet_forward.3} parent=0
    _
  %s7 = ssub.s32 1, %s5
  %s8 = scalar_select 0, %s7, %s5
  $region1: #{mnist_convnet_forward.3} parent=0
    #allocation2 [shape = 'u8[81920]{0}', space=vmem, size = 0x14000, scoped, tag = 'input window, operand 2, single buffered']
    #allocation3 [shape = 's32[1]{0}', space=sflag, size = 0x4, scoped, tag = 'scoped memory for mnist_convnet_forward.3']
    %9 = vsyncpa [#allocation3], 0
    // Predicated region
    $region2: #{mnist_convnet_forward.3} parent=1 // pred_check
      _
    $region3: #{mnist_convnet_forward.3} parent=1 // pred_check_branch
      %11 = sbr.rel (0) target = $region5
    $region4: #{mnist_convnet_forward.3} parent=1 // pred_region
      _
    $region5: #{mnist_convnet_forward.3} parent=1 // pred_fallthru
      _
    // Predicated region
    $region6: #{mnist_convnet_forward.3} parent=1 // pred_check
      _
    $region7: #{mnist_convnet_forward.3} parent=1 // pred_check_branch
      %13 = sbr.rel (0) target = $region9
    $region8: #{mnist_convnet_forward.3} parent=1 // pred_region
      _
    $region9: #{mnist_convnet_forward.3} parent=1 // pred_fallthru
      _
    // Predicated region
    $region10: #{mnist_convnet_forward.3} parent=1 // pred_check
      _
    $region11: #{mnist_convnet_forward.3} parent=1 // pred_check_branch
      %15 = sbr.rel (0) target = $region13
    $region12: #{mnist_convnet_forward.3} parent=1 // pred_region
      %17 = vsyncadd [#allocation3], 0
      %s18 = sshll.u32 %s2, 4
      %s19 = int_to_ptr.hbm [resolvable:$true] %s18
      %s20 = sshll.u32 [#allocation2], 4
      %s21 = int_to_ptr.vmem [resolvable:$true] %s20
      %26 = dma.hbm_to_vmem [thread:$0]  %s19, 2560, %s21, [#allocation3], 128, 128, 8
    $region13: #{mnist_convnet_forward.3} parent=1 // pred_fallthru
      _
    // Predicated region
    $region14: #{mnist_convnet_forward.3} parent=1 // pred_check
      _
    $region15: #{mnist_convnet_forward.3} parent=1 // pred_check_branch
      %28 = sbr.rel (0) target = $region17
    $region16: #{mnist_convnet_forward.3} parent=1 // pred_region
      _
    $region17: #{mnist_convnet_forward.3} parent=1 // pred_fallthru
      _
    // Predicated region
    $region18: #{mnist_convnet_forward.3} parent=1 // pred_check
      _
    $region19: #{mnist_convnet_forward.3} parent=1 // pred_check_branch
      %30 = sbr.rel (0) target = $region21
    $region20: #{mnist_convnet_forward.3} parent=1 // pred_region
      %32 = dma.done [#allocation3], 2560
    $region21: #{mnist_convnet_forward.3} parent=1 // pred_fallthru
      _
    %v33 = vlaneseq
    %v34 = vshrl.u32 %v33, 7
    %v35 = vadd.s32 %v34, 8
    %v36 = vlaneseq
    %v37 = vand.u32 %v36, 127
    %v38 = vmul.u32 %v34, 2
    %v39 = vmul.u32 %v35, 2
    %vm40 = vcmp.eq.s32.totalorder %v37, %v38
    %vm41 = vcmp.eq.s32.totalorder %v37, %v39
    %v42 = vsel %vm40, 1.0, 0.0
    %v43 = vsel %vm41, 1.0, 0.0
    %v44 = vadd.s32 %v38, 1
    %v45 = vadd.s32 %v39, 1
    %vm46 = vcmp.eq.s32.totalorder %v37, %v44
    %vm47 = vcmp.eq.s32.totalorder %v37, %v45
    %v48 = vsel %vm46, 1.0, 0.0
    %v49 = vsel %vm47, 1.0, 0.0
    %v50 = vld [vmem:[%s3] sm:$0x1]
    %v51 = vld [vmem:[%s0] sm:$0xff]
    %v52 = vld [vmem:[%s0 + $0x8] sm:$0xff]
    %v53 = vld [vmem:[%s0 + $0x10] sm:$0xff]
    %v54 = vld [vmem:[%s1] sm:$0xff]
    %v55 = vld [vmem:[%s1 + $0x8] sm:$0xff]
    %v56 = vld [vmem:[%s1 + $0x10] sm:$0xff]
    %v57 = vld [vmem:[%s1 + $0x18] sm:$0xf]
    %v58 = vld [vmem:[#allocation2] sm:$0xff]
    %v59 = vld [vmem:[#allocation2 + $0x8] sm:$0xff]
    %v60 = vld [vmem:[#allocation2 + $0x10] sm:$0xff]
    %v61 = vld [vmem:[#allocation2 + $0x18] sm:$0xf]
    %v62 = vld [vmem:[%s0 + $0x1] sm:$0xff]
    %v63 = vld [vmem:[%s0 + $0x9] sm:$0xff]
    %v64 = vld [vmem:[%s0 + $0x11] sm:$0xff]
    %s65 = scalar_lea.vmem %s1, 32
    %v66 = vld [vmem:[%s65] sm:$0xff]
    %v67 = vld [vmem:[%s65 + $0x8] sm:$0xff]
    %v68 = vld [vmem:[%s65 + $0x10] sm:$0xff]
    %v69 = vld [vmem:[%s65 + $0x18] sm:$0xf]
    %vm70 = vcmask 228352
    %v72 = vsel %vm70, %v62, 0
    %v75 = vsel %vm70, %v63, 0
    %v78 = vsel %vm70, %v64, 0
    %vm80 = vcmask 1043456
    %v82 = vsel %vm80, %v69, 0
    %84 = vmatpush.msra.mxu0 0.0
    %85 = vmatpush.msra.mxu0 0.0
    %86 = vmatpush.msra.mxu0 0.0
    %87 = vmatpush.msra.mxu0 0.0
    %88 = vmatpush.msra.mxu0 0.0
    %89 = vmatpush.msra.mxu0 0.0
    %90 = vmatpush.msra.mxu0 0.0
    %91 = vmatpush.msra.mxu0 0.0
    %92 = vmatpush.msra.mxu0 0.0
    %93 = vmatpush.msra.mxu0 0.0
    %94 = vmatpush.msra.mxu0 0.0
    %95 = vmatpush.msra.mxu0 0.0
    %96 = vmatpush.msra.mxu0 %v82
    %97 = vmatpush.msra.mxu0 %v68
    %98 = vmatpush.msra.mxu0 %v67
    %99 = vmatpush.msra.mxu0 %v66
    %100 = vmatmul.f32.gmra.mxu0 %v72
    %v101 = vpop.f32.mrf.mxu0
    %v102 = vadd.f32 0.0, %v101
    %103 = vmatmul.f32.gmra.mxu0 %v75
    %v104 = vpop.f32.mrf.mxu0
    %v105 = vadd.f32 0.0, %v104
    %106 = vmatmul.f32.gmra.mxu0 %v78
    %v107 = vpop.f32.mrf.mxu0
    %v108 = vadd.f32 0.0, %v107
    %109 = vdwg.mxu0
    %v111 = vsel %vm70, %v51, 0
    %v114 = vsel %vm70, %v52, 0
    %v117 = vsel %vm70, %v53, 0
    %v120 = vsel %vm80, %v57, 0
    %122 = vmatpush.msra.mxu0 0.0
    %123 = vmatpush.msra.mxu0 0.0
    %124 = vmatpush.msra.mxu0 0.0
    %125 = vmatpush.msra.mxu0 0.0
    %126 = vmatpush.msra.mxu0 0.0
    %127 = vmatpush.msra.mxu0 0.0
    %128 = vmatpush.msra.mxu0 0.0
    %129 = vmatpush.msra.mxu0 0.0
    %130 = vmatpush.msra.mxu0 0.0
    %131 = vmatpush.msra.mxu0 0.0
    %132 = vmatpush.msra.mxu0 0.0
    %133 = vmatpush.msra.mxu0 0.0
    %134 = vmatpush.msra.mxu0 %v120
    %135 = vmatpush.msra.mxu0 %v56
    %136 = vmatpush.msra.mxu0 %v55
    %137 = vmatpush.msra.mxu0 %v54
    %138 = vmatmul.f32.gmra.mxu0 %v111
    %v139 = vpop.f32.mrf.mxu0
    %v140 = vadd.f32 %v102, %v139
    %141 = vmatmul.f32.gmra.mxu0 %v114
    %v142 = vpop.f32.mrf.mxu0
    %v143 = vadd.f32 %v105, %v142
    %144 = vmatmul.f32.gmra.mxu0 %v117
    %v145 = vpop.f32.mrf.mxu0
    %v146 = vadd.f32 %v108, %v145
    %147 = vdwg.mxu0
    %s148 = scalar_lea.vmem [#allocation2], 32
    %v149 = vld [vmem:[%s148] sm:$0xff]
    %v150 = vld [vmem:[%s148 + $0x8] sm:$0xff]
    %v151 = vld [vmem:[%s148 + $0x10] sm:$0xff]
    %v152 = vld [vmem:[%s148 + $0x18] sm:$0xf]
    %v154 = vsel %vm80, %v152, 0
    %156 = vmatpush.msra.mxu0 0.0
    %157 = vmatpush.msra.mxu0 0.0
    %158 = vmatpush.msra.mxu0 0.0
    %159 = vmatpush.msra.mxu0 0.0
    %160 = vmatpush.msra.mxu0 0.0
    %161 = vmatpush.msra.mxu0 0.0
    %162 = vmatpush.msra.mxu0 0.0
    %163 = vmatpush.msra.mxu0 0.0
    %164 = vmatpush.msra.mxu0 0.0
    %165 = vmatpush.msra.mxu0 0.0
    %166 = vmatpush.msra.mxu0 0.0
    %167 = vmatpush.msra.mxu0 0.0
    %168 = vmatpush.msra.mxu0 %v154
    %169 = vmatpush.msra.mxu0 %v151
    %170 = vmatpush.msra.mxu0 %v150
    %171 = vmatpush.msra.mxu0 %v149
    %172 = vmatmul.f32.gmra.mxu0 %v72
    %v173 = vpop.f32.mrf.mxu0
    %v174 = vadd.f32 0.0, %v173
    %175 = vmatmul.f32.gmra.mxu0 %v75
    %v176 = vpop.f32.mrf.mxu0
    %v177 = vadd.f32 0.0, %v176
    %178 = vmatmul.f32.gmra.mxu0 %v78
    %v179 = vpop.f32.mrf.mxu0
    %v180 = vadd.f32 0.0, %v179
    %181 = vdwg.mxu0
    %v183 = vsel %vm80, %v61, 0
    %185 = vmatpush.msra.mxu0 0.0
    %186 = vmatpush.msra.mxu0 0.0
    %187 = vmatpush.msra.mxu0 0.0
    %188 = vmatpush.msra.mxu0 0.0
    %189 = vmatpush.msra.mxu0 0.0
    %190 = vmatpush.msra.mxu0 0.0
    %191 = vmatpush.msra.mxu0 0.0
    %192 = vmatpush.msra.mxu0 0.0
    %193 = vmatpush.msra.mxu0 0.0
    %194 = vmatpush.msra.mxu0 0.0
    %195 = vmatpush.msra.mxu0 0.0
    %196 = vmatpush.msra.mxu0 0.0
    %197 = vmatpush.msra.mxu0 %v183
    %198 = vmatpush.msra.mxu0 %v60
    %199 = vmatpush.msra.mxu0 %v59
    %200 = vmatpush.msra.mxu0 %v58
    %201 = vmatmul.f32.gmra.mxu0 %v111
    %v202 = vpop.f32.mrf.mxu0
    %v203 = vadd.f32 %v174, %v202
    %204 = vmatmul.f32.gmra.mxu0 %v114
    %v205 = vpop.f32.mrf.mxu0
    %v206 = vadd.f32 %v177, %v205
    %207 = vmatmul.f32.gmra.mxu0 %v117
    %v208 = vpop.f32.mrf.mxu0
    %v209 = vadd.f32 %v180, %v208
    %210 = vdwg.mxu0
    %v211 = vld [vmem:[%s0 + $0x2] sm:$0xff]
    %v212 = vld [vmem:[%s0 + $0xa] sm:$0xff]
    %v213 = vld [vmem:[%s0 + $0x12] sm:$0xff]
    %s214 = scalar_lea.vmem %s1, 64
    %v215 = vld [vmem:[%s214] sm:$0xff]
    %v216 = vld [vmem:[%s214 + $0x8] sm:$0xff]
    %v217 = vld [vmem:[%s214 + $0x10] sm:$0xff]
    %v218 = vld [vmem:[%s214 + $0x18] sm:$0xf]
    %v220 = vsel %vm70, %v211, 0
    %v223 = vsel %vm70, %v212, 0
    %v226 = vsel %vm70, %v213, 0
    %v229 = vsel %vm80, %v218, 0
    %231 = vmatpush.msra.mxu0 0.0
    %232 = vmatpush.msra.mxu0 0.0
    %233 = vmatpush.msra.mxu0 0.0
    %234 = vmatpush.msra.mxu0 0.0
    %235 = vmatpush.msra.mxu0 0.0
    %236 = vmatpush.msra.mxu0 0.0
    %237 = vmatpush.msra.mxu0 0.0
    %238 = vmatpush.msra.mxu0 0.0
    %239 = vmatpush.msra.mxu0 0.0
    %240 = vmatpush.msra.mxu0 0.0
    %241 = vmatpush.msra.mxu0 0.0
    %242 = vmatpush.msra.mxu0 0.0
    %243 = vmatpush.msra.mxu0 %v229
    %244 = vmatpush.msra.mxu0 %v217
    %245 = vmatpush.msra.mxu0 %v216
    %246 = vmatpush.msra.mxu0 %v215
    %247 = vmatmul.f32.gmra.mxu0 %v220
    %v248 = vpop.f32.mrf.mxu0
    %v249 = vadd.f32 0.0, %v248
    %250 = vmatmul.f32.gmra.mxu0 %v223
    %v251 = vpop.f32.mrf.mxu0
    %v252 = vadd.f32 0.0, %v251
    %253 = vmatmul.f32.gmra.mxu0 %v226
    %v254 = vpop.f32.mrf.mxu0
    %v255 = vadd.f32 0.0, %v254
    %256 = vdwg.mxu0
    %v257 = vadd.f32 %v140, %v249
    %v258 = vadd.f32 %v143, %v252
    %v259 = vadd.f32 %v146, %v255
    %s260 = scalar_lea.vmem [#allocation2], 64
    %v261 = vld [vmem:[%s260] sm:$0xff]
    %v262 = vld [vmem:[%s260 + $0x8] sm:$0xff]
    %v263 = vld [vmem:[%s260 + $0x10] sm:$0xff]
    %v264 = vld [vmem:[%s260 + $0x18] sm:$0xf]
    %v266 = vsel %vm80, %v264, 0
    %268 = vmatpush.msra.mxu0 0.0
    %269 = vmatpush.msra.mxu0 0.0
    %270 = vmatpush.msra.mxu0 0.0
    %271 = vmatpush.msra.mxu0 0.0
    %272 = vmatpush.msra.mxu0 0.0
    %273 = vmatpush.msra.mxu0 0.0
    %274 = vmatpush.msra.mxu0 0.0
    %275 = vmatpush.msra.mxu0 0.0
    %276 = vmatpush.msra.mxu0 0.0
    %277 = vmatpush.msra.mxu0 0.0
    %278 = vmatpush.msra.mxu0 0.0
    %279 = vmatpush.msra.mxu0 0.0
    %280 = vmatpush.msra.mxu0 %v266
    %281 = vmatpush.msra.mxu0 %v263
    %282 = vmatpush.msra.mxu0 %v262
    %283 = vmatpush.msra.mxu0 %v261
    %284 = vmatmul.f32.gmra.mxu0 %v220
    %v285 = vpop.f32.mrf.mxu0
    %v286 = vadd.f32 0.0, %v285
    %287 = vmatmul.f32.gmra.mxu0 %v223
    %v288 = vpop.f32.mrf.mxu0
    %v289 = vadd.f32 0.0, %v288
    %290 = vmatmul.f32.gmra.mxu0 %v226
    %v291 = vpop.f32.mrf.mxu0
    %v292 = vadd.f32 0.0, %v291
    %293 = vdwg.mxu0
    %v294 = vadd.f32 %v203, %v286
    %v295 = vadd.f32 %v206, %v289
    %v296 = vadd.f32 %v209, %v292
    %v297 = vld [vmem:[%s0 + $0x3] sm:$0xff]
    %v298 = vld [vmem:[%s0 + $0xb] sm:$0xff]
    %v299 = vld [vmem:[%s0 + $0x13] sm:$0xff]
    %s300 = scalar_lea.vmem %s1, 96
    %v301 = vld [vmem:[%s300] sm:$0xff]
    %v302 = vld [vmem:[%s300 + $0x8] sm:$0xff]
    %v303 = vld [vmem:[%s300 + $0x10] sm:$0xff]
    %v304 = vld [vmem:[%s300 + $0x18] sm:$0xf]
    %v306 = vsel %vm70, %v297, 0
    %v309 = vsel %vm70, %v298, 0
    %v312 = vsel %vm70, %v299, 0
    %v315 = vsel %vm80, %v304, 0
    %317 = vmatpush.msra.mxu0 0.0
    %318 = vmatpush.msra.mxu0 0.0
    %319 = vmatpush.msra.mxu0 0.0
    %320 = vmatpush.msra.mxu0 0.0
    %321 = vmatpush.msra.mxu0 0.0
    %322 = vmatpush.msra.mxu0 0.0
    %323 = vmatpush.msra.mxu0 0.0
    %324 = vmatpush.msra.mxu0 0.0
    %325 = vmatpush.msra.mxu0 0.0
    %326 = vmatpush.msra.mxu0 0.0
    %327 = vmatpush.msra.mxu0 0.0
    %328 = vmatpush.msra.mxu0 0.0
    %329 = vmatpush.msra.mxu0 %v315
    %330 = vmatpush.msra.mxu0 %v303
    %331 = vmatpush.msra.mxu0 %v302
    %332 = vmatpush.msra.mxu0 %v301
    %333 = vmatmul.f32.gmra.mxu0 %v306
    %v334 = vpop.f32.mrf.mxu0
    %v335 = vadd.f32 0.0, %v334
    %336 = vmatmul.f32.gmra.mxu0 %v309
    %v337 = vpop.f32.mrf.mxu0
    %v338 = vadd.f32 0.0, %v337
    %339 = vmatmul.f32.gmra.mxu0 %v312
    %v340 = vpop.f32.mrf.mxu0
    %v341 = vadd.f32 0.0, %v340
    %342 = vdwg.mxu0
    %v343 = vadd.f32 %v257, %v335
    %v344 = vadd.f32 %v258, %v338
    %v345 = vadd.f32 %v259, %v341
    %s346 = scalar_lea.vmem [#allocation2], 96
    %v347 = vld [vmem:[%s346] sm:$0xff]
    %v348 = vld [vmem:[%s346 + $0x8] sm:$0xff]
    %v349 = vld [vmem:[%s346 + $0x10] sm:$0xff]
    %v350 = vld [vmem:[%s346 + $0x18] sm:$0xf]
    %v352 = vsel %vm80, %v350, 0
    %354 = vmatpush.msra.mxu0 0.0
    %355 = vmatpush.msra.mxu0 0.0
    %356 = vmatpush.msra.mxu0 0.0
    %357 = vmatpush.msra.mxu0 0.0
    %358 = vmatpush.msra.mxu0 0.0
    %359 = vmatpush.msra.mxu0 0.0
    %360 = vmatpush.msra.mxu0 0.0
    %361 = vmatpush.msra.mxu0 0.0
    %362 = vmatpush.msra.mxu0 0.0
    %363 = vmatpush.msra.mxu0 0.0
    %364 = vmatpush.msra.mxu0 0.0
    %365 = vmatpush.msra.mxu0 0.0
    %366 = vmatpush.msra.mxu0 %v352
    %367 = vmatpush.msra.mxu0 %v349
    %368 = vmatpush.msra.mxu0 %v348
    %369 = vmatpush.msra.mxu0 %v347
    %370 = vmatmul.f32.gmra.mxu0 %v306
    %v371 = vpop.f32.mrf.mxu0
    %v372 = vadd.f32 0.0, %v371
    %373 = vmatmul.f32.gmra.mxu0 %v309
    %v374 = vpop.f32.mrf.mxu0
    %v375 = vadd.f32 0.0, %v374
    %376 = vmatmul.f32.gmra.mxu0 %v312
    %v377 = vpop.f32.mrf.mxu0
    %v378 = vadd.f32 0.0, %v377
    %379 = vdwg.mxu0
    %v380 = vadd.f32 %v294, %v372
    %v381 = vadd.f32 %v295, %v375
    %v382 = vadd.f32 %v296, %v378
    %v383 = vld [vmem:[%s0 + $0x4] sm:$0xff]
    %v384 = vld [vmem:[%s0 + $0xc] sm:$0xff]
    %v385 = vld [vmem:[%s0 + $0x14] sm:$0xff]
    %s386 = scalar_lea.vmem %s1, 128
    %v387 = vld [vmem:[%s386] sm:$0xff]
    %v388 = vld [vmem:[%s386 + $0x8] sm:$0xff]
    %v389 = vld [vmem:[%s386 + $0x10] sm:$0xff]
    %v390 = vld [vmem:[%s386 + $0x18] sm:$0xf]
    %v392 = vsel %vm70, %v383, 0
    %v395 = vsel %vm70, %v384, 0
    %v398 = vsel %vm70, %v385, 0
    %v401 = vsel %vm80, %v390, 0
    %403 = vmatpush.msra.mxu0 0.0
    %404 = vmatpush.msra.mxu0 0.0
    %405 = vmatpush.msra.mxu0 0.0
    %406 = vmatpush.msra.mxu0 0.0
    %407 = vmatpush.msra.mxu0 0.0
    %408 = vmatpush.msra.mxu0 0.0
    %409 = vmatpush.msra.mxu0 0.0
    %410 = vmatpush.msra.mxu0 0.0
    %411 = vmatpush.msra.mxu0 0.0
    %412 = vmatpush.msra.mxu0 0.0
    %413 = vmatpush.msra.mxu0 0.0
    %414 = vmatpush.msra.mxu0 0.0
    %415 = vmatpush.msra.mxu0 %v401
    %416 = vmatpush.msra.mxu0 %v389
    %417 = vmatpush.msra.mxu0 %v388
    %418 = vmatpush.msra.mxu0 %v387
    %419 = vmatmul.f32.gmra.mxu0 %v392
    %v420 = vpop.f32.mrf.mxu0
    %v421 = vadd.f32 0.0, %v420
    %422 = vmatmul.f32.gmra.mxu0 %v395
    %v423 = vpop.f32.mrf.mxu0
    %v424 = vadd.f32 0.0, %v423
    %425 = vmatmul.f32.gmra.mxu0 %v398
    %v426 = vpop.f32.mrf.mxu0
    %v427 = vadd.f32 0.0, %v426
    %428 = vdwg.mxu0
    %v429 = vadd.f32 %v343, %v421
    %v430 = vadd.f32 %v344, %v424
    %v431 = vadd.f32 %v345, %v427
    %s432 = scalar_lea.vmem [#allocation2], 128
    %v433 = vld [vmem:[%s432] sm:$0xff]
    %v434 = vld [vmem:[%s432 + $0x8] sm:$0xff]
    %v435 = vld [vmem:[%s432 + $0x10] sm:$0xff]
    %v436 = vld [vmem:[%s432 + $0x18] sm:$0xf]
    %v438 = vsel %vm80, %v436, 0
    %440 = vmatpush.msra.mxu0 0.0
    %441 = vmatpush.msra.mxu0 0.0
    %442 = vmatpush.msra.mxu0 0.0
    %443 = vmatpush.msra.mxu0 0.0
    %444 = vmatpush.msra.mxu0 0.0
    %445 = vmatpush.msra.mxu0 0.0
    %446 = vmatpush.msra.mxu0 0.0
    %447 = vmatpush.msra.mxu0 0.0
    %448 = vmatpush.msra.mxu0 0.0
    %449 = vmatpush.msra.mxu0 0.0
    %450 = vmatpush.msra.mxu0 0.0
    %451 = vmatpush.msra.mxu0 0.0
    %452 = vmatpush.msra.mxu0 %v438
    %453 = vmatpush.msra.mxu0 %v435
    %454 = vmatpush.msra.mxu0 %v434
    %455 = vmatpush.msra.mxu0 %v433
    %456 = vmatmul.f32.gmra.mxu0 %v392
    %v457 = vpop.f32.mrf.mxu0
    %v458 = vadd.f32 0.0, %v457
    %459 = vmatmul.f32.gmra.mxu0 %v395
    %v460 = vpop.f32.mrf.mxu0
    %v461 = vadd.f32 0.0, %v460
    %462 = vmatmul.f32.gmra.mxu0 %v398
    %v463 = vpop.f32.mrf.mxu0
    %v464 = vadd.f32 0.0, %v463
    %465 = vdwg.mxu0
    %v466 = vadd.f32 %v380, %v458
    %v467 = vadd.f32 %v381, %v461
    %v468 = vadd.f32 %v382, %v464
    %v469 = vmax.f32 %v429, %v466
    %v470 = vmax.f32 %v430, %v467
    %v471 = vmax.f32 %v431, %v468
    %vm472 = vcmask 195584
    %v474 = vsel %vm472, %v42, 0
    %v477 = vsel %vm472, %v43, 0
    %479 = vmatpush.msra.mxu0 0.0
    %480 = vmatpush.msra.mxu0 0.0
    %481 = vmatpush.msra.mxu0 0.0
    %482 = vmatpush.msra.mxu0 0.0
    %483 = vmatpush.msra.mxu0 0.0
    %484 = vmatpush.msra.mxu0 0.0
    %485 = vmatpush.msra.mxu0 0.0
    %486 = vmatpush.msra.mxu0 0.0
    %487 = vmatpush.msra.mxu0 0.0
    %488 = vmatpush.msra.mxu0 0.0
    %489 = vmatpush.msra.mxu0 0.0
    %490 = vmatpush.msra.mxu0 0.0
    %491 = vmatpush.msra.mxu0 0.0
    %492 = vmatpush.msra.mxu0 %v471
    %493 = vmatpush.msra.mxu0 %v470
    %494 = vmatpush.msra.mxu0 %v469
    %495 = vmatmul.f32.gmra.mxu0 %v474
    %v496 = vpop.f32.mrf.mxu0
    %v497 = vadd.f32 0.0, %v496
    %498 = vmatmul.f32.gmra.mxu0 %v477
    %v499 = vpop.f32.mrf.mxu0
    %v500 = vadd.f32 0.0, %v499
    %501 = vdwg.mxu0
    %v503 = vsel %vm472, %v48, 0
    %v506 = vsel %vm472, %v49, 0
    %508 = vmatpush.msra.mxu0 0.0
    %509 = vmatpush.msra.mxu0 0.0
    %510 = vmatpush.msra.mxu0 0.0
    %511 = vmatpush.msra.mxu0 0.0
    %512 = vmatpush.msra.mxu0 0.0
    %513 = vmatpush.msra.mxu0 0.0
    %514 = vmatpush.msra.mxu0 0.0
    %515 = vmatpush.msra.mxu0 0.0
    %516 = vmatpush.msra.mxu0 0.0
    %517 = vmatpush.msra.mxu0 0.0
    %518 = vmatpush.msra.mxu0 0.0
    %519 = vmatpush.msra.mxu0 0.0
    %520 = vmatpush.msra.mxu0 0.0
    %521 = vmatpush.msra.mxu0 %v471
    %522 = vmatpush.msra.mxu0 %v470
    %523 = vmatpush.msra.mxu0 %v469
    %524 = vmatmul.f32.gmra.mxu0 %v503
    %v525 = vpop.f32.mrf.mxu0
    %v526 = vadd.f32 0.0, %v525
    %527 = vmatmul.f32.gmra.mxu0 %v506
    %v528 = vpop.f32.mrf.mxu0
    %v529 = vadd.f32 0.0, %v528
    %530 = vdwg.mxu0
    %v531 = vmax.f32 %v497, %v526
    %v532 = vmax.f32 %v500, %v529
    %v534 = vperm.slane %v50, 0
    %v536 = vadd.f32 %v531, %v534
    %v537 = vadd.f32 %v532, %v534
    %v538 = vmax.f32 %v536, 0.0
    %v539 = vmax.f32 %v537, 0.0
    %vm540 = vcmask 982016
    %541 = vst.msk [vmem:[%s4] sm:$0xff] %vm540, %v538
    %vm542 = vcmask 977920
    %543 = vst.msk [vmem:[%s4 + $0x8] sm:$0xf] %vm542, %v539
    %s544 = scalar_lea.vmem %s0, 32
    %v545 = vld [vmem:[%s544] sm:$0xff]
    %v546 = vld [vmem:[%s544 + $0x8] sm:$0xff]
    %v547 = vld [vmem:[%s544 + $0x10] sm:$0xff]
    %v548 = vld [vmem:[%s1] sm:$0xff]
    %v549 = vld [vmem:[%s1 + $0x8] sm:$0xff]
    %v550 = vld [vmem:[%s1 + $0x10] sm:$0xff]
    %v551 = vld [vmem:[%s1 + $0x18] sm:$0xf]
    %v552 = vld [vmem:[#allocation2] sm:$0xff]
    %v553 = vld [vmem:[#allocation2 + $0x8] sm:$0xff]
    %v554 = vld [vmem:[#allocation2 + $0x10] sm:$0xff]
    %v555 = vld [vmem:[#allocation2 + $0x18] sm:$0xf]
    %v556 = vld [vmem:[%s544 + $0x1] sm:$0xff]
    %v557 = vld [vmem:[%s544 + $0x9] sm:$0xff]
    %v558 = vld [vmem:[%s544 + $0x11] sm:$0xff]
    %v559 = vld [vmem:[%s65] sm:$0xff]
    %v560 = vld [vmem:[%s65 + $0x8] sm:$0xff]
    %v561 = vld [vmem:[%s65 + $0x10] sm:$0xff]
    %v562 = vld [vmem:[%s65 + $0x18] sm:$0xf]
    %v564 = vsel %vm70, %v556, 0
    %v567 = vsel %vm70, %v557, 0
    %v570 = vsel %vm70, %v558, 0
    %v573 = vsel %vm80, %v562, 0
    %575 = vmatpush.msra.mxu0 0.0
    %576 = vmatpush.msra.mxu0 0.0
    %577 = vmatpush.msra.mxu0 0.0
    %578 = vmatpush.msra.mxu0 0.0
    %579 = vmatpush.msra.mxu0 0.0
    %580 = vmatpush.msra.mxu0 0.0
    %581 = vmatpush.msra.mxu0 0.0
    %582 = vmatpush.msra.mxu0 0.0
    %583 = vmatpush.msra.mxu0 0.0
    %584 = vmatpush.msra.mxu0 0.0
    %585 = vmatpush.msra.mxu0 0.0
    %586 = vmatpush.msra.mxu0 0.0
    %587 = vmatpush.msra.mxu0 %v573
    %588 = vmatpush.msra.mxu0 %v561
    %589 = vmatpush.msra.mxu0 %v560
    %590 = vmatpush.msra.mxu0 %v559
    %591 = vmatmul.f32.gmra.mxu0 %v564
    %v592 = vpop.f32.mrf.mxu0
    %v593 = vadd.f32 0.0, %v592
    %594 = vmatmul.f32.gmra.mxu0 %v567
    %v595 = vpop.f32.mrf.mxu0
    %v596 = vadd.f32 0.0, %v595
    %597 = vmatmul.f32.gmra.mxu0 %v570
    %v598 = vpop.f32.mrf.mxu0
    %v599 = vadd.f32 0.0, %v598
    %600 = vdwg.mxu0
    %v602 = vsel %vm70, %v545, 0
    %v605 = vsel %vm70, %v546, 0
    %v608 = vsel %vm70, %v547, 0
    %v611 = vsel %vm80, %v551, 0
    %613 = vmatpush.msra.mxu0 0.0
    %614 = vmatpush.msra.mxu0 0.0
    %615 = vmatpush.msra.mxu0 0.0
    %616 = vmatpush.msra.mxu0 0.0
    %617 = vmatpush.msra.mxu0 0.0
    %618 = vmatpush.msra.mxu0 0.0
    %619 = vmatpush.msra.mxu0 0.0
    %620 = vmatpush.msra.mxu0 0.0
    %621 = vmatpush.msra.mxu0 0.0
    %622 = vmatpush.msra.mxu0 0.0
    %623 = vmatpush.msra.mxu0 0.0
    %624 = vmatpush.msra.mxu0 0.0
    %625 = vmatpush.msra.mxu0 %v611
    %626 = vmatpush.msra.mxu0 %v550
    %627 = vmatpush.msra.mxu0 %v549
    %628 = vmatpush.msra.mxu0 %v548
    %629 = vmatmul.f32.gmra.mxu0 %v602
    %v630 = vpop.f32.mrf.mxu0
    %v631 = vadd.f32 %v593, %v630
    %632 = vmatmul.f32.gmra.mxu0 %v605
    %v633 = vpop.f32.mrf.mxu0
    %v634 = vadd.f32 %v596, %v633
    %635 = vmatmul.f32.gmra.mxu0 %v608
    %v636 = vpop.f32.mrf.mxu0
    %v637 = vadd.f32 %v599, %v636
    %638 = vdwg.mxu0
    %v639 = vld [vmem:[%s148] sm:$0xff]
    %v640 = vld [vmem:[%s148 + $0x8] sm:$0xff]
    %v641 = vld [vmem:[%s148 + $0x10] sm:$0xff]
    %v642 = vld [vmem:[%s148 + $0x18] sm:$0xf]
    %v644 = vsel %vm80, %v642, 0
    %646 = vmatpush.msra.mxu0 0.0
    %647 = vmatpush.msra.mxu0 0.0
    %648 = vmatpush.msra.mxu0 0.0
    %649 = vmatpush.msra.mxu0 0.0
    %650 = vmatpush.msra.mxu0 0.0
    %651 = vmatpush.msra.mxu0 0.0
    %652 = vmatpush.msra.mxu0 0.0
    %653 = vmatpush.msra.mxu0 0.0
    %654 = vmatpush.msra.mxu0 0.0
    %655 = vmatpush.msra.mxu0 0.0
    %656 = vmatpush.msra.mxu0 0.0
    %657 = vmatpush.msra.mxu0 0.0
    %658 = vmatpush.msra.mxu0 %v644
    %659 = vmatpush.msra.mxu0 %v641
    %660 = vmatpush.msra.mxu0 %v640
    %661 = vmatpush.msra.mxu0 %v639
    %662 = vmatmul.f32.gmra.mxu0 %v564
    %v663 = vpop.f32.mrf.mxu0
    %v664 = vadd.f32 0.0, %v663
    %665 = vmatmul.f32.gmra.mxu0 %v567
    %v666 = vpop.f32.mrf.mxu0
    %v667 = vadd.f32 0.0, %v666
    %668 = vmatmul.f32.gmra.mxu0 %v570
    %v669 = vpop.f32.mrf.mxu0
    %v670 = vadd.f32 0.0, %v669
    %671 = vdwg.mxu0
    %v673 = vsel %vm80, %v555, 0
    %675 = vmatpush.msra.mxu0 0.0
    %676 = vmatpush.msra.mxu0 0.0
    %677 = vmatpush.msra.mxu0 0.0
    %678 = vmatpush.msra.mxu0 0.0
    %679 = vmatpush.msra.mxu0 0.0
    %680 = vmatpush.msra.mxu0 0.0
    %681 = vmatpush.msra.mxu0 0.0
    %682 = vmatpush.msra.mxu0 0.0
    %683 = vmatpush.msra.mxu0 0.0
    %684 = vmatpush.msra.mxu0 0.0
    %685 = vmatpush.msra.mxu0 0.0
    %686 = vmatpush.msra.mxu0 0.0
    %687 = vmatpush.msra.mxu0 %v673
    %688 = vmatpush.msra.mxu0 %v554
    %689 = vmatpush.msra.mxu0 %v553
    %690 = vmatpush.msra.mxu0 %v552
    %691 = vmatmul.f32.gmra.mxu0 %v602
    %v692 = vpop.f32.mrf.mxu0
    %v693 = vadd.f32 %v664, %v692
    %694 = vmatmul.f32.gmra.mxu0 %v605
    %v695 = vpop.f32.mrf.mxu0
    %v696 = vadd.f32 %v667, %v695
    %697 = vmatmul.f32.gmra.mxu0 %v608
    %v698 = vpop.f32.mrf.mxu0
    %v699 = vadd.f32 %v670, %v698
    %700 = vdwg.mxu0
    %v701 = vld [vmem:[%s544 + $0x2] sm:$0xff]
    %v702 = vld [vmem:[%s544 + $0xa] sm:$0xff]
    %v703 = vld [vmem:[%s544 + $0x12] sm:$0xff]
    %v704 = vld [vmem:[%s214] sm:$0xff]
    %v705 = vld [vmem:[%s214 + $0x8] sm:$0xff]
    %v706 = vld [vmem:[%s214 + $0x10] sm:$0xff]
    %v707 = vld [vmem:[%s214 + $0x18] sm:$0xf]
    %v709 = vsel %vm70, %v701, 0
    %v712 = vsel %vm70, %v702, 0
    %v715 = vsel %vm70, %v703, 0
    %v718 = vsel %vm80, %v707, 0
    %720 = vmatpush.msra.mxu0 0.0
    %721 = vmatpush.msra.mxu0 0.0
    %722 = vmatpush.msra.mxu0 0.0
    %723 = vmatpush.msra.mxu0 0.0
    %724 = vmatpush.msra.mxu0 0.0
    %725 = vmatpush.msra.mxu0 0.0
    %726 = vmatpush.msra.mxu0 0.0
    %727 = vmatpush.msra.mxu0 0.0
    %728 = vmatpush.msra.mxu0 0.0
    %729 = vmatpush.msra.mxu0 0.0
    %730 = vmatpush.msra.mxu0 0.0
    %731 = vmatpush.msra.mxu0 0.0
    %732 = vmatpush.msra.mxu0 %v718
    %733 = vmatpush.msra.mxu0 %v706
    %734 = vmatpush.msra.mxu0 %v705
    %735 = vmatpush.msra.mxu0 %v704
    %736 = vmatmul.f32.gmra.mxu0 %v709
    %v737 = vpop.f32.mrf.mxu0
    %v738 = vadd.f32 0.0, %v737
    %739 = vmatmul.f32.gmra.mxu0 %v712
    %v740 = vpop.f32.mrf.mxu0
    %v741 = vadd.f32 0.0, %v740
    %742 = vmatmul.f32.gmra.mxu0 %v715
    %v743 = vpop.f32.mrf.mxu0
    %v744 = vadd.f32 0.0, %v743
    %745 = vdwg.mxu0
    %v746 = vadd.f32 %v631, %v738
    %v747 = vadd.f32 %v634, %v741
    %v748 = vadd.f32 %v637, %v744
    %v749 = vld [vmem:[%s260] sm:$0xff]
    %v750 = vld [vmem:[%s260 + $0x8] sm:$0xff]
    %v751 = vld [vmem:[%s260 + $0x10] sm:$0xff]
    %v752 = vld [vmem:[%s260 + $0x18] sm:$0xf]
    %v754 = vsel %vm80, %v752, 0
    %756 = vmatpush.msra.mxu0 0.0
    %757 = vmatpush.msra.mxu0 0.0
    %758 = vmatpush.msra.mxu0 0.0
    %759 = vmatpush.msra.mxu0 0.0
    %760 = vmatpush.msra.mxu0 0.0
    %761 = vmatpush.msra.mxu0 0.0
    %762 = vmatpush.msra.mxu0 0.0
    %763 = vmatpush.msra.mxu0 0.0
    %764 = vmatpush.msra.mxu0 0.0
    %765 = vmatpush.msra.mxu0 0.0
    %766 = vmatpush.msra.mxu0 0.0
    %767 = vmatpush.msra.mxu0 0.0
    %768 = vmatpush.msra.mxu0 %v754
    %769 = vmatpush.msra.mxu0 %v751
    %770 = vmatpush.msra.mxu0 %v750
    %771 = vmatpush.msra.mxu0 %v749
    %772 = vmatmul.f32.gmra.mxu0 %v709
    %v773 = vpop.f32.mrf.mxu0
    %v774 = vadd.f32 0.0, %v773
    %775 = vmatmul.f32.gmra.mxu0 %v712
    %v776 = vpop.f32.mrf.mxu0
    %v777 = vadd.f32 0.0, %v776
    %778 = vmatmul.f32.gmra.mxu0 %v715
    %v779 = vpop.f32.mrf.mxu0
    %v780 = vadd.f32 0.0, %v779
    %781 = vdwg.mxu0
    %v782 = vadd.f32 %v693, %v774
    %v783 = vadd.f32 %v696, %v777
    %v784 = vadd.f32 %v699, %v780
    %v785 = vld [vmem:[%s544 + $0x3] sm:$0xff]
    %v786 = vld [vmem:[%s544 + $0xb] sm:$0xff]
    %v787 = vld [vmem:[%s544 + $0x13] sm:$0xff]
    %v788 = vld [vmem:[%s300] sm:$0xff]
    %v789 = vld [vmem:[%s300 + $0x8] sm:$0xff]
    %v790 = vld [vmem:[%s300 + $0x10] sm:$0xff]
    %v791 = vld [vmem:[%s300 + $0x18] sm:$0xf]
    %v793 = vsel %vm70, %v785, 0
    %v796 = vsel %vm70, %v786, 0
    %v799 = vsel %vm70, %v787, 0
    %v802 = vsel %vm80, %v791, 0
    %804 = vmatpush.msra.mxu0 0.0
    %805 = vmatpush.msra.mxu0 0.0
    %806 = vmatpush.msra.mxu0 0.0
    %807 = vmatpush.msra.mxu0 0.0
    %808 = vmatpush.msra.mxu0 0.0
    %809 = vmatpush.msra.mxu0 0.0
    %810 = vmatpush.msra.mxu0 0.0
    %811 = vmatpush.msra.mxu0 0.0
    %812 = vmatpush.msra.mxu0 0.0
    %813 = vmatpush.msra.mxu0 0.0
    %814 = vmatpush.msra.mxu0 0.0
    %815 = vmatpush.msra.mxu0 0.0
    %816 = vmatpush.msra.mxu0 %v802
    %817 = vmatpush.msra.mxu0 %v790
    %818 = vmatpush.msra.mxu0 %v789
    %819 = vmatpush.msra.mxu0 %v788
    %820 = vmatmul.f32.gmra.mxu0 %v793
    %v821 = vpop.f32.mrf.mxu0
    %v822 = vadd.f32 0.0, %v821
    %823 = vmatmul.f32.gmra.mxu0 %v796
    %v824 = vpop.f32.mrf.mxu0
    %v825 = vadd.f32 0.0, %v824
    %826 = vmatmul.f32.gmra.mxu0 %v799
    %v827 = vpop.f32.mrf.mxu0
    %v828 = vadd.f32 0.0, %v827
    %829 = vdwg.mxu0
    %v830 = vadd.f32 %v746, %v822
    %v831 = vadd.f32 %v747, %v825
    %v832 = vadd.f32 %v748, %v828
    %v833 = vld [vmem:[%s346] sm:$0xff]
    %v834 = vld [vmem:[%s346 + $0x8] sm:$0xff]
    %v835 = vld [vmem:[%s346 + $0x10] sm:$0xff]
    %v836 = vld [vmem:[%s346 + $0x18] sm:$0xf]
    %v838 = vsel %vm80, %v836, 0
    %840 = vmatpush.msra.mxu0 0.0
    %841 = vmatpush.msra.mxu0 0.0
    %842 = vmatpush.msra.mxu0 0.0
    %843 = vmatpush.msra.mxu0 0.0
    %844 = vmatpush.msra.mxu0 0.0
    %845 = vmatpush.msra.mxu0 0.0
    %846 = vmatpush.msra.mxu0 0.0
    %847 = vmatpush.msra.mxu0 0.0
    %848 = vmatpush.msra.mxu0 0.0
    %849 = vmatpush.msra.mxu0 0.0
    %850 = vmatpush.msra.mxu0 0.0
    %851 = vmatpush.msra.mxu0 0.0
    %852 = vmatpush.msra.mxu0 %v838
    %853 = vmatpush.msra.mxu0 %v835
    %854 = vmatpush.msra.mxu0 %v834
    %855 = vmatpush.msra.mxu0 %v833
    %856 = vmatmul.f32.gmra.mxu0 %v793
    %v857 = vpop.f32.mrf.mxu0
    %v858 = vadd.f32 0.0, %v857
    %859 = vmatmul.f32.gmra.mxu0 %v796
    %v860 = vpop.f32.mrf.mxu0
    %v861 = vadd.f32 0.0, %v860
    %862 = vmatmul.f32.gmra.mxu0 %v799
    %v863 = vpop.f32.mrf.mxu0
    %v864 = vadd.f32 0.0, %v863
    %865 = vdwg.mxu0
    %v866 = vadd.f32 %v782, %v858
    %v867 = vadd.f32 %v783, %v861
    %v868 = vadd.f32 %v784, %v864
    %v869 = vld [vmem:[%s544 + $0x4] sm:$0xff]
    %v870 = vld [vmem:[%s544 + $0xc] sm:$0xff]
    %v871 = vld [vmem:[%s544 + $0x14] sm:$0xff]
    %v872 = vld [vmem:[%s386] sm:$0xff]
    %v873 = vld [vmem:[%s386 + $0x8] sm:$0xff]
    %v874 = vld [vmem:[%s386 + $0x10] sm:$0xff]
    %v875 = vld [vmem:[%s386 + $0x18] sm:$0xf]
    %v877 = vsel %vm70, %v869, 0
    %v880 = vsel %vm70, %v870, 0
    %v883 = vsel %vm70, %v871, 0
    %v886 = vsel %vm80, %v875, 0
    %888 = vmatpush.msra.mxu0 0.0
    %889 = vmatpush.msra.mxu0 0.0
    %890 = vmatpush.msra.mxu0 0.0
    %891 = vmatpush.msra.mxu0 0.0
    %892 = vmatpush.msra.mxu0 0.0
    %893 = vmatpush.msra.mxu0 0.0
    %894 = vmatpush.msra.mxu0 0.0
    %895 = vmatpush.msra.mxu0 0.0
    %896 = vmatpush.msra.mxu0 0.0
    %897 = vmatpush.msra.mxu0 0.0
    %898 = vmatpush.msra.mxu0 0.0
    %899 = vmatpush.msra.mxu0 0.0
    %900 = vmatpush.msra.mxu0 %v886
    %901 = vmatpush.msra.mxu0 %v874
    %902 = vmatpush.msra.mxu0 %v873
    %903 = vmatpush.msra.mxu0 %v872
    %904 = vmatmul.f32.gmra.mxu0 %v877
    %v905 = vpop.f32.mrf.mxu0
    %v906 = vadd.f32 0.0, %v905
    %907 = vmatmul.f32.gmra.mxu0 %v880
    %v908 = vpop.f32.mrf.mxu0
    %v909 = vadd.f32 0.0, %v908
    %910 = vmatmul.f32.gmra.mxu0 %v883
    %v911 = vpop.f32.mrf.mxu0
    %v912 = vadd.f32 0.0, %v911
    %913 = vdwg.mxu0
    %v914 = vadd.f32 %v830, %v906
    %v915 = vadd.f32 %v831, %v909
    %v916 = vadd.f32 %v832, %v912
    %v917 = vld [vmem:[%s432] sm:$0xff]
    %v918 = vld [vmem:[%s432 + $0x8] sm:$0xff]
    %v919 = vld [vmem:[%s432 + $0x10] sm:$0xff]
    %v920 = vld [vmem:[%s432 + $0x18] sm:$0xf]
    %v922 = vsel %vm80, %v920, 0
    %924 = vmatpush.msra.mxu0 0.0
    %925 = vmatpush.msra.mxu0 0.0
    %926 = vmatpush.msra.mxu0 0.0
    %927 = vmatpush.msra.mxu0 0.0
    %928 = vmatpush.msra.mxu0 0.0
    %929 = vmatpush.msra.mxu0 0.0
    %930 = vmatpush.msra.mxu0 0.0
    %931 = vmatpush.msra.mxu0 0.0
    %932 = vmatpush.msra.mxu0 0.0
    %933 = vmatpush.msra.mxu0 0.0
    %934 = vmatpush.msra.mxu0 0.0
    %935 = vmatpush.msra.mxu0 0.0
    %936 = vmatpush.msra.mxu0 %v922
    %937 = vmatpush.msra.mxu0 %v919
    %938 = vmatpush.msra.mxu0 %v918
    %939 = vmatpush.msra.mxu0 %v917
    %940 = vmatmul.f32.gmra.mxu0 %v877
    %v941 = vpop.f32.mrf.mxu0
    %v942 = vadd.f32 0.0, %v941
    %943 = vmatmul.f32.gmra.mxu0 %v880
    %v944 = vpop.f32.mrf.mxu0
    %v945 = vadd.f32 0.0, %v944
    %946 = vmatmul.f32.gmra.mxu0 %v883
    %v947 = vpop.f32.mrf.mxu0
    %v948 = vadd.f32 0.0, %v947
    %949 = vdwg.mxu0
    %v950 = vadd.f32 %v866, %v942
    %v951 = vadd.f32 %v867, %v945
    %v952 = vadd.f32 %v868, %v948
    %v953 = vmax.f32 %v914, %v950
    %v954 = vmax.f32 %v915, %v951
    %v955 = vmax.f32 %v916, %v952
    %956 = vmatpush.msra.mxu0 0.0
    %957 = vmatpush.msra.mxu0 0.0
    %958 = vmatpush.msra.mxu0 0.0
    %959 = vmatpush.msra.mxu0 0.0
    %960 = vmatpush.msra.mxu0 0.0
    %961 = vmatpush.msra.mxu0 0.0
    %962 = vmatpush.msra.mxu0 0.0
    %963 = vmatpush.msra.mxu0 0.0
    %964 = vmatpush.msra.mxu0 0.0
    %965 = vmatpush.msra.mxu0 0.0
    %966 = vmatpush.msra.mxu0 0.0
    %967 = vmatpush.msra.mxu0 0.0
    %968 = vmatpush.msra.mxu0 0.0
    %969 = vmatpush.msra.mxu0 %v955
    %970 = vmatpush.msra.mxu0 %v954
    %971 = vmatpush.msra.mxu0 %v953
    %972 = vmatmul.f32.gmra.mxu0 %v474
    %v973 = vpop.f32.mrf.mxu0
    %v974 = vadd.f32 0.0, %v973
    %975 = vmatmul.f32.gmra.mxu0 %v477
    %v976 = vpop.f32.mrf.mxu0
    %v977 = vadd.f32 0.0, %v976
    %978 = vdwg.mxu0
    %979 = vmatpush.msra.mxu0 0.0
    %980 = vmatpush.msra.mxu0 0.0
    %981 = vmatpush.msra.mxu0 0.0
    %982 = vmatpush.msra.mxu0 0.0
    %983 = vmatpush.msra.mxu0 0.0
    %984 = vmatpush.msra.mxu0 0.0
    %985 = vmatpush.msra.mxu0 0.0
    %986 = vmatpush.msra.mxu0 0.0
    %987 = vmatpush.msra.mxu0 0.0
    %988 = vmatpush.msra.mxu0 0.0
    %989 = vmatpush.msra.mxu0 0.0
    %990 = vmatpush.msra.mxu0 0.0
    %991 = vmatpush.msra.mxu0 0.0
    %992 = vmatpush.msra.mxu0 %v955
    %993 = vmatpush.msra.mxu0 %v954
    %994 = vmatpush.msra.mxu0 %v953
    %995 = vmatmul.f32.gmra.mxu0 %v503
    %v996 = vpop.f32.mrf.mxu0
    %v997 = vadd.f32 0.0, %v996
    %998 = vmatmul.f32.gmra.mxu0 %v506
    %v999 = vpop.f32.mrf.mxu0
    %v1000 = vadd.f32 0.0, %v999
    %1001 = vdwg.mxu0
    %v1002 = vmax.f32 %v974, %v997
    %v1003 = vmax.f32 %v977, %v1000
    %v1004 = vadd.f32 %v1002, %v534
    %v1005 = vadd.f32 %v1003, %v534
    %v1006 = vmax.f32 %v1004, 0.0
    %v1007 = vmax.f32 %v1005, 0.0
    %s1008 = scalar_lea.vmem %s4, 16
    %1009 = vst.msk [vmem:[%s1008] sm:$0xff] %vm540, %v1006
    %1010 = vst.msk [vmem:[%s1008 + $0x8] sm:$0xf] %vm542, %v1007
    // Predicated region
    $region22: #{mnist_convnet_forward.3} parent=1 // pred_check
      _
    $region23: #{mnist_convnet_forward.3} parent=1 // pred_check_branch
      %1012 = sbr.rel (0) target = $region25
    $region24: #{mnist_convnet_forward.3} parent=1 // pred_region
      _
    $region25: #{mnist_convnet_forward.3} parent=1 // pred_fallthru
      _
    // Predicated region
    $region26: #{mnist_convnet_forward.3} parent=1 // pred_check
      _
    $region27: #{mnist_convnet_forward.3} parent=1 // pred_check_branch
      %1014 = sbr.rel (0) target = $region29
    $region28: #{mnist_convnet_forward.3} parent=1 // pred_region
      _
    $region29: #{mnist_convnet_forward.3} parent=1 // pred_fallthru
      _
    %1015 = vsyncpa [#allocation3], 1

// kernel: mnist_convnet_forward.4
$region0: #{mnist_convnet_forward.4}
  #allocation0 [shape = 'u32[]', space=smem, size = 0x4, offset = 0x4, fixed_abs, tag = 'smem constant byte address 0x4 - core index']
  #allocation1 [shape = 'u32[72,128]{1,0:T(1,128)}', space=vmem, size = 0x9000, scoped, tag = 'internal scratch']
  %s0 = inlined_call_operand.vmem [shape: f32[2,12,120], index: 0, kind: input, shape index: {}]
  %s1 = inlined_call_operand.vmem [shape: f32[5,120,80], index: 1, kind: input, shape index: {}]
  %s2 = inlined_call_operand.vmem [shape: f32[5,120,80], index: 2, kind: input, shape index: {}]
  %s3 = inlined_call_operand.vmem [shape: f32[1,80], index: 3, kind: input, shape index: {}]
  %s4 = inlined_call_operand.vmem [shape: f32[2,4,80], index: 4, kind: output, shape index: {}]
  %s5 = sld [smem:[#allocation0]]
  $region26: #{mnist_convnet_forward.4} parent=0
    _
  %s7 = ssub.s32 1, %s5
  %s8 = scalar_select 0, %s7, %s5
  // Predicated region
  $region2: #{mnist_convnet_forward.4} parent=0 // pred_check
    _
  $region3: #{mnist_convnet_forward.4} parent=0 // pred_check_branch
    %10 = sbr.rel (0) target = $region5
  $region4: #{mnist_convnet_forward.4} parent=0 // pred_region
    _
  $region5: #{mnist_convnet_forward.4} parent=0 // pred_fallthru
    _
  // Predicated region
  $region6: #{mnist_convnet_forward.4} parent=0 // pred_check
    _
  $region7: #{mnist_convnet_forward.4} parent=0 // pred_check_branch
    %12 = sbr.rel (0) target = $region9
  $region8: #{mnist_convnet_forward.4} parent=0 // pred_region
    _
  $region9: #{mnist_convnet_forward.4} parent=0 // pred_fallthru
    _
  // Predicated region
  $region10: #{mnist_convnet_forward.4} parent=0 // pred_check
    _
  $region11: #{mnist_convnet_forward.4} parent=0 // pred_check_branch
    %14 = sbr.rel (0) target = $region13
  $region12: #{mnist_convnet_forward.4} parent=0 // pred_region
    _
  $region13: #{mnist_convnet_forward.4} parent=0 // pred_fallthru
    _
  // Predicated region
  $region14: #{mnist_convnet_forward.4} parent=0 // pred_check
    _
  $region15: #{mnist_convnet_forward.4} parent=0 // pred_check_branch
    %16 = sbr.rel (0) target = $region17
  $region16: #{mnist_convnet_forward.4} parent=0 // pred_region
    _
  $region17: #{mnist_convnet_forward.4} parent=0 // pred_fallthru
    _
  %v17 = vlaneseq
  %v18 = vshrl.u32 %v17, 7
  %v19 = vlaneseq
  %v20 = vand.u32 %v19, 127
  %v21 = vmul.u32 %v18, 2
  %vm22 = vcmp.eq.s32.totalorder %v20, %v21
  %v23 = vsel %vm22, 1.0, 0.0
  %v24 = vadd.s32 %v21, 1
  %vm25 = vcmp.eq.s32.totalorder %v20, %v24
  %v26 = vsel %vm25, 1.0, 0.0
  %v27 = vld [vmem:[%s3] sm:$0x1]
  %v28 = vld [vmem:[%s0] sm:$0xff]
  %v29 = vld [vmem:[%s1] sm:$0xff]
  %v30 = vld [vmem:[%s1 + $0x8] sm:$0xff]
  %v31 = vld [vmem:[%s1 + $0x10] sm:$0xff]
  %v32 = vld [vmem:[%s1 + $0x18] sm:$0xff]
  %v33 = vld [vmem:[%s1 + $0x20] sm:$0xff]
  %v34 = vld [vmem:[%s1 + $0x28] sm:$0xff]
  %v35 = vld [vmem:[%s1 + $0x30] sm:$0xff]
  %v36 = vld [vmem:[%s1 + $0x38] sm:$0xff]
  %v37 = vld [vmem:[%s1 + $0x40] sm:$0xff]
  %v38 = vld [vmem:[%s1 + $0x48] sm:$0xff]
  %v39 = vld [vmem:[%s1 + $0x50] sm:$0xff]
  %v40 = vld [vmem:[%s1 + $0x58] sm:$0xff]
  %v41 = vld [vmem:[%s1 + $0x60] sm:$0xff]
  %v42 = vld [vmem:[%s1 + $0x68] sm:$0xff]
  %v43 = vld [vmem:[%s1 + $0x70] sm:$0xff]
  %v44 = vld [vmem:[%s2] sm:$0xff]
  %v45 = vld [vmem:[%s2 + $0x8] sm:$0xff]
  %v46 = vld [vmem:[%s2 + $0x10] sm:$0xff]
  %v47 = vld [vmem:[%s2 + $0x18] sm:$0xff]
  %v48 = vld [vmem:[%s2 + $0x20] sm:$0xff]
  %v49 = vld [vmem:[%s2 + $0x28] sm:$0xff]
  %v50 = vld [vmem:[%s2 + $0x30] sm:$0xff]
  %v51 = vld [vmem:[%s2 + $0x38] sm:$0xff]
  %v52 = vld [vmem:[%s2 + $0x40] sm:$0xff]
  %v53 = vld [vmem:[%s2 + $0x48] sm:$0xff]
  %v54 = vld [vmem:[%s2 + $0x50] sm:$0xff]
  %v55 = vld [vmem:[%s2 + $0x58] sm:$0xff]
  %v56 = vld [vmem:[%s2 + $0x60] sm:$0xff]
  %v57 = vld [vmem:[%s2 + $0x68] sm:$0xff]
  %v58 = vld [vmem:[%s2 + $0x70] sm:$0xff]
  %v59 = vld [vmem:[%s0 + $0x1] sm:$0xff]
  %s60 = scalar_lea.vmem %s1, 120
  %v61 = vld [vmem:[%s60] sm:$0xff]
  %v62 = vld [vmem:[%s60 + $0x8] sm:$0xff]
  %v63 = vld [vmem:[%s60 + $0x10] sm:$0xff]
  %v64 = vld [vmem:[%s60 + $0x18] sm:$0xff]
  %v65 = vld [vmem:[%s60 + $0x20] sm:$0xff]
  %v66 = vld [vmem:[%s60 + $0x28] sm:$0xff]
  %v67 = vld [vmem:[%s60 + $0x30] sm:$0xff]
  %v68 = vld [vmem:[%s60 + $0x38] sm:$0xff]
  %v69 = vld [vmem:[%s60 + $0x40] sm:$0xff]
  %v70 = vld [vmem:[%s60 + $0x48] sm:$0xff]
  %v71 = vld [vmem:[%s60 + $0x50] sm:$0xff]
  %v72 = vld [vmem:[%s60 + $0x58] sm:$0xff]
  %v73 = vld [vmem:[%s60 + $0x60] sm:$0xff]
  %v74 = vld [vmem:[%s60 + $0x68] sm:$0xff]
  %v75 = vld [vmem:[%s60 + $0x70] sm:$0xff]
  %vm76 = vcmask 982016
  %v78 = vsel %vm76, %v59, 0
  %80 = vmatpush.msra.mxu0 0.0
  %81 = vmatpush.msra.mxu0 %v75
  %82 = vmatpush.msra.mxu0 %v74
  %83 = vmatpush.msra.mxu0 %v73
  %84 = vmatpush.msra.mxu0 %v72
  %85 = vmatpush.msra.mxu0 %v71
  %86 = vmatpush.msra.mxu0 %v70
  %87 = vmatpush.msra.mxu0 %v69
  %88 = vmatpush.msra.mxu0 %v68
  %89 = vmatpush.msra.mxu0 %v67
  %90 = vmatpush.msra.mxu0 %v66
  %91 = vmatpush.msra.mxu0 %v65
  %92 = vmatpush.msra.mxu0 %v64
  %93 = vmatpush.msra.mxu0 %v63
  %94 = vmatpush.msra.mxu0 %v62
  %95 = vmatpush.msra.mxu0 %v61
  %96 = vmatmul.f32.gmra.mxu0 %v78
  %v97 = vpop.f32.mrf.mxu0
  %v98 = vadd.f32 0.0, %v97
  %99 = vdwg.mxu0
  %v101 = vsel %vm76, %v28, 0
  %103 = vmatpush.msra.mxu0 0.0
  %104 = vmatpush.msra.mxu0 %v43
  %105 = vmatpush.msra.mxu0 %v42
  %106 = vmatpush.msra.mxu0 %v41
  %107 = vmatpush.msra.mxu0 %v40
  %108 = vmatpush.msra.mxu0 %v39
  %109 = vmatpush.msra.mxu0 %v38
  %110 = vmatpush.msra.mxu0 %v37
  %111 = vmatpush.msra.mxu0 %v36
  %112 = vmatpush.msra.mxu0 %v35
  %113 = vmatpush.msra.mxu0 %v34
  %114 = vmatpush.msra.mxu0 %v33
  %115 = vmatpush.msra.mxu0 %v32
  %116 = vmatpush.msra.mxu0 %v31
  %117 = vmatpush.msra.mxu0 %v30
  %118 = vmatpush.msra.mxu0 %v29
  %119 = vmatmul.f32.gmra.mxu0 %v101
  %v120 = vpop.f32.mrf.mxu0
  %v121 = vadd.f32 %v98, %v120
  %122 = vdwg.mxu0
  %s123 = scalar_lea.vmem %s2, 120
  %v124 = vld [vmem:[%s123] sm:$0xff]
  %v125 = vld [vmem:[%s123 + $0x8] sm:$0xff]
  %v126 = vld [vmem:[%s123 + $0x10] sm:$0xff]
  %v127 = vld [vmem:[%s123 + $0x18] sm:$0xff]
  %v128 = vld [vmem:[%s123 + $0x20] sm:$0xff]
  %v129 = vld [vmem:[%s123 + $0x28] sm:$0xff]
  %v130 = vld [vmem:[%s123 + $0x30] sm:$0xff]
  %v131 = vld [vmem:[%s123 + $0x38] sm:$0xff]
  %v132 = vld [vmem:[%s123 + $0x40] sm:$0xff]
  %v133 = vld [vmem:[%s123 + $0x48] sm:$0xff]
  %v134 = vld [vmem:[%s123 + $0x50] sm:$0xff]
  %v135 = vld [vmem:[%s123 + $0x58] sm:$0xff]
  %v136 = vld [vmem:[%s123 + $0x60] sm:$0xff]
  %v137 = vld [vmem:[%s123 + $0x68] sm:$0xff]
  %v138 = vld [vmem:[%s123 + $0x70] sm:$0xff]
  %139 = vmatpush.msra.mxu0 0.0
  %140 = vmatpush.msra.mxu0 %v138
  %141 = vmatpush.msra.mxu0 %v137
  %142 = vmatpush.msra.mxu0 %v136
  %143 = vmatpush.msra.mxu0 %v135
  %144 = vmatpush.msra.mxu0 %v134
  %145 = vmatpush.msra.mxu0 %v133
  %146 = vmatpush.msra.mxu0 %v132
  %147 = vmatpush.msra.mxu0 %v131
  %148 = vmatpush.msra.mxu0 %v130
  %149 = vmatpush.msra.mxu0 %v129
  %150 = vmatpush.msra.mxu0 %v128
  %151 = vmatpush.msra.mxu0 %v127
  %152 = vmatpush.msra.mxu0 %v126
  %153 = vmatpush.msra.mxu0 %v125
  %154 = vmatpush.msra.mxu0 %v124
  %155 = vmatmul.f32.gmra.mxu0 %v78
  %v156 = vpop.f32.mrf.mxu0
  %v157 = vadd.f32 0.0, %v156
  %158 = vdwg.mxu0
  %159 = vmatpush.msra.mxu0 0.0
  %160 = vmatpush.msra.mxu0 %v58
  %161 = vmatpush.msra.mxu0 %v57
  %162 = vmatpush.msra.mxu0 %v56
  %163 = vmatpush.msra.mxu0 %v55
  %164 = vmatpush.msra.mxu0 %v54
  %165 = vmatpush.msra.mxu0 %v53
  %166 = vmatpush.msra.mxu0 %v52
  %167 = vmatpush.msra.mxu0 %v51
  %168 = vmatpush.msra.mxu0 %v50
  %169 = vmatpush.msra.mxu0 %v49
  %170 = vmatpush.msra.mxu0 %v48
  %171 = vmatpush.msra.mxu0 %v47
  %172 = vmatpush.msra.mxu0 %v46
  %173 = vmatpush.msra.mxu0 %v45
  %174 = vmatpush.msra.mxu0 %v44
  %175 = vmatmul.f32.gmra.mxu0 %v101
  %v176 = vpop.f32.mrf.mxu0
  %v177 = vadd.f32 %v157, %v176
  %178 = vdwg.mxu0
  %v179 = vld [vmem:[%s0 + $0x2] sm:$0xff]
  %s180 = scalar_lea.vmem %s1, 240
  %v181 = vld [vmem:[%s180] sm:$0xff]
  %v182 = vld [vmem:[%s180 + $0x8] sm:$0xff]
  %v183 = vld [vmem:[%s180 + $0x10] sm:$0xff]
  %v184 = vld [vmem:[%s180 + $0x18] sm:$0xff]
  %v185 = vld [vmem:[%s180 + $0x20] sm:$0xff]
  %v186 = vld [vmem:[%s180 + $0x28] sm:$0xff]
  %v187 = vld [vmem:[%s180 + $0x30] sm:$0xff]
  %v188 = vld [vmem:[%s180 + $0x38] sm:$0xff]
  %v189 = vld [vmem:[%s180 + $0x40] sm:$0xff]
  %v190 = vld [vmem:[%s180 + $0x48] sm:$0xff]
  %v191 = vld [vmem:[%s180 + $0x50] sm:$0xff]
  %v192 = vld [vmem:[%s180 + $0x58] sm:$0xff]
  %v193 = vld [vmem:[%s180 + $0x60] sm:$0xff]
  %v194 = vld [vmem:[%s180 + $0x68] sm:$0xff]
  %v195 = vld [vmem:[%s180 + $0x70] sm:$0xff]
  %v197 = vsel %vm76, %v179, 0
  %199 = vmatpush.msra.mxu0 0.0
  %200 = vmatpush.msra.mxu0 %v195
  %201 = vmatpush.msra.mxu0 %v194
  %202 = vmatpush.msra.mxu0 %v193
  %203 = vmatpush.msra.mxu0 %v192
  %204 = vmatpush.msra.mxu0 %v191
  %205 = vmatpush.msra.mxu0 %v190
  %206 = vmatpush.msra.mxu0 %v189
  %207 = vmatpush.msra.mxu0 %v188
  %208 = vmatpush.msra.mxu0 %v187
  %209 = vmatpush.msra.mxu0 %v186
  %210 = vmatpush.msra.mxu0 %v185
  %211 = vmatpush.msra.mxu0 %v184
  %212 = vmatpush.msra.mxu0 %v183
  %213 = vmatpush.msra.mxu0 %v182
  %214 = vmatpush.msra.mxu0 %v181
  %215 = vmatmul.f32.gmra.mxu0 %v197
  %v216 = vpop.f32.mrf.mxu0
  %v217 = vadd.f32 0.0, %v216
  %218 = vdwg.mxu0
  %v219 = vadd.f32 %v121, %v217
  %s220 = scalar_lea.vmem %s2, 240
  %v221 = vld [vmem:[%s220] sm:$0xff]
  %v222 = vld [vmem:[%s220 + $0x8] sm:$0xff]
  %v223 = vld [vmem:[%s220 + $0x10] sm:$0xff]
  %v224 = vld [vmem:[%s220 + $0x18] sm:$0xff]
  %v225 = vld [vmem:[%s220 + $0x20] sm:$0xff]
  %v226 = vld [vmem:[%s220 + $0x28] sm:$0xff]
  %v227 = vld [vmem:[%s220 + $0x30] sm:$0xff]
  %v228 = vld [vmem:[%s220 + $0x38] sm:$0xff]
  %v229 = vld [vmem:[%s220 + $0x40] sm:$0xff]
  %v230 = vld [vmem:[%s220 + $0x48] sm:$0xff]
  %v231 = vld [vmem:[%s220 + $0x50] sm:$0xff]
  %v232 = vld [vmem:[%s220 + $0x58] sm:$0xff]
  %v233 = vld [vmem:[%s220 + $0x60] sm:$0xff]
  %v234 = vld [vmem:[%s220 + $0x68] sm:$0xff]
  %v235 = vld [vmem:[%s220 + $0x70] sm:$0xff]
  %236 = vmatpush.msra.mxu0 0.0
  %237 = vmatpush.msra.mxu0 %v235
  %238 = vmatpush.msra.mxu0 %v234
  %239 = vmatpush.msra.mxu0 %v233
  %240 = vmatpush.msra.mxu0 %v232
  %241 = vmatpush.msra.mxu0 %v231
  %242 = vmatpush.msra.mxu0 %v230
  %243 = vmatpush.msra.mxu0 %v229
  %244 = vmatpush.msra.mxu0 %v228
  %245 = vmatpush.msra.mxu0 %v227
  %246 = vmatpush.msra.mxu0 %v226
  %247 = vmatpush.msra.mxu0 %v225
  %248 = vmatpush.msra.mxu0 %v224
  %249 = vmatpush.msra.mxu0 %v223
  %250 = vmatpush.msra.mxu0 %v222
  %251 = vmatpush.msra.mxu0 %v221
  %252 = vmatmul.f32.gmra.mxu0 %v197
  %v253 = vpop.f32.mrf.mxu0
  %v254 = vadd.f32 0.0, %v253
  %255 = vdwg.mxu0
  %v256 = vadd.f32 %v177, %v254
  %v257 = vld [vmem:[%s0 + $0x3] sm:$0xff]
  %s258 = scalar_lea.vmem %s1, 360
  %v259 = vld [vmem:[%s258] sm:$0xff]
  %v260 = vld [vmem:[%s258 + $0x8] sm:$0xff]
  %v261 = vld [vmem:[%s258 + $0x10] sm:$0xff]
  %v262 = vld [vmem:[%s258 + $0x18] sm:$0xff]
  %v263 = vld [vmem:[%s258 + $0x20] sm:$0xff]
  %v264 = vld [vmem:[%s258 + $0x28] sm:$0xff]
  %v265 = vld [vmem:[%s258 + $0x30] sm:$0xff]
  %v266 = vld [vmem:[%s258 + $0x38] sm:$0xff]
  %v267 = vld [vmem:[%s258 + $0x40] sm:$0xff]
  %v268 = vld [vmem:[%s258 + $0x48] sm:$0xff]
  %v269 = vld [vmem:[%s258 + $0x50] sm:$0xff]
  %v270 = vld [vmem:[%s258 + $0x58] sm:$0xff]
  %v271 = vld [vmem:[%s258 + $0x60] sm:$0xff]
  %v272 = vld [vmem:[%s258 + $0x68] sm:$0xff]
  %v273 = vld [vmem:[%s258 + $0x70] sm:$0xff]
  %v275 = vsel %vm76, %v257, 0
  %277 = vmatpush.msra.mxu0 0.0
  %278 = vmatpush.msra.mxu0 %v273
  %279 = vmatpush.msra.mxu0 %v272
  %280 = vmatpush.msra.mxu0 %v271
  %281 = vmatpush.msra.mxu0 %v270
  %282 = vmatpush.msra.mxu0 %v269
  %283 = vmatpush.msra.mxu0 %v268
  %284 = vmatpush.msra.mxu0 %v267
  %285 = vmatpush.msra.mxu0 %v266
  %286 = vmatpush.msra.mxu0 %v265
  %287 = vmatpush.msra.mxu0 %v264
  %288 = vmatpush.msra.mxu0 %v263
  %289 = vmatpush.msra.mxu0 %v262
  %290 = vmatpush.msra.mxu0 %v261
  %291 = vmatpush.msra.mxu0 %v260
  %292 = vmatpush.msra.mxu0 %v259
  %293 = vmatmul.f32.gmra.mxu0 %v275
  %v294 = vpop.f32.mrf.mxu0
  %v295 = vadd.f32 0.0, %v294
  %296 = vdwg.mxu0
  %v297 = vadd.f32 %v219, %v295
  %s298 = scalar_lea.vmem %s2, 360
  %v299 = vld [vmem:[%s298] sm:$0xff]
  %v300 = vld [vmem:[%s298 + $0x8] sm:$0xff]
  %v301 = vld [vmem:[%s298 + $0x10] sm:$0xff]
  %v302 = vld [vmem:[%s298 + $0x18] sm:$0xff]
  %v303 = vld [vmem:[%s298 + $0x20] sm:$0xff]
  %v304 = vld [vmem:[%s298 + $0x28] sm:$0xff]
  %v305 = vld [vmem:[%s298 + $0x30] sm:$0xff]
  %v306 = vld [vmem:[%s298 + $0x38] sm:$0xff]
  %v307 = vld [vmem:[%s298 + $0x40] sm:$0xff]
  %v308 = vld [vmem:[%s298 + $0x48] sm:$0xff]
  %v309 = vld [vmem:[%s298 + $0x50] sm:$0xff]
  %v310 = vld [vmem:[%s298 + $0x58] sm:$0xff]
  %v311 = vld [vmem:[%s298 + $0x60] sm:$0xff]
  %v312 = vld [vmem:[%s298 + $0x68] sm:$0xff]
  %v313 = vld [vmem:[%s298 + $0x70] sm:$0xff]
  %314 = vmatpush.msra.mxu0 0.0
  %315 = vmatpush.msra.mxu0 %v313
  %316 = vmatpush.msra.mxu0 %v312
  %317 = vmatpush.msra.mxu0 %v311
  %318 = vmatpush.msra.mxu0 %v310
  %319 = vmatpush.msra.mxu0 %v309
  %320 = vmatpush.msra.mxu0 %v308
  %321 = vmatpush.msra.mxu0 %v307
  %322 = vmatpush.msra.mxu0 %v306
  %323 = vmatpush.msra.mxu0 %v305
  %324 = vmatpush.msra.mxu0 %v304
  %325 = vmatpush.msra.mxu0 %v303
  %326 = vmatpush.msra.mxu0 %v302
  %327 = vmatpush.msra.mxu0 %v301
  %328 = vmatpush.msra.mxu0 %v300
  %329 = vmatpush.msra.mxu0 %v299
  %330 = vmatmul.f32.gmra.mxu0 %v275
  %v331 = vpop.f32.mrf.mxu0
  %v332 = vadd.f32 0.0, %v331
  %333 = vdwg.mxu0
  %v334 = vadd.f32 %v256, %v332
  %v335 = vld [vmem:[%s0 + $0x4] sm:$0xff]
  %s336 = scalar_lea.vmem %s1, 480
  %v337 = vld [vmem:[%s336] sm:$0xff]
  %v338 = vld [vmem:[%s336 + $0x8] sm:$0xff]
  %v339 = vld [vmem:[%s336 + $0x10] sm:$0xff]
  %v340 = vld [vmem:[%s336 + $0x18] sm:$0xff]
  %v341 = vld [vmem:[%s336 + $0x20] sm:$0xff]
  %v342 = vld [vmem:[%s336 + $0x28] sm:$0xff]
  %v343 = vld [vmem:[%s336 + $0x30] sm:$0xff]
  %v344 = vld [vmem:[%s336 + $0x38] sm:$0xff]
  %v345 = vld [vmem:[%s336 + $0x40] sm:$0xff]
  %v346 = vld [vmem:[%s336 + $0x48] sm:$0xff]
  %v347 = vld [vmem:[%s336 + $0x50] sm:$0xff]
  %v348 = vld [vmem:[%s336 + $0x58] sm:$0xff]
  %v349 = vld [vmem:[%s336 + $0x60] sm:$0xff]
  %v350 = vld [vmem:[%s336 + $0x68] sm:$0xff]
  %v351 = vld [vmem:[%s336 + $0x70] sm:$0xff]
  %v353 = vsel %vm76, %v335, 0
  %355 = vmatpush.msra.mxu0 0.0
  %356 = vmatpush.msra.mxu0 %v351
  %357 = vmatpush.msra.mxu0 %v350
  %358 = vmatpush.msra.mxu0 %v349
  %359 = vmatpush.msra.mxu0 %v348
  %360 = vmatpush.msra.mxu0 %v347
  %361 = vmatpush.msra.mxu0 %v346
  %362 = vmatpush.msra.mxu0 %v345
  %363 = vmatpush.msra.mxu0 %v344
  %364 = vmatpush.msra.mxu0 %v343
  %365 = vmatpush.msra.mxu0 %v342
  %366 = vmatpush.msra.mxu0 %v341
  %367 = vmatpush.msra.mxu0 %v340
  %368 = vmatpush.msra.mxu0 %v339
  %369 = vmatpush.msra.mxu0 %v338
  %370 = vmatpush.msra.mxu0 %v337
  %371 = vmatmul.f32.gmra.mxu0 %v353
  %v372 = vpop.f32.mrf.mxu0
  %v373 = vadd.f32 0.0, %v372
  %374 = vdwg.mxu0
  %v375 = vadd.f32 %v297, %v373
  %s376 = scalar_lea.vmem %s2, 480
  %v377 = vld [vmem:[%s376] sm:$0xff]
  %v378 = vld [vmem:[%s376 + $0x8] sm:$0xff]
  %v379 = vld [vmem:[%s376 + $0x10] sm:$0xff]
  %v380 = vld [vmem:[%s376 + $0x18] sm:$0xff]
  %v381 = vld [vmem:[%s376 + $0x20] sm:$0xff]
  %v382 = vld [vmem:[%s376 + $0x28] sm:$0xff]
  %v383 = vld [vmem:[%s376 + $0x30] sm:$0xff]
  %v384 = vld [vmem:[%s376 + $0x38] sm:$0xff]
  %v385 = vld [vmem:[%s376 + $0x40] sm:$0xff]
  %v386 = vld [vmem:[%s376 + $0x48] sm:$0xff]
  %v387 = vld [vmem:[%s376 + $0x50] sm:$0xff]
  %v388 = vld [vmem:[%s376 + $0x58] sm:$0xff]
  %v389 = vld [vmem:[%s376 + $0x60] sm:$0xff]
  %v390 = vld [vmem:[%s376 + $0x68] sm:$0xff]
  %v391 = vld [vmem:[%s376 + $0x70] sm:$0xff]
  %392 = vmatpush.msra.mxu0 0.0
  %393 = vmatpush.msra.mxu0 %v391
  %394 = vmatpush.msra.mxu0 %v390
  %395 = vmatpush.msra.mxu0 %v389
  %396 = vmatpush.msra.mxu0 %v388
  %397 = vmatpush.msra.mxu0 %v387
  %398 = vmatpush.msra.mxu0 %v386
  %399 = vmatpush.msra.mxu0 %v385
  %400 = vmatpush.msra.mxu0 %v384
  %401 = vmatpush.msra.mxu0 %v383
  %402 = vmatpush.msra.mxu0 %v382
  %403 = vmatpush.msra.mxu0 %v381
  %404 = vmatpush.msra.mxu0 %v380
  %405 = vmatpush.msra.mxu0 %v379
  %406 = vmatpush.msra.mxu0 %v378
  %407 = vmatpush.msra.mxu0 %v377
  %408 = vmatmul.f32.gmra.mxu0 %v353
  %v409 = vpop.f32.mrf.mxu0
  %v410 = vadd.f32 0.0, %v409
  %411 = vdwg.mxu0
  %v412 = vadd.f32 %v334, %v410
  %v413 = vmax.f32 %v375, %v412
  %vm414 = vcmask 64512
  %v416 = vsel %vm414, %v23, 0
  %418 = vmatpush.msra.mxu0 0.0
  %419 = vmatpush.msra.mxu0 0.0
  %420 = vmatpush.msra.mxu0 0.0
  %421 = vmatpush.msra.mxu0 0.0
  %422 = vmatpush.msra.mxu0 0.0
  %423 = vmatpush.msra.mxu0 0.0
  %424 = vmatpush.msra.mxu0 0.0
  %425 = vmatpush.msra.mxu0 0.0
  %426 = vmatpush.msra.mxu0 0.0
  %427 = vmatpush.msra.mxu0 0.0
  %428 = vmatpush.msra.mxu0 0.0
  %429 = vmatpush.msra.mxu0 0.0
  %430 = vmatpush.msra.mxu0 0.0
  %431 = vmatpush.msra.mxu0 0.0
  %432 = vmatpush.msra.mxu0 0.0
  %433 = vmatpush.msra.mxu0 %v413
  %434 = vmatmul.f32.gmra.mxu0 %v416
  %v435 = vpop.f32.mrf.mxu0
  %v436 = vadd.f32 0.0, %v435
  %437 = vdwg.mxu0
  %v439 = vsel %vm414, %v26, 0
  %441 = vmatpush.msra.mxu0 0.0
  %442 = vmatpush.msra.mxu0 0.0
  %443 = vmatpush.msra.mxu0 0.0
  %444 = vmatpush.msra.mxu0 0.0
  %445 = vmatpush.msra.mxu0 0.0
  %446 = vmatpush.msra.mxu0 0.0
  %447 = vmatpush.msra.mxu0 0.0
  %448 = vmatpush.msra.mxu0 0.0
  %449 = vmatpush.msra.mxu0 0.0
  %450 = vmatpush.msra.mxu0 0.0
  %451 = vmatpush.msra.mxu0 0.0
  %452 = vmatpush.msra.mxu0 0.0
  %453 = vmatpush.msra.mxu0 0.0
  %454 = vmatpush.msra.mxu0 0.0
  %455 = vmatpush.msra.mxu0 0.0
  %456 = vmatpush.msra.mxu0 %v413
  %457 = vmatmul.f32.gmra.mxu0 %v439
  %v458 = vpop.f32.mrf.mxu0
  %v459 = vadd.f32 0.0, %v458
  %460 = vdwg.mxu0
  %v461 = vmax.f32 %v436, %v459
  %v463 = vperm.slane %v27, 0
  %v465 = vadd.f32 %v461, %v463
  %v466 = vmax.f32 %v465, 0.0
  %vm467 = vcmask 650240
  %468 = vst.msk [vmem:[%s4] sm:$0xf] %vm467, %v466
  %s469 = scalar_lea.vmem %s0, 16
  %v470 = vld [vmem:[%s469] sm:$0xff]
  %v471 = vld [vmem:[%s1] sm:$0xff]
  %v472 = vld [vmem:[%s1 + $0x8] sm:$0xff]
  %v473 = vld [vmem:[%s1 + $0x10] sm:$0xff]
  %v474 = vld [vmem:[%s1 + $0x18] sm:$0xff]
  %v475 = vld [vmem:[%s1 + $0x20] sm:$0xff]
  %v476 = vld [vmem:[%s1 + $0x28] sm:$0xff]
  %v477 = vld [vmem:[%s1 + $0x30] sm:$0xff]
  %v478 = vld [vmem:[%s1 + $0x38] sm:$0xff]
  %v479 = vld [vmem:[%s1 + $0x40] sm:$0xff]
  %v480 = vld [vmem:[%s1 + $0x48] sm:$0xff]
  %v481 = vld [vmem:[%s1 + $0x50] sm:$0xff]
  %v482 = vld [vmem:[%s1 + $0x58] sm:$0xff]
  %v483 = vld [vmem:[%s1 + $0x60] sm:$0xff]
  %v484 = vld [vmem:[%s1 + $0x68] sm:$0xff]
  %v485 = vld [vmem:[%s1 + $0x70] sm:$0xff]
  %v486 = vld [vmem:[%s2] sm:$0xff]
  %v487 = vld [vmem:[%s2 + $0x8] sm:$0xff]
  %v488 = vld [vmem:[%s2 + $0x10] sm:$0xff]
  %v489 = vld [vmem:[%s2 + $0x18] sm:$0xff]
  %v490 = vld [vmem:[%s2 + $0x20] sm:$0xff]
  %v491 = vld [vmem:[%s2 + $0x28] sm:$0xff]
  %v492 = vld [vmem:[%s2 + $0x30] sm:$0xff]
  %v493 = vld [vmem:[%s2 + $0x38] sm:$0xff]
  %v494 = vld [vmem:[%s2 + $0x40] sm:$0xff]
  %v495 = vld [vmem:[%s2 + $0x48] sm:$0xff]
  %v496 = vld [vmem:[%s2 + $0x50] sm:$0xff]
  %v497 = vld [vmem:[%s2 + $0x58] sm:$0xff]
  %v498 = vld [vmem:[%s2 + $0x60] sm:$0xff]
  %v499 = vld [vmem:[%s2 + $0x68] sm:$0xff]
  %v500 = vld [vmem:[%s2 + $0x70] sm:$0xff]
  %v501 = vld [vmem:[%s469 + $0x1] sm:$0xff]
  %v502 = vld [vmem:[%s60] sm:$0xff]
  %v503 = vld [vmem:[%s60 + $0x8] sm:$0xff]
  %v504 = vld [vmem:[%s60 + $0x10] sm:$0xff]
  %v505 = vld [vmem:[%s60 + $0x18] sm:$0xff]
  %v506 = vld [vmem:[%s60 + $0x20] sm:$0xff]
  %v507 = vld [vmem:[%s60 + $0x28] sm:$0xff]
  %v508 = vld [vmem:[%s60 + $0x30] sm:$0xff]
  %v509 = vld [vmem:[%s60 + $0x38] sm:$0xff]
  %v510 = vld [vmem:[%s60 + $0x40] sm:$0xff]
  %v511 = vld [vmem:[%s60 + $0x48] sm:$0xff]
  %v512 = vld [vmem:[%s60 + $0x50] sm:$0xff]
  %v513 = vld [vmem:[%s60 + $0x58] sm:$0xff]
  %v514 = vld [vmem:[%s60 + $0x60] sm:$0xff]
  %v515 = vld [vmem:[%s60 + $0x68] sm:$0xff]
  %v516 = vld [vmem:[%s60 + $0x70] sm:$0xff]
  %v518 = vsel %vm76, %v501, 0
  %520 = vmatpush.msra.mxu0 0.0
  %521 = vmatpush.msra.mxu0 %v516
  %522 = vmatpush.msra.mxu0 %v515
  %523 = vmatpush.msra.mxu0 %v514
  %524 = vmatpush.msra.mxu0 %v513
  %525 = vmatpush.msra.mxu0 %v512
  %526 = vmatpush.msra.mxu0 %v511
  %527 = vmatpush.msra.mxu0 %v510
  %528 = vmatpush.msra.mxu0 %v509
  %529 = vmatpush.msra.mxu0 %v508
  %530 = vmatpush.msra.mxu0 %v507
  %531 = vmatpush.msra.mxu0 %v506
  %532 = vmatpush.msra.mxu0 %v505
  %533 = vmatpush.msra.mxu0 %v504
  %534 = vmatpush.msra.mxu0 %v503
  %535 = vmatpush.msra.mxu0 %v502
  %536 = vmatmul.f32.gmra.mxu0 %v518
  %v537 = vpop.f32.mrf.mxu0
  %v538 = vadd.f32 0.0, %v537
  %539 = vdwg.mxu0
  %v541 = vsel %vm76, %v470, 0
  %543 = vmatpush.msra.mxu0 0.0
  %544 = vmatpush.msra.mxu0 %v485
  %545 = vmatpush.msra.mxu0 %v484
  %546 = vmatpush.msra.mxu0 %v483
  %547 = vmatpush.msra.mxu0 %v482
  %548 = vmatpush.msra.mxu0 %v481
  %549 = vmatpush.msra.mxu0 %v480
  %550 = vmatpush.msra.mxu0 %v479
  %551 = vmatpush.msra.mxu0 %v478
  %552 = vmatpush.msra.mxu0 %v477
  %553 = vmatpush.msra.mxu0 %v476
  %554 = vmatpush.msra.mxu0 %v475
  %555 = vmatpush.msra.mxu0 %v474
  %556 = vmatpush.msra.mxu0 %v473
  %557 = vmatpush.msra.mxu0 %v472
  %558 = vmatpush.msra.mxu0 %v471
  %559 = vmatmul.f32.gmra.mxu0 %v541
  %v560 = vpop.f32.mrf.mxu0
  %v561 = vadd.f32 %v538, %v560
  %562 = vdwg.mxu0
  %v563 = vld [vmem:[%s123] sm:$0xff]
  %v564 = vld [vmem:[%s123 + $0x8] sm:$0xff]
  %v565 = vld [vmem:[%s123 + $0x10] sm:$0xff]
  %v566 = vld [vmem:[%s123 + $0x18] sm:$0xff]
  %v567 = vld [vmem:[%s123 + $0x20] sm:$0xff]
  %v568 = vld [vmem:[%s123 + $0x28] sm:$0xff]
  %v569 = vld [vmem:[%s123 + $0x30] sm:$0xff]
  %v570 = vld [vmem:[%s123 + $0x38] sm:$0xff]
  %v571 = vld [vmem:[%s123 + $0x40] sm:$0xff]
  %v572 = vld [vmem:[%s123 + $0x48] sm:$0xff]
  %v573 = vld [vmem:[%s123 + $0x50] sm:$0xff]
  %v574 = vld [vmem:[%s123 + $0x58] sm:$0xff]
  %v575 = vld [vmem:[%s123 + $0x60] sm:$0xff]
  %v576 = vld [vmem:[%s123 + $0x68] sm:$0xff]
  %v577 = vld [vmem:[%s123 + $0x70] sm:$0xff]
  %578 = vmatpush.msra.mxu0 0.0
  %579 = vmatpush.msra.mxu0 %v577
  %580 = vmatpush.msra.mxu0 %v576
  %581 = vmatpush.msra.mxu0 %v575
  %582 = vmatpush.msra.mxu0 %v574
  %583 = vmatpush.msra.mxu0 %v573
  %584 = vmatpush.msra.mxu0 %v572
  %585 = vmatpush.msra.mxu0 %v571
  %586 = vmatpush.msra.mxu0 %v570
  %587 = vmatpush.msra.mxu0 %v569
  %588 = vmatpush.msra.mxu0 %v568
  %589 = vmatpush.msra.mxu0 %v567
  %590 = vmatpush.msra.mxu0 %v566
  %591 = vmatpush.msra.mxu0 %v565
  %592 = vmatpush.msra.mxu0 %v564
  %593 = vmatpush.msra.mxu0 %v563
  %594 = vmatmul.f32.gmra.mxu0 %v518
  %v595 = vpop.f32.mrf.mxu0
  %v596 = vadd.f32 0.0, %v595
  %597 = vdwg.mxu0
  %598 = vmatpush.msra.mxu0 0.0
  %599 = vmatpush.msra.mxu0 %v500
  %600 = vmatpush.msra.mxu0 %v499
  %601 = vmatpush.msra.mxu0 %v498
  %602 = vmatpush.msra.mxu0 %v497
  %603 = vmatpush.msra.mxu0 %v496
  %604 = vmatpush.msra.mxu0 %v495
  %605 = vmatpush.msra.mxu0 %v494
  %606 = vmatpush.msra.mxu0 %v493
  %607 = vmatpush.msra.mxu0 %v492
  %608 = vmatpush.msra.mxu0 %v491
  %609 = vmatpush.msra.mxu0 %v490
  %610 = vmatpush.msra.mxu0 %v489
  %611 = vmatpush.msra.mxu0 %v488
  %612 = vmatpush.msra.mxu0 %v487
  %613 = vmatpush.msra.mxu0 %v486
  %614 = vmatmul.f32.gmra.mxu0 %v541
  %v615 = vpop.f32.mrf.mxu0
  %v616 = vadd.f32 %v596, %v615
  %617 = vdwg.mxu0
  %v618 = vld [vmem:[%s469 + $0x2] sm:$0xff]
  %v619 = vld [vmem:[%s180] sm:$0xff]
  %v620 = vld [vmem:[%s180 + $0x8] sm:$0xff]
  %v621 = vld [vmem:[%s180 + $0x10] sm:$0xff]
  %v622 = vld [vmem:[%s180 + $0x18] sm:$0xff]
  %v623 = vld [vmem:[%s180 + $0x20] sm:$0xff]
  %v624 = vld [vmem:[%s180 + $0x28] sm:$0xff]
  %v625 = vld [vmem:[%s180 + $0x30] sm:$0xff]
  %v626 = vld [vmem:[%s180 + $0x38] sm:$0xff]
  %v627 = vld [vmem:[%s180 + $0x40] sm:$0xff]
  %v628 = vld [vmem:[%s180 + $0x48] sm:$0xff]
  %v629 = vld [vmem:[%s180 + $0x50] sm:$0xff]
  %v630 = vld [vmem:[%s180 + $0x58] sm:$0xff]
  %v631 = vld [vmem:[%s180 + $0x60] sm:$0xff]
  %v632 = vld [vmem:[%s180 + $0x68] sm:$0xff]
  %v633 = vld [vmem:[%s180 + $0x70] sm:$0xff]
  %v635 = vsel %vm76, %v618, 0
  %637 = vmatpush.msra.mxu0 0.0
  %638 = vmatpush.msra.mxu0 %v633
  %639 = vmatpush.msra.mxu0 %v632
  %640 = vmatpush.msra.mxu0 %v631
  %641 = vmatpush.msra.mxu0 %v630
  %642 = vmatpush.msra.mxu0 %v629
  %643 = vmatpush.msra.mxu0 %v628
  %644 = vmatpush.msra.mxu0 %v627
  %645 = vmatpush.msra.mxu0 %v626
  %646 = vmatpush.msra.mxu0 %v625
  %647 = vmatpush.msra.mxu0 %v624
  %648 = vmatpush.msra.mxu0 %v623
  %649 = vmatpush.msra.mxu0 %v622
  %650 = vmatpush.msra.mxu0 %v621
  %651 = vmatpush.msra.mxu0 %v620
  %652 = vmatpush.msra.mxu0 %v619
  %653 = vmatmul.f32.gmra.mxu0 %v635
  %v654 = vpop.f32.mrf.mxu0
  %v655 = vadd.f32 0.0, %v654
  %656 = vdwg.mxu0
  %v657 = vadd.f32 %v561, %v655
  %v658 = vld [vmem:[%s220] sm:$0xff]
  %v659 = vld [vmem:[%s220 + $0x8] sm:$0xff]
  %v660 = vld [vmem:[%s220 + $0x10] sm:$0xff]
  %v661 = vld [vmem:[%s220 + $0x18] sm:$0xff]
  %v662 = vld [vmem:[%s220 + $0x20] sm:$0xff]
  %v663 = vld [vmem:[%s220 + $0x28] sm:$0xff]
  %v664 = vld [vmem:[%s220 + $0x30] sm:$0xff]
  %v665 = vld [vmem:[%s220 + $0x38] sm:$0xff]
  %v666 = vld [vmem:[%s220 + $0x40] sm:$0xff]
  %v667 = vld [vmem:[%s220 + $0x48] sm:$0xff]
  %v668 = vld [vmem:[%s220 + $0x50] sm:$0xff]
  %v669 = vld [vmem:[%s220 + $0x58] sm:$0xff]
  %v670 = vld [vmem:[%s220 + $0x60] sm:$0xff]
  %v671 = vld [vmem:[%s220 + $0x68] sm:$0xff]
  %v672 = vld [vmem:[%s220 + $0x70] sm:$0xff]
  %673 = vmatpush.msra.mxu0 0.0
  %674 = vmatpush.msra.mxu0 %v672
  %675 = vmatpush.msra.mxu0 %v671
  %676 = vmatpush.msra.mxu0 %v670
  %677 = vmatpush.msra.mxu0 %v669
  %678 = vmatpush.msra.mxu0 %v668
  %679 = vmatpush.msra.mxu0 %v667
  %680 = vmatpush.msra.mxu0 %v666
  %681 = vmatpush.msra.mxu0 %v665
  %682 = vmatpush.msra.mxu0 %v664
  %683 = vmatpush.msra.mxu0 %v663
  %684 = vmatpush.msra.mxu0 %v662
  %685 = vmatpush.msra.mxu0 %v661
  %686 = vmatpush.msra.mxu0 %v660
  %687 = vmatpush.msra.mxu0 %v659
  %688 = vmatpush.msra.mxu0 %v658
  %689 = vmatmul.f32.gmra.mxu0 %v635
  %v690 = vpop.f32.mrf.mxu0
  %v691 = vadd.f32 0.0, %v690
  %692 = vdwg.mxu0
  %v693 = vadd.f32 %v616, %v691
  %v694 = vld [vmem:[%s469 + $0x3] sm:$0xff]
  %v695 = vld [vmem:[%s258] sm:$0xff]
  %v696 = vld [vmem:[%s258 + $0x8] sm:$0xff]
  %v697 = vld [vmem:[%s258 + $0x10] sm:$0xff]
  %v698 = vld [vmem:[%s258 + $0x18] sm:$0xff]
  %v699 = vld [vmem:[%s258 + $0x20] sm:$0xff]
  %v700 = vld [vmem:[%s258 + $0x28] sm:$0xff]
  %v701 = vld [vmem:[%s258 + $0x30] sm:$0xff]
  %v702 = vld [vmem:[%s258 + $0x38] sm:$0xff]
  %v703 = vld [vmem:[%s258 + $0x40] sm:$0xff]
  %v704 = vld [vmem:[%s258 + $0x48] sm:$0xff]
  %v705 = vld [vmem:[%s258 + $0x50] sm:$0xff]
  %v706 = vld [vmem:[%s258 + $0x58] sm:$0xff]
  %v707 = vld [vmem:[%s258 + $0x60] sm:$0xff]
  %v708 = vld [vmem:[%s258 + $0x68] sm:$0xff]
  %v709 = vld [vmem:[%s258 + $0x70] sm:$0xff]
  %v711 = vsel %vm76, %v694, 0
  %713 = vmatpush.msra.mxu0 0.0
  %714 = vmatpush.msra.mxu0 %v709
  %715 = vmatpush.msra.mxu0 %v708
  %716 = vmatpush.msra.mxu0 %v707
  %717 = vmatpush.msra.mxu0 %v706
  %718 = vmatpush.msra.mxu0 %v705
  %719 = vmatpush.msra.mxu0 %v704
  %720 = vmatpush.msra.mxu0 %v703
  %721 = vmatpush.msra.mxu0 %v702
  %722 = vmatpush.msra.mxu0 %v701
  %723 = vmatpush.msra.mxu0 %v700
  %724 = vmatpush.msra.mxu0 %v699
  %725 = vmatpush.msra.mxu0 %v698
  %726 = vmatpush.msra.mxu0 %v697
  %727 = vmatpush.msra.mxu0 %v696
  %728 = vmatpush.msra.mxu0 %v695
  %729 = vmatmul.f32.gmra.mxu0 %v711
  %v730 = vpop.f32.mrf.mxu0
  %v731 = vadd.f32 0.0, %v730
  %732 = vdwg.mxu0
  %v733 = vadd.f32 %v657, %v731
  %v734 = vld [vmem:[%s298] sm:$0xff]
  %v735 = vld [vmem:[%s298 + $0x8] sm:$0xff]
  %v736 = vld [vmem:[%s298 + $0x10] sm:$0xff]
  %v737 = vld [vmem:[%s298 + $0x18] sm:$0xff]
  %v738 = vld [vmem:[%s298 + $0x20] sm:$0xff]
  %v739 = vld [vmem:[%s298 + $0x28] sm:$0xff]
  %v740 = vld [vmem:[%s298 + $0x30] sm:$0xff]
  %v741 = vld [vmem:[%s298 + $0x38] sm:$0xff]
  %v742 = vld [vmem:[%s298 + $0x40] sm:$0xff]
  %v743 = vld [vmem:[%s298 + $0x48] sm:$0xff]
  %v744 = vld [vmem:[%s298 + $0x50] sm:$0xff]
  %v745 = vld [vmem:[%s298 + $0x58] sm:$0xff]
  %v746 = vld [vmem:[%s298 + $0x60] sm:$0xff]
  %v747 = vld [vmem:[%s298 + $0x68] sm:$0xff]
  %v748 = vld [vmem:[%s298 + $0x70] sm:$0xff]
  %749 = vmatpush.msra.mxu0 0.0
  %750 = vmatpush.msra.mxu0 %v748
  %751 = vmatpush.msra.mxu0 %v747
  %752 = vmatpush.msra.mxu0 %v746
  %753 = vmatpush.msra.mxu0 %v745
  %754 = vmatpush.msra.mxu0 %v744
  %755 = vmatpush.msra.mxu0 %v743
  %756 = vmatpush.msra.mxu0 %v742
  %757 = vmatpush.msra.mxu0 %v741
  %758 = vmatpush.msra.mxu0 %v740
  %759 = vmatpush.msra.mxu0 %v739
  %760 = vmatpush.msra.mxu0 %v738
  %761 = vmatpush.msra.mxu0 %v737
  %762 = vmatpush.msra.mxu0 %v736
  %763 = vmatpush.msra.mxu0 %v735
  %764 = vmatpush.msra.mxu0 %v734
  %765 = vmatmul.f32.gmra.mxu0 %v711
  %v766 = vpop.f32.mrf.mxu0
  %v767 = vadd.f32 0.0, %v766
  %768 = vdwg.mxu0
  %v769 = vadd.f32 %v693, %v767
  %v770 = vld [vmem:[%s469 + $0x4] sm:$0xff]
  %v771 = vld [vmem:[%s336] sm:$0xff]
  %v772 = vld [vmem:[%s336 + $0x8] sm:$0xff]
  %v773 = vld [vmem:[%s336 + $0x10] sm:$0xff]
  %v774 = vld [vmem:[%s336 + $0x18] sm:$0xff]
  %v775 = vld [vmem:[%s336 + $0x20] sm:$0xff]
  %v776 = vld [vmem:[%s336 + $0x28] sm:$0xff]
  %v777 = vld [vmem:[%s336 + $0x30] sm:$0xff]
  %v778 = vld [vmem:[%s336 + $0x38] sm:$0xff]
  %v779 = vld [vmem:[%s336 + $0x40] sm:$0xff]
  %v780 = vld [vmem:[%s336 + $0x48] sm:$0xff]
  %v781 = vld [vmem:[%s336 + $0x50] sm:$0xff]
  %v782 = vld [vmem:[%s336 + $0x58] sm:$0xff]
  %v783 = vld [vmem:[%s336 + $0x60] sm:$0xff]
  %v784 = vld [vmem:[%s336 + $0x68] sm:$0xff]
  %v785 = vld [vmem:[%s336 + $0x70] sm:$0xff]
  %v787 = vsel %vm76, %v770, 0
  %789 = vmatpush.msra.mxu0 0.0
  %790 = vmatpush.msra.mxu0 %v785
  %791 = vmatpush.msra.mxu0 %v784
  %792 = vmatpush.msra.mxu0 %v783
  %793 = vmatpush.msra.mxu0 %v782
  %794 = vmatpush.msra.mxu0 %v781
  %795 = vmatpush.msra.mxu0 %v780
  %796 = vmatpush.msra.mxu0 %v779
  %797 = vmatpush.msra.mxu0 %v778
  %798 = vmatpush.msra.mxu0 %v777
  %799 = vmatpush.msra.mxu0 %v776
  %800 = vmatpush.msra.mxu0 %v775
  %801 = vmatpush.msra.mxu0 %v774
  %802 = vmatpush.msra.mxu0 %v773
  %803 = vmatpush.msra.mxu0 %v772
  %804 = vmatpush.msra.mxu0 %v771
  %805 = vmatmul.f32.gmra.mxu0 %v787
  %v806 = vpop.f32.mrf.mxu0
  %v807 = vadd.f32 0.0, %v806
  %808 = vdwg.mxu0
  %v809 = vadd.f32 %v733, %v807
  %v810 = vld [vmem:[%s376] sm:$0xff]
  %v811 = vld [vmem:[%s376 + $0x8] sm:$0xff]
  %v812 = vld [vmem:[%s376 + $0x10] sm:$0xff]
  %v813 = vld [vmem:[%s376 + $0x18] sm:$0xff]
  %v814 = vld [vmem:[%s376 + $0x20] sm:$0xff]
  %v815 = vld [vmem:[%s376 + $0x28] sm:$0xff]
  %v816 = vld [vmem:[%s376 + $0x30] sm:$0xff]
  %v817 = vld [vmem:[%s376 + $0x38] sm:$0xff]
  %v818 = vld [vmem:[%s376 + $0x40] sm:$0xff]
  %v819 = vld [vmem:[%s376 + $0x48] sm:$0xff]
  %v820 = vld [vmem:[%s376 + $0x50] sm:$0xff]
  %v821 = vld [vmem:[%s376 + $0x58] sm:$0xff]
  %v822 = vld [vmem:[%s376 + $0x60] sm:$0xff]
  %v823 = vld [vmem:[%s376 + $0x68] sm:$0xff]
  %v824 = vld [vmem:[%s376 + $0x70] sm:$0xff]
  %825 = vmatpush.msra.mxu0 0.0
  %826 = vmatpush.msra.mxu0 %v824
  %827 = vmatpush.msra.mxu0 %v823
  %828 = vmatpush.msra.mxu0 %v822
  %829 = vmatpush.msra.mxu0 %v821
  %830 = vmatpush.msra.mxu0 %v820
  %831 = vmatpush.msra.mxu0 %v819
  %832 = vmatpush.msra.mxu0 %v818
  %833 = vmatpush.msra.mxu0 %v817
  %834 = vmatpush.msra.mxu0 %v816
  %835 = vmatpush.msra.mxu0 %v815
  %836 = vmatpush.msra.mxu0 %v814
  %837 = vmatpush.msra.mxu0 %v813
  %838 = vmatpush.msra.mxu0 %v812
  %839 = vmatpush.msra.mxu0 %v811
  %840 = vmatpush.msra.mxu0 %v810
  %841 = vmatmul.f32.gmra.mxu0 %v787
  %v842 = vpop.f32.mrf.mxu0
  %v843 = vadd.f32 0.0, %v842
  %844 = vdwg.mxu0
  %v845 = vadd.f32 %v769, %v843
  %v846 = vmax.f32 %v809, %v845
  %847 = vmatpush.msra.mxu0 0.0
  %848 = vmatpush.msra.mxu0 0.0
  %849 = vmatpush.msra.mxu0 0.0
  %850 = vmatpush.msra.mxu0 0.0
  %851 = vmatpush.msra.mxu0 0.0
  %852 = vmatpush.msra.mxu0 0.0
  %853 = vmatpush.msra.mxu0 0.0
  %854 = vmatpush.msra.mxu0 0.0
  %855 = vmatpush.msra.mxu0 0.0
  %856 = vmatpush.msra.mxu0 0.0
  %857 = vmatpush.msra.mxu0 0.0
  %858 = vmatpush.msra.mxu0 0.0
  %859 = vmatpush.msra.mxu0 0.0
  %860 = vmatpush.msra.mxu0 0.0
  %861 = vmatpush.msra.mxu0 0.0
  %862 = vmatpush.msra.mxu0 %v846
  %863 = vmatmul.f32.gmra.mxu0 %v416
  %v864 = vpop.f32.mrf.mxu0
  %v865 = vadd.f32 0.0, %v864
  %866 = vdwg.mxu0
  %867 = vmatpush.msra.mxu0 0.0
  %868 = vmatpush.msra.mxu0 0.0
  %869 = vmatpush.msra.mxu0 0.0
  %870 = vmatpush.msra.mxu0 0.0
  %871 = vmatpush.msra.mxu0 0.0
  %872 = vmatpush.msra.mxu0 0.0
  %873 = vmatpush.msra.mxu0 0.0
  %874 = vmatpush.msra.mxu0 0.0
  %875 = vmatpush.msra.mxu0 0.0
  %876 = vmatpush.msra.mxu0 0.0
  %877 = vmatpush.msra.mxu0 0.0
  %878 = vmatpush.msra.mxu0 0.0
  %879 = vmatpush.msra.mxu0 0.0
  %880 = vmatpush.msra.mxu0 0.0
  %881 = vmatpush.msra.mxu0 0.0
  %882 = vmatpush.msra.mxu0 %v846
  %883 = vmatmul.f32.gmra.mxu0 %v439
  %v884 = vpop.f32.mrf.mxu0
  %v885 = vadd.f32 0.0, %v884
  %886 = vdwg.mxu0
  %v887 = vmax.f32 %v865, %v885
  %v888 = vadd.f32 %v887, %v463
  %v889 = vmax.f32 %v888, 0.0
  %s890 = scalar_lea.vmem %s4, 4
  %891 = vst.msk [vmem:[%s890] sm:$0xf] %vm467, %v889
  // Predicated region
  $region18: #{mnist_convnet_forward.4} parent=0 // pred_check
    _
  $region19: #{mnist_convnet_forward.4} parent=0 // pred_check_branch
    %893 = sbr.rel (0) target = $region21
  $region20: #{mnist_convnet_forward.4} parent=0 // pred_region
    _
  $region21: #{mnist_convnet_forward.4} parent=0 // pred_fallthru
    _
  // Predicated region
  $region22: #{mnist_convnet_forward.4} parent=0 // pred_check
    _
  $region23: #{mnist_convnet_forward.4} parent=0 // pred_check_branch
    %895 = sbr.rel (0) target = $region25
  $region24: #{mnist_convnet_forward.4} parent=0 // pred_region
    _
  $region25: #{mnist_convnet_forward.4} parent=0 // pred_fallthru
    _

</llo_original>
